<compile_context>
chip_gen: v5e
topology: v5e:2x2
jax: 0.10.0
libtpu: 0.0.40
codegen_flags: <defaults>
</compile_context>

<pallas_src>
import functools

import jax
import jax.numpy as jnp
from jax.experimental import pallas as pl
from jax.experimental.pallas import tpu as pltpu


# ----------------------------------------------------------------------------
# Pallas kernels
# ----------------------------------------------------------------------------
def rits_kernel(x_ref, m_ref, d_ref,
                wgam_ref, bgam_ref, wcomb_ref, bcomb_ref,
                whcat_ref, bhcat_ref, wfeat_ref, bfeat_ref,
                wihm_ref, blstm_ref, wihx_ref,
                est_ref, imp_ref):
    """Both RITS directions of the BRITS generator, one direction per grid step.

    Ref shapes (leading dim = direction block of size 1):
      x/m/d:   (1, T, B, F)      est/imp: (1, T, B, F)
      fused weights carry a (1, ...) leading block as well.
    The backward direction (program_id(0)==1) writes its outputs time-flipped
    (folds BackboneBRITS._reverse into the kernel).
    """
    T, B, Fd = x_ref.shape[1], x_ref.shape[2], x_ref.shape[3]
    H = whcat_ref.shape[1]

    def dot(a, b):
        return jnp.dot(a, b, preferred_element_type=jnp.float32)

    x3 = x_ref[0]                      # (T, B, F)
    m3 = m_ref[0]
    d3 = d_ref[0]
    wgam = wgam_ref[0]; bgam = bgam_ref[0]        # (F, H+F), (1, H+F)
    wcomb = wcomb_ref[0]; bcomb = bcomb_ref[0]    # (2F, F),  (1, F)
    whcat = whcat_ref[0]; bhcat = bhcat_ref[0]    # (H, F+4H),(1, F+4H)
    wfeat = wfeat_ref[0]; bfeat = bfeat_ref[0]    # (F, F),   (1, F)
    wihm = wihm_ref[0]; blstm = blstm_ref[0]      # (F, 4H),  (1, 4H)
    wihx = wihx_ref[0]                            # (F, 4H)

    TB = T * B
    x_all = x3.reshape(TB, Fd)
    m_all = m3.reshape(TB, Fd)
    d_all = d3.reshape(TB, Fd)

    # ---- hoisted, input-only projections (batched over all timesteps) ------
    # TemporalDecay (hidden & feature) fused into one wide matmul.
    gam = jnp.exp(-jnp.maximum(dot(d_all, wgam) + bgam, 0.0))        # (TB, H+F)
    gamma_h_all = gam[:, :H].reshape(T, B, H)
    gamma_x_all = gam[:, H:]                                         # (TB, F)
    # combining weight alpha only depends on gamma_x and the mask -> hoist.
    alpha_all = jax.nn.sigmoid(
        dot(jnp.concatenate([gamma_x_all, m_all], axis=-1), wcomb) + bcomb
    ).reshape(T, B, Fd)
    # mask half of the LSTM input projection (+ both LSTM biases) -> hoist.
    pre_all = (dot(m_all, wihm) + blstm).reshape(T, B, 4 * H)

    # pre-broadcast the in-loop biases once (JAX does not CSE broadcasts).
    bhcat_b = jnp.broadcast_to(bhcat, (B, Fd + 4 * H))
    bfeat_b = jnp.broadcast_to(bfeat, (B, Fd))

    # ---- recurrence (fully unrolled, T is small & static) ------------------
    h = jnp.zeros((B, H), jnp.float32)
    c = jnp.zeros((B, H), jnp.float32)
    est_steps = []
    imp_steps = []
    for t in range(T):
        x = x3[t]
        m = m3[t]
        h = h * gamma_h_all[t]
        # fused [history-regression | LSTM hidden projection] on shared LHS h
        hw = dot(h, whcat) + bhcat_b                  # (B, F+4H)
        x_h = hw[:, :Fd]                              # = h @ W_hist + b_hist
        x_c = m * x + (1.0 - m) * x_h
        z_h = dot(x_c, wfeat) + bfeat_b               # feature regression
        alpha = alpha_all[t]
        c_h = alpha * z_h + (1.0 - alpha) * x_h
        c_c = m * x + (1.0 - m) * c_h
        est_steps.append(c_h)
        imp_steps.append(c_c)

        # LSTMCell on [c_c, m] (PyTorch gate order i, f, g, o)
        gates = dot(c_c, wihx) + hw[:, Fd:] + pre_all[t]   # (B, 4H)
        i_g = jax.nn.sigmoid(gates[:, 0:H])
        f_g = jax.nn.sigmoid(gates[:, H:2 * H])
        g_g = jnp.tanh(gates[:, 2 * H:3 * H])
        o_g = jax.nn.sigmoid(gates[:, 3 * H:4 * H])
        c = f_g * c + i_g * g_g
        h = o_g * jnp.tanh(c)

    # ---- single dense store per output; time-flip backward direction -------
    est_fwd = jnp.stack(est_steps)            # (T, B, F)
    imp_fwd = jnp.stack(imp_steps)
    est_rev = jnp.stack(est_steps[::-1])      # reversed stacking (no lax.rev)
    imp_rev = jnp.stack(imp_steps[::-1])
    is_bwd = pl.program_id(0) == 1
    est_ref[0] = jnp.where(is_bwd, est_rev, est_fwd)
    imp_ref[0] = jnp.where(is_bwd, imp_rev, imp_fwd)


def _bce_with_logits(x, y):
    # numerically-stable elementwise BCE with logits (matches PyTorch)
    return jnp.maximum(x, 0.0) - x * y + jnp.log(1.0 + jnp.exp(-jnp.abs(x)))


def disc_loss_kernel(*refs, mode, lambda_mse):
    """USGAN discriminator (biGRU + Linear read-out) fused with the loss.

    mode == 'discriminator': refs = (x, mask, gru/out params..., loss)
    mode == 'generator'    : refs = (x, mask, xfwd, frec, brec, params..., loss)
    x: (T, B, 2F) time-major;  loss: (1,) in SMEM.
    """
    if mode == 'generator':
        (x_ref, mask_ref, xfwd_ref, frec_ref, brec_ref,
         win_ref, bin_ref, wfh_ref, bfh_ref, wbh_ref, bbh_ref,
         wout_ref, bout_ref, loss_ref) = refs
    else:
        (x_ref, mask_ref,
         win_ref, bin_ref, wfh_ref, bfh_ref, wbh_ref, bbh_ref,
         wout_ref, bout_ref, loss_ref) = refs
        xfwd_ref = frec_ref = brec_ref = None

    T, B, F2 = x_ref.shape
    H = wfh_ref.shape[0]
    H3 = 3 * H
    Fd = wout_ref.shape[1]

    def dot(a, b):
        return jnp.dot(a, b, preferred_element_type=jnp.float32)

    win = win_ref[...]
    b_in = bin_ref[...]
    wfh = wfh_ref[...]
    wbh = wbh_ref[...]
    bfh_b = jnp.broadcast_to(bfh_ref[...], (B, H3))
    bbh_b = jnp.broadcast_to(bbh_ref[...], (B, H3))
    wout = wout_ref[...]
    bout = bout_ref[...]

    x3 = x_ref[...]                               # (T, B, 2F)
    TB = T * B
    # hoisted GRU input projections for BOTH directions, one wide matmul.
    gi = dot(x3.reshape(TB, F2), win) + b_in      # (TB, 6H)
    gi_f = gi[:, :H3].reshape(T, B, H3)
    gi_b = gi[:, H3:].reshape(T, B, H3)

    def gru_step(gi_t, h, wh, bh_b):
        gh = dot(h, wh) + bh_b                    # (B, 3H), gate order r, z, n
        r = jax.nn.sigmoid(gi_t[:, 0:H] + gh[:, 0:H])
        z = jax.nn.sigmoid(gi_t[:, H:2 * H] + gh[:, H:2 * H])
        n = jnp.tanh(gi_t[:, 2 * H:] + r * gh[:, 2 * H:])
        return (1.0 - z) * n + z * h

    # fully-unrolled forward + backward recurrences (T is small & static)
    h = jnp.zeros((B, H), jnp.float32)
    hf = []
    for t in range(T):
        h = gru_step(gi_f[t], h, wfh, bfh_b)
        hf.append(h)
    h = jnp.zeros((B, H), jnp.float32)
    hb = [None] * T
    for s in range(T):
        t = T - 1 - s
        h = gru_step(gi_b[t], h, wbh, bbh_b)
        hb[t] = h

    # read-out hoisted out of the loops: one (T*B, 2H) x (2H, F) matmul
    hcat = jnp.concatenate([jnp.stack(hf), jnp.stack(hb)], axis=-1)   # (T,B,2H)
    logits = (dot(hcat.reshape(TB, 2 * H), wout) + bout).reshape(T, B, Fd)

    mask = mask_ref[...]
    bce = _bce_with_logits(logits, mask)

    if mode == 'discriminator':
        loss = jnp.mean(bce)
    else:
        l_g = -jnp.mean((1.0 - mask) * bce)
        frec = frec_ref[...]
        brec = brec_ref[...]
        xfwd = xfwd_ref[...]
        recon = (frec + brec) * 0.5
        rec_loss = (jnp.sum(jnp.square(xfwd - recon) * mask)
                    / (jnp.sum(mask) + 1e-12)
                    + 0.1 * jnp.mean(jnp.square(frec - brec)))
        loss = l_g + lambda_mse * rec_loss
    loss_ref[0] = loss


# ----------------------------------------------------------------------------
# pallas_call wrappers
# ----------------------------------------------------------------------------
_VMEM = pl.BlockSpec(memory_space=pltpu.MemorySpace.VMEM)
_SMEM = pl.BlockSpec(memory_space=pltpu.MemorySpace.SMEM)


def _dir_block_spec(a):
    """Block (1, full...) over the leading direction axis."""
    if a.ndim == 4:
        return pl.BlockSpec((1,) + a.shape[1:], lambda d: (d, 0, 0, 0))
    return pl.BlockSpec((1,) + a.shape[1:], lambda d: (d, 0, 0))


def run_brits(Xs, Ms, Ds, rp):
    """Xs/Ms/Ds: (2, T, B, F) direction-stacked, time-major.
       rp: dict of direction-stacked fused RITS params (leading dim 2)."""
    _, T, B, Fd = Xs.shape
    args = (Xs, Ms, Ds,
            rp['w_gamma'], rp['b_gamma'], rp['w_comb'], rp['b_comb'],
            rp['w_hcat'], rp['b_hcat'], rp['w_feat'], rp['b_feat'],
            rp['w_ih_m'], rp['b_lstm'], rp['w_ih_x'])
    out_spec = pl.BlockSpec((1, T, B, Fd), lambda d: (d, 0, 0, 0))
    est, imp = pl.pallas_call(
        rits_kernel,
        grid=(2,),
        out_shape=(jax.ShapeDtypeStruct((2, T, B, Fd), jnp.float32),
                   jax.ShapeDtypeStruct((2, T, B, Fd), jnp.float32)),
        in_specs=[_dir_block_spec(a) for a in args],
        out_specs=(out_spec, out_spec),
        compiler_params=pltpu.CompilerParams(
            dimension_semantics=("parallel",)),   # two TCs on v7x
    )(*args)
    return est, imp


def run_disc_loss(x_in_tm, mask_tm, dp, mode, lambda_mse,
                  xfwd_tm=None, frec_tm=None, brec_tm=None):
    kern = functools.partial(disc_loss_kernel, mode=mode,
                             lambda_mse=float(lambda_mse))
    if mode == 'generator':
        args = (x_in_tm, mask_tm, xfwd_tm, frec_tm, brec_tm,
                dp['w_in'], dp['b_in'], dp['wfh'], dp['bfh'],
                dp['wbh'], dp['bbh'], dp['w_out'], dp['b_out'])
    else:
        args = (x_in_tm, mask_tm,
                dp['w_in'], dp['b_in'], dp['wfh'], dp['bfh'],
                dp['wbh'], dp['bbh'], dp['w_out'], dp['b_out'])
    return pl.pallas_call(
        kern,
        out_shape=jax.ShapeDtypeStruct((1,), jnp.float32),
        in_specs=[_VMEM] * len(args),
        out_specs=_SMEM,
    )(*args)


# ----------------------------------------------------------------------------
# Parameter construction (deterministic, synthetic) + weight fusion
# ----------------------------------------------------------------------------
def make_params(key, n_features, rnn_hidden_size):
    Fd, H = n_features, rnn_hidden_size
    keys = iter(jax.random.split(key, 64))

    def u(shape, scale):
        return jax.random.uniform(next(keys), shape, jnp.float32, -scale, scale)

    eye = jnp.eye(Fd, dtype=jnp.float32)

    def rits_raw():
        sF = 1.0 / (Fd ** 0.5)
        sH = 1.0 / (H ** 0.5)
        return dict(
            wgh=u((H, Fd), sF).T,                       # temp_decay_h (F, H)
            bgh=u((1, H), sF),
            wgx=(u((Fd, Fd), sF) * eye).T,              # temp_decay_x diag
            bgx=u((1, Fd), sF),
            whist=u((Fd, H), sH).T,                     # hist_reg (H, F)
            bhist=u((1, Fd), sH),
            wfeat=(u((Fd, Fd), sF) * (1.0 - eye)).T,    # feat_reg zero-diag
            bfeat=u((1, Fd), sF),
            wcomb=u((Fd, 2 * Fd), sF).T,                # combining (2F, F)
            bcomb=u((1, Fd), sF),
            wih=u((4 * H, 2 * Fd), sH).T,               # LSTMCell (2F, 4H)
            whh=u((4 * H, H), sH).T,                    #          (H, 4H)
            blstm=u((1, 4 * H), sH) + u((1, 4 * H), sH),
        )

    def fuse_rits(p):
        # pre-concatenate weights that share a matmul LHS (done once, host side)
        return dict(
            w_gamma=jnp.concatenate([p['wgh'], p['wgx']], axis=1),   # (F, H+F)
            b_gamma=jnp.concatenate([p['bgh'], p['bgx']], axis=1),   # (1, H+F)
            w_comb=p['wcomb'],                                       # (2F, F)
            b_comb=p['bcomb'],
            w_hcat=jnp.concatenate([p['whist'], p['whh']], axis=1),  # (H, F+4H)
            b_hcat=jnp.concatenate(
                [p['bhist'], jnp.zeros((1, 4 * H), jnp.float32)], axis=1),
            w_feat=p['wfeat'], b_feat=p['bfeat'],
            w_ih_m=p['wih'][Fd:], b_lstm=p['blstm'],
            w_ih_x=p['wih'][:Fd],
        )

    pf = fuse_rits(rits_raw())
    pb = fuse_rits(rits_raw())
    rits = {k: jnp.stack([pf[k], pb[k]]) for k in pf}   # leading dir dim = 2

    def gru_dir():
        sH = 1.0 / (H ** 0.5)
        return (u((3 * H, 2 * Fd), sH).T,   # (2F, 3H)
                u((3 * H, H), sH).T,        # (H, 3H)
                u((1, 3 * H), sH),
                u((1, 3 * H), sH))

    wfi, wfh, bfi, bfh = gru_dir()
    wbi, wbh, bbi, bbh = gru_dir()
    s_out = 1.0 / ((2 * H) ** 0.5)
    disc = dict(
        w_in=jnp.concatenate([wfi, wbi], axis=1),   # (2F, 6H) fwd|bwd input proj
        b_in=jnp.concatenate([bfi, bbi], axis=1),   # (1, 6H)
        wfh=wfh, bfh=bfh, wbh=wbh, bbh=bbh,
        w_out=u((Fd, 2 * H), s_out).T,              # read_out (2H, F)
        b_out=u((1, Fd), s_out),
    )
    return dict(rits=rits, disc=disc)


# ----------------------------------------------------------------------------
# _USGAN forward (BackboneUSGAN semantics)
# ----------------------------------------------------------------------------
def usgan_forward(inputs, params, training_object, lambda_mse, hint_rate,
                  hint_key):
    assert training_object in ("generator", "discriminator")

    # stack the two BRITS directions and go time-major once: (2, T, B, F)
    def stk(f, b):
        return jnp.transpose(jnp.stack([f, b], axis=0), (0, 2, 1, 3))

    Xs = stk(inputs['forward']['X'], inputs['backward']['X'])
    Ms = stk(inputs['forward']['missing_mask'],
             inputs['backward']['missing_mask'])
    Ds = stk(inputs['forward']['deltas'], inputs['backward']['deltas'])

    # --- generator: BackboneBRITS (both RITS directions in ONE pallas_call) --
    est, imp = run_brits(Xs, Ms, Ds, params['rits'])
    # backward-direction outputs are already time-flipped inside the kernel
    f_rec_tm, b_rec_tm = est[0], est[1]
    imputed_tm = (imp[0] + imp[1]) * 0.5            # (T, B, F)

    # --- discriminator: hint + biGRU + read-out + loss (ONE pallas_call) -----
    fM_tm = Ms[0]
    hint = (jax.random.uniform(hint_key, fM_tm.shape) < hint_rate)
    hint = hint.astype(jnp.float32)
    h_hint = hint * fM_tm + (1.0 - hint) * 0.5
    x_in_tm = jnp.concatenate([imputed_tm, h_hint], axis=-1)   # (T, B, 2F)
    # TODO(synk): nn.Dropout with dropout_rate=0.0 is the identity; omitted.

    if training_object == 'discriminator':
        loss = run_disc_loss(x_in_tm, fM_tm, params['disc'],
                             'discriminator', lambda_mse)[0]
    else:
        loss = run_disc_loss(x_in_tm, fM_tm, params['disc'],
                             'generator', lambda_mse,
                             xfwd_tm=Xs[0], frec_tm=f_rec_tm,
                             brec_tm=b_rec_tm)[0]

    imputed_data = jnp.transpose(imputed_tm, (1, 0, 2))   # back to (B, T, F)
    return {'loss': loss, 'imputed_data': imputed_data}


# ----------------------------------------------------------------------------
if __name__ == "__main__":
    key = jax.random.PRNGKey(0)
    kp, kx, km, kd, kh = jax.random.split(key, 5)

    # n_steps=8, n_features=4, rnn_hidden_size=32, batch=8
    B, T, Fd, H = 8, 8, 4, 32
    lambda_mse = 1.0
    hint_rate = 0.7

    params = make_params(kp, Fd, H)

    X = jax.random.normal(kx, (B, T, Fd), jnp.float32)
    mask = (jax.random.uniform(km, (B, T, Fd)) < 0.8).astype(jnp.float32)
    fX = X * mask                                       # observed values only
    deltas = jax.random.uniform(kd, (B, T, Fd), jnp.float32, 0.0, 2.0)

    inputs = {
        'forward': {'X': fX, 'missing_mask': mask, 'deltas': deltas},
        'backward': {'X': jnp.flip(fX, axis=1),
                     'missing_mask': jnp.flip(mask, axis=1),
                     'deltas': jnp.flip(deltas, axis=1)},
    }

    fwd = jax.jit(usgan_forward,
                  static_argnames=('training_object', 'lambda_mse', 'hint_rate'))
    res_gen = fwd(inputs, params, 'generator', lambda_mse, hint_rate, kh)
    res_disc = fwd(inputs, params, 'discriminator', lambda_mse, hint_rate, kh)

    jax.block_until_ready((res_gen['loss'], res_gen['imputed_data'],
                           res_disc['loss'], res_disc['imputed_data']))
    print("KERNEL_OK")
</pallas_src>

<mosaic_0001>
module attributes {stable_mosaic.version = 11 : i64} {
  func.func @rits_kernel(%arg0: i32, %arg1: memref<1x8x8x4xf32, #tpu.memory_space<vmem>>, %arg2: memref<1x8x8x4xf32, #tpu.memory_space<vmem>>, %arg3: memref<1x8x8x4xf32, #tpu.memory_space<vmem>>, %arg4: memref<1x4x36xf32, #tpu.memory_space<vmem>>, %arg5: memref<1x1x36xf32, #tpu.memory_space<vmem>>, %arg6: memref<1x8x4xf32, #tpu.memory_space<vmem>>, %arg7: memref<1x1x4xf32, #tpu.memory_space<vmem>>, %arg8: memref<1x32x132xf32, #tpu.memory_space<vmem>>, %arg9: memref<1x1x132xf32, #tpu.memory_space<vmem>>, %arg10: memref<1x4x4xf32, #tpu.memory_space<vmem>>, %arg11: memref<1x1x4xf32, #tpu.memory_space<vmem>>, %arg12: memref<1x4x128xf32, #tpu.memory_space<vmem>>, %arg13: memref<1x1x128xf32, #tpu.memory_space<vmem>>, %arg14: memref<1x4x128xf32, #tpu.memory_space<vmem>>, %arg15: memref<1x8x8x4xf32, #tpu.memory_space<vmem>>, %arg16: memref<1x8x8x4xf32, #tpu.memory_space<vmem>>) attributes {dimension_semantics = [#tpu.dimension_semantics<parallel>], iteration_bounds = array<i64: 2>, scalar_prefetch = 0 : i64, scratch_operands = 0 : i64, tpu.core_type = #tpu.core_type<tc>, window_params = [{transform_indices = @transform_0, window_bounds = array<i64: 1, 8, 8, 4>}, {transform_indices = @transform_1, window_bounds = array<i64: 1, 8, 8, 4>}, {transform_indices = @transform_2, window_bounds = array<i64: 1, 8, 8, 4>}, {transform_indices = @transform_3, window_bounds = array<i64: 1, 4, 36>}, {transform_indices = @transform_4, window_bounds = array<i64: 1, 1, 36>}, {transform_indices = @transform_5, window_bounds = array<i64: 1, 8, 4>}, {transform_indices = @transform_6, window_bounds = array<i64: 1, 1, 4>}, {transform_indices = @transform_7, window_bounds = array<i64: 1, 32, 132>}, {transform_indices = @transform_8, window_bounds = array<i64: 1, 1, 132>}, {transform_indices = @transform_9, window_bounds = array<i64: 1, 4, 4>}, {transform_indices = @transform_10, window_bounds = array<i64: 1, 1, 4>}, {transform_indices = @transform_11, window_bounds = array<i64: 1, 4, 128>}, {transform_indices = @transform_12, window_bounds = array<i64: 1, 1, 128>}, {transform_indices = @transform_13, window_bounds = array<i64: 1, 4, 128>}, {transform_indices = @transform_14, window_bounds = array<i64: 1, 8, 8, 4>}, {transform_indices = @transform_15, window_bounds = array<i64: 1, 8, 8, 4>}]} {
    %c0 = arith.constant 0 : index
    %c0_0 = arith.constant 0 : index
    %c0_1 = arith.constant 0 : index
    %c0_2 = arith.constant 0 : index
    %0 = vector.load %arg1[%c0, %c0_0, %c0_1, %c0_2] : memref<1x8x8x4xf32, #tpu.memory_space<vmem>>, vector<1x8x8x4xf32>
    %1 = vector.shape_cast %0 : vector<1x8x8x4xf32> to vector<8x8x4xf32>
    %c0_3 = arith.constant 0 : index
    %c0_4 = arith.constant 0 : index
    %c0_5 = arith.constant 0 : index
    %c0_6 = arith.constant 0 : index
    %2 = vector.load %arg2[%c0_3, %c0_4, %c0_5, %c0_6] : memref<1x8x8x4xf32, #tpu.memory_space<vmem>>, vector<1x8x8x4xf32>
    %3 = vector.shape_cast %2 : vector<1x8x8x4xf32> to vector<8x8x4xf32>
    %c0_7 = arith.constant 0 : index
    %c0_8 = arith.constant 0 : index
    %c0_9 = arith.constant 0 : index
    %c0_10 = arith.constant 0 : index
    %4 = vector.load %arg3[%c0_7, %c0_8, %c0_9, %c0_10] : memref<1x8x8x4xf32, #tpu.memory_space<vmem>>, vector<1x8x8x4xf32>
    %5 = vector.shape_cast %4 : vector<1x8x8x4xf32> to vector<8x8x4xf32>
    %c0_11 = arith.constant 0 : index
    %c0_12 = arith.constant 0 : index
    %c0_13 = arith.constant 0 : index
    %6 = vector.load %arg4[%c0_11, %c0_12, %c0_13] : memref<1x4x36xf32, #tpu.memory_space<vmem>>, vector<1x4x36xf32>
    %7 = vector.shape_cast %6 : vector<1x4x36xf32> to vector<4x36xf32>
    %c0_14 = arith.constant 0 : index
    %c0_15 = arith.constant 0 : index
    %c0_16 = arith.constant 0 : index
    %8 = vector.load %arg5[%c0_14, %c0_15, %c0_16] : memref<1x1x36xf32, #tpu.memory_space<vmem>>, vector<1x1x36xf32>
    %9 = vector.shape_cast %8 : vector<1x1x36xf32> to vector<1x36xf32>
    %c0_17 = arith.constant 0 : index
    %c0_18 = arith.constant 0 : index
    %c0_19 = arith.constant 0 : index
    %10 = vector.load %arg6[%c0_17, %c0_18, %c0_19] : memref<1x8x4xf32, #tpu.memory_space<vmem>>, vector<1x8x4xf32>
    %11 = vector.shape_cast %10 : vector<1x8x4xf32> to vector<8x4xf32>
    %c0_20 = arith.constant 0 : index
    %c0_21 = arith.constant 0 : index
    %c0_22 = arith.constant 0 : index
    %12 = vector.load %arg7[%c0_20, %c0_21, %c0_22] : memref<1x1x4xf32, #tpu.memory_space<vmem>>, vector<1x1x4xf32>
    %13 = vector.shape_cast %12 : vector<1x1x4xf32> to vector<1x4xf32>
    %c0_23 = arith.constant 0 : index
    %c0_24 = arith.constant 0 : index
    %c0_25 = arith.constant 0 : index
    %14 = vector.load %arg8[%c0_23, %c0_24, %c0_25] : memref<1x32x132xf32, #tpu.memory_space<vmem>>, vector<1x32x132xf32>
    %15 = vector.shape_cast %14 : vector<1x32x132xf32> to vector<32x132xf32>
    %c0_26 = arith.constant 0 : index
    %c0_27 = arith.constant 0 : index
    %c0_28 = arith.constant 0 : index
    %16 = vector.load %arg9[%c0_26, %c0_27, %c0_28] : memref<1x1x132xf32, #tpu.memory_space<vmem>>, vector<1x1x132xf32>
    %17 = vector.shape_cast %16 : vector<1x1x132xf32> to vector<1x132xf32>
    %c0_29 = arith.constant 0 : index
    %c0_30 = arith.constant 0 : index
    %c0_31 = arith.constant 0 : index
    %18 = vector.load %arg10[%c0_29, %c0_30, %c0_31] : memref<1x4x4xf32, #tpu.memory_space<vmem>>, vector<1x4x4xf32>
    %19 = vector.shape_cast %18 : vector<1x4x4xf32> to vector<4x4xf32>
    %c0_32 = arith.constant 0 : index
    %c0_33 = arith.constant 0 : index
    %c0_34 = arith.constant 0 : index
    %20 = vector.load %arg11[%c0_32, %c0_33, %c0_34] : memref<1x1x4xf32, #tpu.memory_space<vmem>>, vector<1x1x4xf32>
    %21 = vector.shape_cast %20 : vector<1x1x4xf32> to vector<1x4xf32>
    %c0_35 = arith.constant 0 : index
    %c0_36 = arith.constant 0 : index
    %c0_37 = arith.constant 0 : index
    %22 = vector.load %arg12[%c0_35, %c0_36, %c0_37] : memref<1x4x128xf32, #tpu.memory_space<vmem>>, vector<1x4x128xf32>
    %23 = vector.shape_cast %22 : vector<1x4x128xf32> to vector<4x128xf32>
    %c0_38 = arith.constant 0 : index
    %c0_39 = arith.constant 0 : index
    %c0_40 = arith.constant 0 : index
    %24 = vector.load %arg13[%c0_38, %c0_39, %c0_40] : memref<1x1x128xf32, #tpu.memory_space<vmem>>, vector<1x1x128xf32>
    %25 = vector.shape_cast %24 : vector<1x1x128xf32> to vector<1x128xf32>
    %c0_41 = arith.constant 0 : index
    %c0_42 = arith.constant 0 : index
    %c0_43 = arith.constant 0 : index
    %26 = vector.load %arg14[%c0_41, %c0_42, %c0_43] : memref<1x4x128xf32, #tpu.memory_space<vmem>>, vector<1x4x128xf32>
    %27 = vector.shape_cast %26 : vector<1x4x128xf32> to vector<4x128xf32>
    %28 = vector.shape_cast %3 : vector<8x8x4xf32> to vector<64x4xf32>
    %29 = vector.shape_cast %5 : vector<8x8x4xf32> to vector<64x4xf32>
    %cst = arith.constant dense<0.000000e+00> : vector<64x36xf32>
    %30 = tpu.matmul %29, %7, %cst {dimension_numbers = #tpu.dot_dimension_numbers<[1], [0], [0], [1], [0, 0, 1, 1], [], []>} : vector<64x4xf32>, vector<4x36xf32>, vector<64x36xf32> -> vector<64x36xf32>
    %31 = vector.broadcast %9 : vector<1x36xf32> to vector<64x36xf32>
    %32 = arith.addf %30, %31 : vector<64x36xf32>
    %cst_44 = arith.constant 0.000000e+00 : f32
    %33 = vector.broadcast %cst_44 : f32 to vector<64x36xf32>
    %34 = arith.maximumf %32, %33 : vector<64x36xf32>
    %cst_45 = arith.constant 0.000000e+00 : f32
    %35 = vector.broadcast %cst_45 : f32 to vector<64x36xf32>
    %36 = arith.subf %35, %34 : vector<64x36xf32>
    %37 = math.exp %36 : vector<64x36xf32>
    %38 = vector.extract_strided_slice %37 {offsets = [0, 0], sizes = [64, 32], strides = [1, 1]} : vector<64x36xf32> to vector<64x32xf32>
    %39 = vector.shape_cast %38 : vector<64x32xf32> to vector<8x8x32xf32>
    %40 = vector.extract_strided_slice %37 {offsets = [0, 32], sizes = [64, 4], strides = [1, 1]} : vector<64x36xf32> to vector<64x4xf32>
    %41 = tpu.concatenate %40, %28 in 1 : vector<64x4xf32>, vector<64x4xf32> -> vector<64x8xf32>
    %cst_46 = arith.constant dense<0.000000e+00> : vector<64x4xf32>
    %42 = tpu.matmul %41, %11, %cst_46 {dimension_numbers = #tpu.dot_dimension_numbers<[1], [0], [0], [1], [0, 0, 1, 1], [], []>} : vector<64x8xf32>, vector<8x4xf32>, vector<64x4xf32> -> vector<64x4xf32>
    %43 = vector.broadcast %13 : vector<1x4xf32> to vector<64x4xf32>
    %44 = arith.addf %42, %43 : vector<64x4xf32>
    %45 = arith.negf %44 : vector<64x4xf32>
    %46 = math.exp %45 : vector<64x4xf32>
    %cst_47 = arith.constant 1.000000e+00 : f32
    %47 = vector.broadcast %cst_47 : f32 to vector<64x4xf32>
    %48 = arith.addf %47, %46 : vector<64x4xf32>
    %49 = arith.divf %47, %48 : vector<64x4xf32>
    %50 = vector.shape_cast %49 : vector<64x4xf32> to vector<8x8x4xf32>
    %cst_48 = arith.constant dense<0.000000e+00> : vector<64x128xf32>
    %51 = tpu.matmul %28, %23, %cst_48 {dimension_numbers = #tpu.dot_dimension_numbers<[1], [0], [0], [1], [0, 0, 1, 1], [], []>} : vector<64x4xf32>, vector<4x128xf32>, vector<64x128xf32> -> vector<64x128xf32>
    %52 = vector.broadcast %25 : vector<1x128xf32> to vector<64x128xf32>
    %53 = arith.addf %51, %52 : vector<64x128xf32>
    %54 = vector.shape_cast %53 : vector<64x128xf32> to vector<8x8x128xf32>
    %55 = vector.shape_cast %17 : vector<1x132xf32> to vector<1x132xf32>
    %56 = vector.broadcast %55 : vector<1x132xf32> to vector<8x132xf32>
    %57 = vector.shape_cast %21 : vector<1x4xf32> to vector<1x4xf32>
    %58 = vector.broadcast %57 : vector<1x4xf32> to vector<8x4xf32>
    %cst_49 = arith.constant 0.000000e+00 : f32
    %59 = vector.broadcast %cst_49 : f32 to vector<8x32xf32>
    %cst_50 = arith.constant 0.000000e+00 : f32
    %60 = vector.broadcast %cst_50 : f32 to vector<8x32xf32>
    %61 = vector.extract_strided_slice %1 {offsets = [0, 0, 0], sizes = [1, 8, 4], strides = [1, 1, 1]} : vector<8x8x4xf32> to vector<1x8x4xf32>
    %62 = vector.shape_cast %61 : vector<1x8x4xf32> to vector<8x4xf32>
    %63 = vector.extract_strided_slice %3 {offsets = [0, 0, 0], sizes = [1, 8, 4], strides = [1, 1, 1]} : vector<8x8x4xf32> to vector<1x8x4xf32>
    %64 = vector.shape_cast %63 : vector<1x8x4xf32> to vector<8x4xf32>
    %65 = vector.extract_strided_slice %39 {offsets = [0, 0, 0], sizes = [1, 8, 32], strides = [1, 1, 1]} : vector<8x8x32xf32> to vector<1x8x32xf32>
    %66 = vector.shape_cast %65 : vector<1x8x32xf32> to vector<8x32xf32>
    %67 = arith.mulf %59, %66 : vector<8x32xf32>
    %cst_51 = arith.constant dense<0.000000e+00> : vector<8x132xf32>
    %68 = tpu.matmul %67, %15, %cst_51 {dimension_numbers = #tpu.dot_dimension_numbers<[1], [0], [0], [1], [0, 0, 1, 1], [], []>} : vector<8x32xf32>, vector<32x132xf32>, vector<8x132xf32> -> vector<8x132xf32>
    %69 = arith.addf %68, %56 : vector<8x132xf32>
    %70 = vector.extract_strided_slice %69 {offsets = [0, 0], sizes = [8, 4], strides = [1, 1]} : vector<8x132xf32> to vector<8x4xf32>
    %71 = arith.mulf %64, %62 : vector<8x4xf32>
    %cst_52 = arith.constant 1.000000e+00 : f32
    %72 = vector.broadcast %cst_52 : f32 to vector<8x4xf32>
    %73 = arith.subf %72, %64 : vector<8x4xf32>
    %74 = arith.mulf %73, %70 : vector<8x4xf32>
    %75 = arith.addf %71, %74 : vector<8x4xf32>
    %cst_53 = arith.constant dense<0.000000e+00> : vector<8x4xf32>
    %76 = tpu.matmul %75, %19, %cst_53 {dimension_numbers = #tpu.dot_dimension_numbers<[1], [0], [0], [1], [0, 0, 1, 1], [], []>} : vector<8x4xf32>, vector<4x4xf32>, vector<8x4xf32> -> vector<8x4xf32>
    %77 = arith.addf %76, %58 : vector<8x4xf32>
    %78 = vector.extract_strided_slice %50 {offsets = [0, 0, 0], sizes = [1, 8, 4], strides = [1, 1, 1]} : vector<8x8x4xf32> to vector<1x8x4xf32>
    %79 = vector.shape_cast %78 : vector<1x8x4xf32> to vector<8x4xf32>
    %80 = arith.mulf %79, %77 : vector<8x4xf32>
    %cst_54 = arith.constant 1.000000e+00 : f32
    %81 = vector.broadcast %cst_54 : f32 to vector<8x4xf32>
    %82 = arith.subf %81, %79 : vector<8x4xf32>
    %83 = arith.mulf %82, %70 : vector<8x4xf32>
    %84 = arith.addf %80, %83 : vector<8x4xf32>
    %85 = arith.mulf %64, %62 : vector<8x4xf32>
    %cst_55 = arith.constant 1.000000e+00 : f32
    %86 = vector.broadcast %cst_55 : f32 to vector<8x4xf32>
    %87 = arith.subf %86, %64 : vector<8x4xf32>
    %88 = arith.mulf %87, %84 : vector<8x4xf32>
    %89 = arith.addf %85, %88 : vector<8x4xf32>
    %cst_56 = arith.constant dense<0.000000e+00> : vector<8x128xf32>
    %90 = tpu.matmul %89, %27, %cst_56 {dimension_numbers = #tpu.dot_dimension_numbers<[1], [0], [0], [1], [0, 0, 1, 1], [], []>} : vector<8x4xf32>, vector<4x128xf32>, vector<8x128xf32> -> vector<8x128xf32>
    %91 = vector.extract_strided_slice %69 {offsets = [0, 4], sizes = [8, 128], strides = [1, 1]} : vector<8x132xf32> to vector<8x128xf32>
    %92 = arith.addf %90, %91 : vector<8x128xf32>
    %93 = vector.extract_strided_slice %54 {offsets = [0, 0, 0], sizes = [1, 8, 128], strides = [1, 1, 1]} : vector<8x8x128xf32> to vector<1x8x128xf32>
    %94 = vector.shape_cast %93 : vector<1x8x128xf32> to vector<8x128xf32>
    %95 = arith.addf %92, %94 : vector<8x128xf32>
    %96 = vector.extract_strided_slice %95 {offsets = [0, 0], sizes = [8, 32], strides = [1, 1]} : vector<8x128xf32> to vector<8x32xf32>
    %97 = arith.negf %96 : vector<8x32xf32>
    %98 = math.exp %97 : vector<8x32xf32>
    %cst_57 = arith.constant 1.000000e+00 : f32
    %99 = vector.broadcast %cst_57 : f32 to vector<8x32xf32>
    %100 = arith.addf %99, %98 : vector<8x32xf32>
    %101 = arith.divf %99, %100 : vector<8x32xf32>
    %102 = vector.extract_strided_slice %95 {offsets = [0, 32], sizes = [8, 32], strides = [1, 1]} : vector<8x128xf32> to vector<8x32xf32>
    %103 = arith.negf %102 : vector<8x32xf32>
    %104 = math.exp %103 : vector<8x32xf32>
    %cst_58 = arith.constant 1.000000e+00 : f32
    %105 = vector.broadcast %cst_58 : f32 to vector<8x32xf32>
    %106 = arith.addf %105, %104 : vector<8x32xf32>
    %107 = arith.divf %105, %106 : vector<8x32xf32>
    %108 = vector.extract_strided_slice %95 {offsets = [0, 64], sizes = [8, 32], strides = [1, 1]} : vector<8x128xf32> to vector<8x32xf32>
    %109 = math.tanh %108 : vector<8x32xf32>
    %110 = vector.extract_strided_slice %95 {offsets = [0, 96], sizes = [8, 32], strides = [1, 1]} : vector<8x128xf32> to vector<8x32xf32>
    %111 = arith.negf %110 : vector<8x32xf32>
    %112 = math.exp %111 : vector<8x32xf32>
    %cst_59 = arith.constant 1.000000e+00 : f32
    %113 = vector.broadcast %cst_59 : f32 to vector<8x32xf32>
    %114 = arith.addf %113, %112 : vector<8x32xf32>
    %115 = arith.divf %113, %114 : vector<8x32xf32>
    %116 = arith.mulf %107, %60 : vector<8x32xf32>
    %117 = arith.mulf %101, %109 : vector<8x32xf32>
    %118 = arith.addf %116, %117 : vector<8x32xf32>
    %119 = math.tanh %118 : vector<8x32xf32>
    %120 = arith.mulf %115, %119 : vector<8x32xf32>
    %121 = vector.extract_strided_slice %1 {offsets = [1, 0, 0], sizes = [1, 8, 4], strides = [1, 1, 1]} : vector<8x8x4xf32> to vector<1x8x4xf32>
    %122 = vector.shape_cast %121 : vector<1x8x4xf32> to vector<8x4xf32>
    %123 = vector.extract_strided_slice %3 {offsets = [1, 0, 0], sizes = [1, 8, 4], strides = [1, 1, 1]} : vector<8x8x4xf32> to vector<1x8x4xf32>
    %124 = vector.shape_cast %123 : vector<1x8x4xf32> to vector<8x4xf32>
    %125 = vector.extract_strided_slice %39 {offsets = [1, 0, 0], sizes = [1, 8, 32], strides = [1, 1, 1]} : vector<8x8x32xf32> to vector<1x8x32xf32>
    %126 = vector.shape_cast %125 : vector<1x8x32xf32> to vector<8x32xf32>
    %127 = arith.mulf %120, %126 : vector<8x32xf32>
    %cst_60 = arith.constant dense<0.000000e+00> : vector<8x132xf32>
    %128 = tpu.matmul %127, %15, %cst_60 {dimension_numbers = #tpu.dot_dimension_numbers<[1], [0], [0], [1], [0, 0, 1, 1], [], []>} : vector<8x32xf32>, vector<32x132xf32>, vector<8x132xf32> -> vector<8x132xf32>
    %129 = arith.addf %128, %56 : vector<8x132xf32>
    %130 = vector.extract_strided_slice %129 {offsets = [0, 0], sizes = [8, 4], strides = [1, 1]} : vector<8x132xf32> to vector<8x4xf32>
    %131 = arith.mulf %124, %122 : vector<8x4xf32>
    %cst_61 = arith.constant 1.000000e+00 : f32
    %132 = vector.broadcast %cst_61 : f32 to vector<8x4xf32>
    %133 = arith.subf %132, %124 : vector<8x4xf32>
    %134 = arith.mulf %133, %130 : vector<8x4xf32>
    %135 = arith.addf %131, %134 : vector<8x4xf32>
    %cst_62 = arith.constant dense<0.000000e+00> : vector<8x4xf32>
    %136 = tpu.matmul %135, %19, %cst_62 {dimension_numbers = #tpu.dot_dimension_numbers<[1], [0], [0], [1], [0, 0, 1, 1], [], []>} : vector<8x4xf32>, vector<4x4xf32>, vector<8x4xf32> -> vector<8x4xf32>
    %137 = arith.addf %136, %58 : vector<8x4xf32>
    %138 = vector.extract_strided_slice %50 {offsets = [1, 0, 0], sizes = [1, 8, 4], strides = [1, 1, 1]} : vector<8x8x4xf32> to vector<1x8x4xf32>
    %139 = vector.shape_cast %138 : vector<1x8x4xf32> to vector<8x4xf32>
    %140 = arith.mulf %139, %137 : vector<8x4xf32>
    %cst_63 = arith.constant 1.000000e+00 : f32
    %141 = vector.broadcast %cst_63 : f32 to vector<8x4xf32>
    %142 = arith.subf %141, %139 : vector<8x4xf32>
    %143 = arith.mulf %142, %130 : vector<8x4xf32>
    %144 = arith.addf %140, %143 : vector<8x4xf32>
    %145 = arith.mulf %124, %122 : vector<8x4xf32>
    %cst_64 = arith.constant 1.000000e+00 : f32
    %146 = vector.broadcast %cst_64 : f32 to vector<8x4xf32>
    %147 = arith.subf %146, %124 : vector<8x4xf32>
    %148 = arith.mulf %147, %144 : vector<8x4xf32>
    %149 = arith.addf %145, %148 : vector<8x4xf32>
    %cst_65 = arith.constant dense<0.000000e+00> : vector<8x128xf32>
    %150 = tpu.matmul %149, %27, %cst_65 {dimension_numbers = #tpu.dot_dimension_numbers<[1], [0], [0], [1], [0, 0, 1, 1], [], []>} : vector<8x4xf32>, vector<4x128xf32>, vector<8x128xf32> -> vector<8x128xf32>
    %151 = vector.extract_strided_slice %129 {offsets = [0, 4], sizes = [8, 128], strides = [1, 1]} : vector<8x132xf32> to vector<8x128xf32>
    %152 = arith.addf %150, %151 : vector<8x128xf32>
    %153 = vector.extract_strided_slice %54 {offsets = [1, 0, 0], sizes = [1, 8, 128], strides = [1, 1, 1]} : vector<8x8x128xf32> to vector<1x8x128xf32>
    %154 = vector.shape_cast %153 : vector<1x8x128xf32> to vector<8x128xf32>
    %155 = arith.addf %152, %154 : vector<8x128xf32>
    %156 = vector.extract_strided_slice %155 {offsets = [0, 0], sizes = [8, 32], strides = [1, 1]} : vector<8x128xf32> to vector<8x32xf32>
    %157 = arith.negf %156 : vector<8x32xf32>
    %158 = math.exp %157 : vector<8x32xf32>
    %cst_66 = arith.constant 1.000000e+00 : f32
    %159 = vector.broadcast %cst_66 : f32 to vector<8x32xf32>
    %160 = arith.addf %159, %158 : vector<8x32xf32>
    %161 = arith.divf %159, %160 : vector<8x32xf32>
    %162 = vector.extract_strided_slice %155 {offsets = [0, 32], sizes = [8, 32], strides = [1, 1]} : vector<8x128xf32> to vector<8x32xf32>
    %163 = arith.negf %162 : vector<8x32xf32>
    %164 = math.exp %163 : vector<8x32xf32>
    %cst_67 = arith.constant 1.000000e+00 : f32
    %165 = vector.broadcast %cst_67 : f32 to vector<8x32xf32>
    %166 = arith.addf %165, %164 : vector<8x32xf32>
    %167 = arith.divf %165, %166 : vector<8x32xf32>
    %168 = vector.extract_strided_slice %155 {offsets = [0, 64], sizes = [8, 32], strides = [1, 1]} : vector<8x128xf32> to vector<8x32xf32>
    %169 = math.tanh %168 : vector<8x32xf32>
    %170 = vector.extract_strided_slice %155 {offsets = [0, 96], sizes = [8, 32], strides = [1, 1]} : vector<8x128xf32> to vector<8x32xf32>
    %171 = arith.negf %170 : vector<8x32xf32>
    %172 = math.exp %171 : vector<8x32xf32>
    %cst_68 = arith.constant 1.000000e+00 : f32
    %173 = vector.broadcast %cst_68 : f32 to vector<8x32xf32>
    %174 = arith.addf %173, %172 : vector<8x32xf32>
    %175 = arith.divf %173, %174 : vector<8x32xf32>
    %176 = arith.mulf %167, %118 : vector<8x32xf32>
    %177 = arith.mulf %161, %169 : vector<8x32xf32>
    %178 = arith.addf %176, %177 : vector<8x32xf32>
    %179 = math.tanh %178 : vector<8x32xf32>
    %180 = arith.mulf %175, %179 : vector<8x32xf32>
    %181 = vector.extract_strided_slice %1 {offsets = [2, 0, 0], sizes = [1, 8, 4], strides = [1, 1, 1]} : vector<8x8x4xf32> to vector<1x8x4xf32>
    %182 = vector.shape_cast %181 : vector<1x8x4xf32> to vector<8x4xf32>
    %183 = vector.extract_strided_slice %3 {offsets = [2, 0, 0], sizes = [1, 8, 4], strides = [1, 1, 1]} : vector<8x8x4xf32> to vector<1x8x4xf32>
    %184 = vector.shape_cast %183 : vector<1x8x4xf32> to vector<8x4xf32>
    %185 = vector.extract_strided_slice %39 {offsets = [2, 0, 0], sizes = [1, 8, 32], strides = [1, 1, 1]} : vector<8x8x32xf32> to vector<1x8x32xf32>
    %186 = vector.shape_cast %185 : vector<1x8x32xf32> to vector<8x32xf32>
    %187 = arith.mulf %180, %186 : vector<8x32xf32>
    %cst_69 = arith.constant dense<0.000000e+00> : vector<8x132xf32>
    %188 = tpu.matmul %187, %15, %cst_69 {dimension_numbers = #tpu.dot_dimension_numbers<[1], [0], [0], [1], [0, 0, 1, 1], [], []>} : vector<8x32xf32>, vector<32x132xf32>, vector<8x132xf32> -> vector<8x132xf32>
    %189 = arith.addf %188, %56 : vector<8x132xf32>
    %190 = vector.extract_strided_slice %189 {offsets = [0, 0], sizes = [8, 4], strides = [1, 1]} : vector<8x132xf32> to vector<8x4xf32>
    %191 = arith.mulf %184, %182 : vector<8x4xf32>
    %cst_70 = arith.constant 1.000000e+00 : f32
    %192 = vector.broadcast %cst_70 : f32 to vector<8x4xf32>
    %193 = arith.subf %192, %184 : vector<8x4xf32>
    %194 = arith.mulf %193, %190 : vector<8x4xf32>
    %195 = arith.addf %191, %194 : vector<8x4xf32>
    %cst_71 = arith.constant dense<0.000000e+00> : vector<8x4xf32>
    %196 = tpu.matmul %195, %19, %cst_71 {dimension_numbers = #tpu.dot_dimension_numbers<[1], [0], [0], [1], [0, 0, 1, 1], [], []>} : vector<8x4xf32>, vector<4x4xf32>, vector<8x4xf32> -> vector<8x4xf32>
    %197 = arith.addf %196, %58 : vector<8x4xf32>
    %198 = vector.extract_strided_slice %50 {offsets = [2, 0, 0], sizes = [1, 8, 4], strides = [1, 1, 1]} : vector<8x8x4xf32> to vector<1x8x4xf32>
    %199 = vector.shape_cast %198 : vector<1x8x4xf32> to vector<8x4xf32>
    %200 = arith.mulf %199, %197 : vector<8x4xf32>
    %cst_72 = arith.constant 1.000000e+00 : f32
    %201 = vector.broadcast %cst_72 : f32 to vector<8x4xf32>
    %202 = arith.subf %201, %199 : vector<8x4xf32>
    %203 = arith.mulf %202, %190 : vector<8x4xf32>
    %204 = arith.addf %200, %203 : vector<8x4xf32>
    %205 = arith.mulf %184, %182 : vector<8x4xf32>
    %cst_73 = arith.constant 1.000000e+00 : f32
    %206 = vector.broadcast %cst_73 : f32 to vector<8x4xf32>
    %207 = arith.subf %206, %184 : vector<8x4xf32>
    %208 = arith.mulf %207, %204 : vector<8x4xf32>
    %209 = arith.addf %205, %208 : vector<8x4xf32>
    %cst_74 = arith.constant dense<0.000000e+00> : vector<8x128xf32>
    %210 = tpu.matmul %209, %27, %cst_74 {dimension_numbers = #tpu.dot_dimension_numbers<[1], [0], [0], [1], [0, 0, 1, 1], [], []>} : vector<8x4xf32>, vector<4x128xf32>, vector<8x128xf32> -> vector<8x128xf32>
    %211 = vector.extract_strided_slice %189 {offsets = [0, 4], sizes = [8, 128], strides = [1, 1]} : vector<8x132xf32> to vector<8x128xf32>
    %212 = arith.addf %210, %211 : vector<8x128xf32>
    %213 = vector.extract_strided_slice %54 {offsets = [2, 0, 0], sizes = [1, 8, 128], strides = [1, 1, 1]} : vector<8x8x128xf32> to vector<1x8x128xf32>
    %214 = vector.shape_cast %213 : vector<1x8x128xf32> to vector<8x128xf32>
    %215 = arith.addf %212, %214 : vector<8x128xf32>
    %216 = vector.extract_strided_slice %215 {offsets = [0, 0], sizes = [8, 32], strides = [1, 1]} : vector<8x128xf32> to vector<8x32xf32>
    %217 = arith.negf %216 : vector<8x32xf32>
    %218 = math.exp %217 : vector<8x32xf32>
    %cst_75 = arith.constant 1.000000e+00 : f32
    %219 = vector.broadcast %cst_75 : f32 to vector<8x32xf32>
    %220 = arith.addf %219, %218 : vector<8x32xf32>
    %221 = arith.divf %219, %220 : vector<8x32xf32>
    %222 = vector.extract_strided_slice %215 {offsets = [0, 32], sizes = [8, 32], strides = [1, 1]} : vector<8x128xf32> to vector<8x32xf32>
    %223 = arith.negf %222 : vector<8x32xf32>
    %224 = math.exp %223 : vector<8x32xf32>
    %cst_76 = arith.constant 1.000000e+00 : f32
    %225 = vector.broadcast %cst_76 : f32 to vector<8x32xf32>
    %226 = arith.addf %225, %224 : vector<8x32xf32>
    %227 = arith.divf %225, %226 : vector<8x32xf32>
    %228 = vector.extract_strided_slice %215 {offsets = [0, 64], sizes = [8, 32], strides = [1, 1]} : vector<8x128xf32> to vector<8x32xf32>
    %229 = math.tanh %228 : vector<8x32xf32>
    %230 = vector.extract_strided_slice %215 {offsets = [0, 96], sizes = [8, 32], strides = [1, 1]} : vector<8x128xf32> to vector<8x32xf32>
    %231 = arith.negf %230 : vector<8x32xf32>
    %232 = math.exp %231 : vector<8x32xf32>
    %cst_77 = arith.constant 1.000000e+00 : f32
    %233 = vector.broadcast %cst_77 : f32 to vector<8x32xf32>
    %234 = arith.addf %233, %232 : vector<8x32xf32>
    %235 = arith.divf %233, %234 : vector<8x32xf32>
    %236 = arith.mulf %227, %178 : vector<8x32xf32>
    %237 = arith.mulf %221, %229 : vector<8x32xf32>
    %238 = arith.addf %236, %237 : vector<8x32xf32>
    %239 = math.tanh %238 : vector<8x32xf32>
    %240 = arith.mulf %235, %239 : vector<8x32xf32>
    %241 = vector.extract_strided_slice %1 {offsets = [3, 0, 0], sizes = [1, 8, 4], strides = [1, 1, 1]} : vector<8x8x4xf32> to vector<1x8x4xf32>
    %242 = vector.shape_cast %241 : vector<1x8x4xf32> to vector<8x4xf32>
    %243 = vector.extract_strided_slice %3 {offsets = [3, 0, 0], sizes = [1, 8, 4], strides = [1, 1, 1]} : vector<8x8x4xf32> to vector<1x8x4xf32>
    %244 = vector.shape_cast %243 : vector<1x8x4xf32> to vector<8x4xf32>
    %245 = vector.extract_strided_slice %39 {offsets = [3, 0, 0], sizes = [1, 8, 32], strides = [1, 1, 1]} : vector<8x8x32xf32> to vector<1x8x32xf32>
    %246 = vector.shape_cast %245 : vector<1x8x32xf32> to vector<8x32xf32>
    %247 = arith.mulf %240, %246 : vector<8x32xf32>
    %cst_78 = arith.constant dense<0.000000e+00> : vector<8x132xf32>
    %248 = tpu.matmul %247, %15, %cst_78 {dimension_numbers = #tpu.dot_dimension_numbers<[1], [0], [0], [1], [0, 0, 1, 1], [], []>} : vector<8x32xf32>, vector<32x132xf32>, vector<8x132xf32> -> vector<8x132xf32>
    %249 = arith.addf %248, %56 : vector<8x132xf32>
    %250 = vector.extract_strided_slice %249 {offsets = [0, 0], sizes = [8, 4], strides = [1, 1]} : vector<8x132xf32> to vector<8x4xf32>
    %251 = arith.mulf %244, %242 : vector<8x4xf32>
    %cst_79 = arith.constant 1.000000e+00 : f32
    %252 = vector.broadcast %cst_79 : f32 to vector<8x4xf32>
    %253 = arith.subf %252, %244 : vector<8x4xf32>
    %254 = arith.mulf %253, %250 : vector<8x4xf32>
    %255 = arith.addf %251, %254 : vector<8x4xf32>
    %cst_80 = arith.constant dense<0.000000e+00> : vector<8x4xf32>
    %256 = tpu.matmul %255, %19, %cst_80 {dimension_numbers = #tpu.dot_dimension_numbers<[1], [0], [0], [1], [0, 0, 1, 1], [], []>} : vector<8x4xf32>, vector<4x4xf32>, vector<8x4xf32> -> vector<8x4xf32>
    %257 = arith.addf %256, %58 : vector<8x4xf32>
    %258 = vector.extract_strided_slice %50 {offsets = [3, 0, 0], sizes = [1, 8, 4], strides = [1, 1, 1]} : vector<8x8x4xf32> to vector<1x8x4xf32>
    %259 = vector.shape_cast %258 : vector<1x8x4xf32> to vector<8x4xf32>
    %260 = arith.mulf %259, %257 : vector<8x4xf32>
    %cst_81 = arith.constant 1.000000e+00 : f32
    %261 = vector.broadcast %cst_81 : f32 to vector<8x4xf32>
    %262 = arith.subf %261, %259 : vector<8x4xf32>
    %263 = arith.mulf %262, %250 : vector<8x4xf32>
    %264 = arith.addf %260, %263 : vector<8x4xf32>
    %265 = arith.mulf %244, %242 : vector<8x4xf32>
    %cst_82 = arith.constant 1.000000e+00 : f32
    %266 = vector.broadcast %cst_82 : f32 to vector<8x4xf32>
    %267 = arith.subf %266, %244 : vector<8x4xf32>
    %268 = arith.mulf %267, %264 : vector<8x4xf32>
    %269 = arith.addf %265, %268 : vector<8x4xf32>
    %cst_83 = arith.constant dense<0.000000e+00> : vector<8x128xf32>
    %270 = tpu.matmul %269, %27, %cst_83 {dimension_numbers = #tpu.dot_dimension_numbers<[1], [0], [0], [1], [0, 0, 1, 1], [], []>} : vector<8x4xf32>, vector<4x128xf32>, vector<8x128xf32> -> vector<8x128xf32>
    %271 = vector.extract_strided_slice %249 {offsets = [0, 4], sizes = [8, 128], strides = [1, 1]} : vector<8x132xf32> to vector<8x128xf32>
    %272 = arith.addf %270, %271 : vector<8x128xf32>
    %273 = vector.extract_strided_slice %54 {offsets = [3, 0, 0], sizes = [1, 8, 128], strides = [1, 1, 1]} : vector<8x8x128xf32> to vector<1x8x128xf32>
    %274 = vector.shape_cast %273 : vector<1x8x128xf32> to vector<8x128xf32>
    %275 = arith.addf %272, %274 : vector<8x128xf32>
    %276 = vector.extract_strided_slice %275 {offsets = [0, 0], sizes = [8, 32], strides = [1, 1]} : vector<8x128xf32> to vector<8x32xf32>
    %277 = arith.negf %276 : vector<8x32xf32>
    %278 = math.exp %277 : vector<8x32xf32>
    %cst_84 = arith.constant 1.000000e+00 : f32
    %279 = vector.broadcast %cst_84 : f32 to vector<8x32xf32>
    %280 = arith.addf %279, %278 : vector<8x32xf32>
    %281 = arith.divf %279, %280 : vector<8x32xf32>
    %282 = vector.extract_strided_slice %275 {offsets = [0, 32], sizes = [8, 32], strides = [1, 1]} : vector<8x128xf32> to vector<8x32xf32>
    %283 = arith.negf %282 : vector<8x32xf32>
    %284 = math.exp %283 : vector<8x32xf32>
    %cst_85 = arith.constant 1.000000e+00 : f32
    %285 = vector.broadcast %cst_85 : f32 to vector<8x32xf32>
    %286 = arith.addf %285, %284 : vector<8x32xf32>
    %287 = arith.divf %285, %286 : vector<8x32xf32>
    %288 = vector.extract_strided_slice %275 {offsets = [0, 64], sizes = [8, 32], strides = [1, 1]} : vector<8x128xf32> to vector<8x32xf32>
    %289 = math.tanh %288 : vector<8x32xf32>
    %290 = vector.extract_strided_slice %275 {offsets = [0, 96], sizes = [8, 32], strides = [1, 1]} : vector<8x128xf32> to vector<8x32xf32>
    %291 = arith.negf %290 : vector<8x32xf32>
    %292 = math.exp %291 : vector<8x32xf32>
    %cst_86 = arith.constant 1.000000e+00 : f32
    %293 = vector.broadcast %cst_86 : f32 to vector<8x32xf32>
    %294 = arith.addf %293, %292 : vector<8x32xf32>
    %295 = arith.divf %293, %294 : vector<8x32xf32>
    %296 = arith.mulf %287, %238 : vector<8x32xf32>
    %297 = arith.mulf %281, %289 : vector<8x32xf32>
    %298 = arith.addf %296, %297 : vector<8x32xf32>
    %299 = math.tanh %298 : vector<8x32xf32>
    %300 = arith.mulf %295, %299 : vector<8x32xf32>
    %301 = vector.extract_strided_slice %1 {offsets = [4, 0, 0], sizes = [1, 8, 4], strides = [1, 1, 1]} : vector<8x8x4xf32> to vector<1x8x4xf32>
    %302 = vector.shape_cast %301 : vector<1x8x4xf32> to vector<8x4xf32>
    %303 = vector.extract_strided_slice %3 {offsets = [4, 0, 0], sizes = [1, 8, 4], strides = [1, 1, 1]} : vector<8x8x4xf32> to vector<1x8x4xf32>
    %304 = vector.shape_cast %303 : vector<1x8x4xf32> to vector<8x4xf32>
    %305 = vector.extract_strided_slice %39 {offsets = [4, 0, 0], sizes = [1, 8, 32], strides = [1, 1, 1]} : vector<8x8x32xf32> to vector<1x8x32xf32>
    %306 = vector.shape_cast %305 : vector<1x8x32xf32> to vector<8x32xf32>
    %307 = arith.mulf %300, %306 : vector<8x32xf32>
    %cst_87 = arith.constant dense<0.000000e+00> : vector<8x132xf32>
    %308 = tpu.matmul %307, %15, %cst_87 {dimension_numbers = #tpu.dot_dimension_numbers<[1], [0], [0], [1], [0, 0, 1, 1], [], []>} : vector<8x32xf32>, vector<32x132xf32>, vector<8x132xf32> -> vector<8x132xf32>
    %309 = arith.addf %308, %56 : vector<8x132xf32>
    %310 = vector.extract_strided_slice %309 {offsets = [0, 0], sizes = [8, 4], strides = [1, 1]} : vector<8x132xf32> to vector<8x4xf32>
    %311 = arith.mulf %304, %302 : vector<8x4xf32>
    %cst_88 = arith.constant 1.000000e+00 : f32
    %312 = vector.broadcast %cst_88 : f32 to vector<8x4xf32>
    %313 = arith.subf %312, %304 : vector<8x4xf32>
    %314 = arith.mulf %313, %310 : vector<8x4xf32>
    %315 = arith.addf %311, %314 : vector<8x4xf32>
    %cst_89 = arith.constant dense<0.000000e+00> : vector<8x4xf32>
    %316 = tpu.matmul %315, %19, %cst_89 {dimension_numbers = #tpu.dot_dimension_numbers<[1], [0], [0], [1], [0, 0, 1, 1], [], []>} : vector<8x4xf32>, vector<4x4xf32>, vector<8x4xf32> -> vector<8x4xf32>
    %317 = arith.addf %316, %58 : vector<8x4xf32>
    %318 = vector.extract_strided_slice %50 {offsets = [4, 0, 0], sizes = [1, 8, 4], strides = [1, 1, 1]} : vector<8x8x4xf32> to vector<1x8x4xf32>
    %319 = vector.shape_cast %318 : vector<1x8x4xf32> to vector<8x4xf32>
    %320 = arith.mulf %319, %317 : vector<8x4xf32>
    %cst_90 = arith.constant 1.000000e+00 : f32
    %321 = vector.broadcast %cst_90 : f32 to vector<8x4xf32>
    %322 = arith.subf %321, %319 : vector<8x4xf32>
    %323 = arith.mulf %322, %310 : vector<8x4xf32>
    %324 = arith.addf %320, %323 : vector<8x4xf32>
    %325 = arith.mulf %304, %302 : vector<8x4xf32>
    %cst_91 = arith.constant 1.000000e+00 : f32
    %326 = vector.broadcast %cst_91 : f32 to vector<8x4xf32>
    %327 = arith.subf %326, %304 : vector<8x4xf32>
    %328 = arith.mulf %327, %324 : vector<8x4xf32>
    %329 = arith.addf %325, %328 : vector<8x4xf32>
    %cst_92 = arith.constant dense<0.000000e+00> : vector<8x128xf32>
    %330 = tpu.matmul %329, %27, %cst_92 {dimension_numbers = #tpu.dot_dimension_numbers<[1], [0], [0], [1], [0, 0, 1, 1], [], []>} : vector<8x4xf32>, vector<4x128xf32>, vector<8x128xf32> -> vector<8x128xf32>
    %331 = vector.extract_strided_slice %309 {offsets = [0, 4], sizes = [8, 128], strides = [1, 1]} : vector<8x132xf32> to vector<8x128xf32>
    %332 = arith.addf %330, %331 : vector<8x128xf32>
    %333 = vector.extract_strided_slice %54 {offsets = [4, 0, 0], sizes = [1, 8, 128], strides = [1, 1, 1]} : vector<8x8x128xf32> to vector<1x8x128xf32>
    %334 = vector.shape_cast %333 : vector<1x8x128xf32> to vector<8x128xf32>
    %335 = arith.addf %332, %334 : vector<8x128xf32>
    %336 = vector.extract_strided_slice %335 {offsets = [0, 0], sizes = [8, 32], strides = [1, 1]} : vector<8x128xf32> to vector<8x32xf32>
    %337 = arith.negf %336 : vector<8x32xf32>
    %338 = math.exp %337 : vector<8x32xf32>
    %cst_93 = arith.constant 1.000000e+00 : f32
    %339 = vector.broadcast %cst_93 : f32 to vector<8x32xf32>
    %340 = arith.addf %339, %338 : vector<8x32xf32>
    %341 = arith.divf %339, %340 : vector<8x32xf32>
    %342 = vector.extract_strided_slice %335 {offsets = [0, 32], sizes = [8, 32], strides = [1, 1]} : vector<8x128xf32> to vector<8x32xf32>
    %343 = arith.negf %342 : vector<8x32xf32>
    %344 = math.exp %343 : vector<8x32xf32>
    %cst_94 = arith.constant 1.000000e+00 : f32
    %345 = vector.broadcast %cst_94 : f32 to vector<8x32xf32>
    %346 = arith.addf %345, %344 : vector<8x32xf32>
    %347 = arith.divf %345, %346 : vector<8x32xf32>
    %348 = vector.extract_strided_slice %335 {offsets = [0, 64], sizes = [8, 32], strides = [1, 1]} : vector<8x128xf32> to vector<8x32xf32>
    %349 = math.tanh %348 : vector<8x32xf32>
    %350 = vector.extract_strided_slice %335 {offsets = [0, 96], sizes = [8, 32], strides = [1, 1]} : vector<8x128xf32> to vector<8x32xf32>
    %351 = arith.negf %350 : vector<8x32xf32>
    %352 = math.exp %351 : vector<8x32xf32>
    %cst_95 = arith.constant 1.000000e+00 : f32
    %353 = vector.broadcast %cst_95 : f32 to vector<8x32xf32>
    %354 = arith.addf %353, %352 : vector<8x32xf32>
    %355 = arith.divf %353, %354 : vector<8x32xf32>
    %356 = arith.mulf %347, %298 : vector<8x32xf32>
    %357 = arith.mulf %341, %349 : vector<8x32xf32>
    %358 = arith.addf %356, %357 : vector<8x32xf32>
    %359 = math.tanh %358 : vector<8x32xf32>
    %360 = arith.mulf %355, %359 : vector<8x32xf32>
    %361 = vector.extract_strided_slice %1 {offsets = [5, 0, 0], sizes = [1, 8, 4], strides = [1, 1, 1]} : vector<8x8x4xf32> to vector<1x8x4xf32>
    %362 = vector.shape_cast %361 : vector<1x8x4xf32> to vector<8x4xf32>
    %363 = vector.extract_strided_slice %3 {offsets = [5, 0, 0], sizes = [1, 8, 4], strides = [1, 1, 1]} : vector<8x8x4xf32> to vector<1x8x4xf32>
    %364 = vector.shape_cast %363 : vector<1x8x4xf32> to vector<8x4xf32>
    %365 = vector.extract_strided_slice %39 {offsets = [5, 0, 0], sizes = [1, 8, 32], strides = [1, 1, 1]} : vector<8x8x32xf32> to vector<1x8x32xf32>
    %366 = vector.shape_cast %365 : vector<1x8x32xf32> to vector<8x32xf32>
    %367 = arith.mulf %360, %366 : vector<8x32xf32>
    %cst_96 = arith.constant dense<0.000000e+00> : vector<8x132xf32>
    %368 = tpu.matmul %367, %15, %cst_96 {dimension_numbers = #tpu.dot_dimension_numbers<[1], [0], [0], [1], [0, 0, 1, 1], [], []>} : vector<8x32xf32>, vector<32x132xf32>, vector<8x132xf32> -> vector<8x132xf32>
    %369 = arith.addf %368, %56 : vector<8x132xf32>
    %370 = vector.extract_strided_slice %369 {offsets = [0, 0], sizes = [8, 4], strides = [1, 1]} : vector<8x132xf32> to vector<8x4xf32>
    %371 = arith.mulf %364, %362 : vector<8x4xf32>
    %cst_97 = arith.constant 1.000000e+00 : f32
    %372 = vector.broadcast %cst_97 : f32 to vector<8x4xf32>
    %373 = arith.subf %372, %364 : vector<8x4xf32>
    %374 = arith.mulf %373, %370 : vector<8x4xf32>
    %375 = arith.addf %371, %374 : vector<8x4xf32>
    %cst_98 = arith.constant dense<0.000000e+00> : vector<8x4xf32>
    %376 = tpu.matmul %375, %19, %cst_98 {dimension_numbers = #tpu.dot_dimension_numbers<[1], [0], [0], [1], [0, 0, 1, 1], [], []>} : vector<8x4xf32>, vector<4x4xf32>, vector<8x4xf32> -> vector<8x4xf32>
    %377 = arith.addf %376, %58 : vector<8x4xf32>
    %378 = vector.extract_strided_slice %50 {offsets = [5, 0, 0], sizes = [1, 8, 4], strides = [1, 1, 1]} : vector<8x8x4xf32> to vector<1x8x4xf32>
    %379 = vector.shape_cast %378 : vector<1x8x4xf32> to vector<8x4xf32>
    %380 = arith.mulf %379, %377 : vector<8x4xf32>
    %cst_99 = arith.constant 1.000000e+00 : f32
    %381 = vector.broadcast %cst_99 : f32 to vector<8x4xf32>
    %382 = arith.subf %381, %379 : vector<8x4xf32>
    %383 = arith.mulf %382, %370 : vector<8x4xf32>
    %384 = arith.addf %380, %383 : vector<8x4xf32>
    %385 = arith.mulf %364, %362 : vector<8x4xf32>
    %cst_100 = arith.constant 1.000000e+00 : f32
    %386 = vector.broadcast %cst_100 : f32 to vector<8x4xf32>
    %387 = arith.subf %386, %364 : vector<8x4xf32>
    %388 = arith.mulf %387, %384 : vector<8x4xf32>
    %389 = arith.addf %385, %388 : vector<8x4xf32>
    %cst_101 = arith.constant dense<0.000000e+00> : vector<8x128xf32>
    %390 = tpu.matmul %389, %27, %cst_101 {dimension_numbers = #tpu.dot_dimension_numbers<[1], [0], [0], [1], [0, 0, 1, 1], [], []>} : vector<8x4xf32>, vector<4x128xf32>, vector<8x128xf32> -> vector<8x128xf32>
    %391 = vector.extract_strided_slice %369 {offsets = [0, 4], sizes = [8, 128], strides = [1, 1]} : vector<8x132xf32> to vector<8x128xf32>
    %392 = arith.addf %390, %391 : vector<8x128xf32>
    %393 = vector.extract_strided_slice %54 {offsets = [5, 0, 0], sizes = [1, 8, 128], strides = [1, 1, 1]} : vector<8x8x128xf32> to vector<1x8x128xf32>
    %394 = vector.shape_cast %393 : vector<1x8x128xf32> to vector<8x128xf32>
    %395 = arith.addf %392, %394 : vector<8x128xf32>
    %396 = vector.extract_strided_slice %395 {offsets = [0, 0], sizes = [8, 32], strides = [1, 1]} : vector<8x128xf32> to vector<8x32xf32>
    %397 = arith.negf %396 : vector<8x32xf32>
    %398 = math.exp %397 : vector<8x32xf32>
    %cst_102 = arith.constant 1.000000e+00 : f32
    %399 = vector.broadcast %cst_102 : f32 to vector<8x32xf32>
    %400 = arith.addf %399, %398 : vector<8x32xf32>
    %401 = arith.divf %399, %400 : vector<8x32xf32>
    %402 = vector.extract_strided_slice %395 {offsets = [0, 32], sizes = [8, 32], strides = [1, 1]} : vector<8x128xf32> to vector<8x32xf32>
    %403 = arith.negf %402 : vector<8x32xf32>
    %404 = math.exp %403 : vector<8x32xf32>
    %cst_103 = arith.constant 1.000000e+00 : f32
    %405 = vector.broadcast %cst_103 : f32 to vector<8x32xf32>
    %406 = arith.addf %405, %404 : vector<8x32xf32>
    %407 = arith.divf %405, %406 : vector<8x32xf32>
    %408 = vector.extract_strided_slice %395 {offsets = [0, 64], sizes = [8, 32], strides = [1, 1]} : vector<8x128xf32> to vector<8x32xf32>
    %409 = math.tanh %408 : vector<8x32xf32>
    %410 = vector.extract_strided_slice %395 {offsets = [0, 96], sizes = [8, 32], strides = [1, 1]} : vector<8x128xf32> to vector<8x32xf32>
    %411 = arith.negf %410 : vector<8x32xf32>
    %412 = math.exp %411 : vector<8x32xf32>
    %cst_104 = arith.constant 1.000000e+00 : f32
    %413 = vector.broadcast %cst_104 : f32 to vector<8x32xf32>
    %414 = arith.addf %413, %412 : vector<8x32xf32>
    %415 = arith.divf %413, %414 : vector<8x32xf32>
    %416 = arith.mulf %407, %358 : vector<8x32xf32>
    %417 = arith.mulf %401, %409 : vector<8x32xf32>
    %418 = arith.addf %416, %417 : vector<8x32xf32>
    %419 = math.tanh %418 : vector<8x32xf32>
    %420 = arith.mulf %415, %419 : vector<8x32xf32>
    %421 = vector.extract_strided_slice %1 {offsets = [6, 0, 0], sizes = [1, 8, 4], strides = [1, 1, 1]} : vector<8x8x4xf32> to vector<1x8x4xf32>
    %422 = vector.shape_cast %421 : vector<1x8x4xf32> to vector<8x4xf32>
    %423 = vector.extract_strided_slice %3 {offsets = [6, 0, 0], sizes = [1, 8, 4], strides = [1, 1, 1]} : vector<8x8x4xf32> to vector<1x8x4xf32>
    %424 = vector.shape_cast %423 : vector<1x8x4xf32> to vector<8x4xf32>
    %425 = vector.extract_strided_slice %39 {offsets = [6, 0, 0], sizes = [1, 8, 32], strides = [1, 1, 1]} : vector<8x8x32xf32> to vector<1x8x32xf32>
    %426 = vector.shape_cast %425 : vector<1x8x32xf32> to vector<8x32xf32>
    %427 = arith.mulf %420, %426 : vector<8x32xf32>
    %cst_105 = arith.constant dense<0.000000e+00> : vector<8x132xf32>
    %428 = tpu.matmul %427, %15, %cst_105 {dimension_numbers = #tpu.dot_dimension_numbers<[1], [0], [0], [1], [0, 0, 1, 1], [], []>} : vector<8x32xf32>, vector<32x132xf32>, vector<8x132xf32> -> vector<8x132xf32>
    %429 = arith.addf %428, %56 : vector<8x132xf32>
    %430 = vector.extract_strided_slice %429 {offsets = [0, 0], sizes = [8, 4], strides = [1, 1]} : vector<8x132xf32> to vector<8x4xf32>
    %431 = arith.mulf %424, %422 : vector<8x4xf32>
    %cst_106 = arith.constant 1.000000e+00 : f32
    %432 = vector.broadcast %cst_106 : f32 to vector<8x4xf32>
    %433 = arith.subf %432, %424 : vector<8x4xf32>
    %434 = arith.mulf %433, %430 : vector<8x4xf32>
    %435 = arith.addf %431, %434 : vector<8x4xf32>
    %cst_107 = arith.constant dense<0.000000e+00> : vector<8x4xf32>
    %436 = tpu.matmul %435, %19, %cst_107 {dimension_numbers = #tpu.dot_dimension_numbers<[1], [0], [0], [1], [0, 0, 1, 1], [], []>} : vector<8x4xf32>, vector<4x4xf32>, vector<8x4xf32> -> vector<8x4xf32>
    %437 = arith.addf %436, %58 : vector<8x4xf32>
    %438 = vector.extract_strided_slice %50 {offsets = [6, 0, 0], sizes = [1, 8, 4], strides = [1, 1, 1]} : vector<8x8x4xf32> to vector<1x8x4xf32>
    %439 = vector.shape_cast %438 : vector<1x8x4xf32> to vector<8x4xf32>
    %440 = arith.mulf %439, %437 : vector<8x4xf32>
    %cst_108 = arith.constant 1.000000e+00 : f32
    %441 = vector.broadcast %cst_108 : f32 to vector<8x4xf32>
    %442 = arith.subf %441, %439 : vector<8x4xf32>
    %443 = arith.mulf %442, %430 : vector<8x4xf32>
    %444 = arith.addf %440, %443 : vector<8x4xf32>
    %445 = arith.mulf %424, %422 : vector<8x4xf32>
    %cst_109 = arith.constant 1.000000e+00 : f32
    %446 = vector.broadcast %cst_109 : f32 to vector<8x4xf32>
    %447 = arith.subf %446, %424 : vector<8x4xf32>
    %448 = arith.mulf %447, %444 : vector<8x4xf32>
    %449 = arith.addf %445, %448 : vector<8x4xf32>
    %cst_110 = arith.constant dense<0.000000e+00> : vector<8x128xf32>
    %450 = tpu.matmul %449, %27, %cst_110 {dimension_numbers = #tpu.dot_dimension_numbers<[1], [0], [0], [1], [0, 0, 1, 1], [], []>} : vector<8x4xf32>, vector<4x128xf32>, vector<8x128xf32> -> vector<8x128xf32>
    %451 = vector.extract_strided_slice %429 {offsets = [0, 4], sizes = [8, 128], strides = [1, 1]} : vector<8x132xf32> to vector<8x128xf32>
    %452 = arith.addf %450, %451 : vector<8x128xf32>
    %453 = vector.extract_strided_slice %54 {offsets = [6, 0, 0], sizes = [1, 8, 128], strides = [1, 1, 1]} : vector<8x8x128xf32> to vector<1x8x128xf32>
    %454 = vector.shape_cast %453 : vector<1x8x128xf32> to vector<8x128xf32>
    %455 = arith.addf %452, %454 : vector<8x128xf32>
    %456 = vector.extract_strided_slice %455 {offsets = [0, 0], sizes = [8, 32], strides = [1, 1]} : vector<8x128xf32> to vector<8x32xf32>
    %457 = arith.negf %456 : vector<8x32xf32>
    %458 = math.exp %457 : vector<8x32xf32>
    %cst_111 = arith.constant 1.000000e+00 : f32
    %459 = vector.broadcast %cst_111 : f32 to vector<8x32xf32>
    %460 = arith.addf %459, %458 : vector<8x32xf32>
    %461 = arith.divf %459, %460 : vector<8x32xf32>
    %462 = vector.extract_strided_slice %455 {offsets = [0, 32], sizes = [8, 32], strides = [1, 1]} : vector<8x128xf32> to vector<8x32xf32>
    %463 = arith.negf %462 : vector<8x32xf32>
    %464 = math.exp %463 : vector<8x32xf32>
    %cst_112 = arith.constant 1.000000e+00 : f32
    %465 = vector.broadcast %cst_112 : f32 to vector<8x32xf32>
    %466 = arith.addf %465, %464 : vector<8x32xf32>
    %467 = arith.divf %465, %466 : vector<8x32xf32>
    %468 = vector.extract_strided_slice %455 {offsets = [0, 64], sizes = [8, 32], strides = [1, 1]} : vector<8x128xf32> to vector<8x32xf32>
    %469 = math.tanh %468 : vector<8x32xf32>
    %470 = vector.extract_strided_slice %455 {offsets = [0, 96], sizes = [8, 32], strides = [1, 1]} : vector<8x128xf32> to vector<8x32xf32>
    %471 = arith.negf %470 : vector<8x32xf32>
    %472 = math.exp %471 : vector<8x32xf32>
    %cst_113 = arith.constant 1.000000e+00 : f32
    %473 = vector.broadcast %cst_113 : f32 to vector<8x32xf32>
    %474 = arith.addf %473, %472 : vector<8x32xf32>
    %475 = arith.divf %473, %474 : vector<8x32xf32>
    %476 = arith.mulf %467, %418 : vector<8x32xf32>
    %477 = arith.mulf %461, %469 : vector<8x32xf32>
    %478 = arith.addf %476, %477 : vector<8x32xf32>
    %479 = math.tanh %478 : vector<8x32xf32>
    %480 = arith.mulf %475, %479 : vector<8x32xf32>
    %481 = vector.extract_strided_slice %1 {offsets = [7, 0, 0], sizes = [1, 8, 4], strides = [1, 1, 1]} : vector<8x8x4xf32> to vector<1x8x4xf32>
    %482 = vector.shape_cast %481 : vector<1x8x4xf32> to vector<8x4xf32>
    %483 = vector.extract_strided_slice %3 {offsets = [7, 0, 0], sizes = [1, 8, 4], strides = [1, 1, 1]} : vector<8x8x4xf32> to vector<1x8x4xf32>
    %484 = vector.shape_cast %483 : vector<1x8x4xf32> to vector<8x4xf32>
    %485 = vector.extract_strided_slice %39 {offsets = [7, 0, 0], sizes = [1, 8, 32], strides = [1, 1, 1]} : vector<8x8x32xf32> to vector<1x8x32xf32>
    %486 = vector.shape_cast %485 : vector<1x8x32xf32> to vector<8x32xf32>
    %487 = arith.mulf %480, %486 : vector<8x32xf32>
    %cst_114 = arith.constant dense<0.000000e+00> : vector<8x132xf32>
    %488 = tpu.matmul %487, %15, %cst_114 {dimension_numbers = #tpu.dot_dimension_numbers<[1], [0], [0], [1], [0, 0, 1, 1], [], []>} : vector<8x32xf32>, vector<32x132xf32>, vector<8x132xf32> -> vector<8x132xf32>
    %489 = arith.addf %488, %56 : vector<8x132xf32>
    %490 = vector.extract_strided_slice %489 {offsets = [0, 0], sizes = [8, 4], strides = [1, 1]} : vector<8x132xf32> to vector<8x4xf32>
    %491 = arith.mulf %484, %482 : vector<8x4xf32>
    %cst_115 = arith.constant 1.000000e+00 : f32
    %492 = vector.broadcast %cst_115 : f32 to vector<8x4xf32>
    %493 = arith.subf %492, %484 : vector<8x4xf32>
    %494 = arith.mulf %493, %490 : vector<8x4xf32>
    %495 = arith.addf %491, %494 : vector<8x4xf32>
    %cst_116 = arith.constant dense<0.000000e+00> : vector<8x4xf32>
    %496 = tpu.matmul %495, %19, %cst_116 {dimension_numbers = #tpu.dot_dimension_numbers<[1], [0], [0], [1], [0, 0, 1, 1], [], []>} : vector<8x4xf32>, vector<4x4xf32>, vector<8x4xf32> -> vector<8x4xf32>
    %497 = arith.addf %496, %58 : vector<8x4xf32>
    %498 = vector.extract_strided_slice %50 {offsets = [7, 0, 0], sizes = [1, 8, 4], strides = [1, 1, 1]} : vector<8x8x4xf32> to vector<1x8x4xf32>
    %499 = vector.shape_cast %498 : vector<1x8x4xf32> to vector<8x4xf32>
    %500 = arith.mulf %499, %497 : vector<8x4xf32>
    %cst_117 = arith.constant 1.000000e+00 : f32
    %501 = vector.broadcast %cst_117 : f32 to vector<8x4xf32>
    %502 = arith.subf %501, %499 : vector<8x4xf32>
    %503 = arith.mulf %502, %490 : vector<8x4xf32>
    %504 = arith.addf %500, %503 : vector<8x4xf32>
    %505 = arith.mulf %484, %482 : vector<8x4xf32>
    %cst_118 = arith.constant 1.000000e+00 : f32
    %506 = vector.broadcast %cst_118 : f32 to vector<8x4xf32>
    %507 = arith.subf %506, %484 : vector<8x4xf32>
    %508 = arith.mulf %507, %504 : vector<8x4xf32>
    %509 = arith.addf %505, %508 : vector<8x4xf32>
    %510 = vector.shape_cast %84 : vector<8x4xf32> to vector<1x8x4xf32>
    %511 = vector.shape_cast %144 : vector<8x4xf32> to vector<1x8x4xf32>
    %512 = vector.shape_cast %204 : vector<8x4xf32> to vector<1x8x4xf32>
    %513 = vector.shape_cast %264 : vector<8x4xf32> to vector<1x8x4xf32>
    %514 = vector.shape_cast %324 : vector<8x4xf32> to vector<1x8x4xf32>
    %515 = vector.shape_cast %384 : vector<8x4xf32> to vector<1x8x4xf32>
    %516 = vector.shape_cast %444 : vector<8x4xf32> to vector<1x8x4xf32>
    %517 = vector.shape_cast %504 : vector<8x4xf32> to vector<1x8x4xf32>
    %518 = tpu.concatenate %510, %511, %512, %513, %514, %515, %516, %517 in 0 : vector<1x8x4xf32>, vector<1x8x4xf32>, vector<1x8x4xf32>, vector<1x8x4xf32>, vector<1x8x4xf32>, vector<1x8x4xf32>, vector<1x8x4xf32>, vector<1x8x4xf32> -> vector<8x8x4xf32>
    %519 = vector.shape_cast %89 : vector<8x4xf32> to vector<1x8x4xf32>
    %520 = vector.shape_cast %149 : vector<8x4xf32> to vector<1x8x4xf32>
    %521 = vector.shape_cast %209 : vector<8x4xf32> to vector<1x8x4xf32>
    %522 = vector.shape_cast %269 : vector<8x4xf32> to vector<1x8x4xf32>
    %523 = vector.shape_cast %329 : vector<8x4xf32> to vector<1x8x4xf32>
    %524 = vector.shape_cast %389 : vector<8x4xf32> to vector<1x8x4xf32>
    %525 = vector.shape_cast %449 : vector<8x4xf32> to vector<1x8x4xf32>
    %526 = vector.shape_cast %509 : vector<8x4xf32> to vector<1x8x4xf32>
    %527 = tpu.concatenate %519, %520, %521, %522, %523, %524, %525, %526 in 0 : vector<1x8x4xf32>, vector<1x8x4xf32>, vector<1x8x4xf32>, vector<1x8x4xf32>, vector<1x8x4xf32>, vector<1x8x4xf32>, vector<1x8x4xf32>, vector<1x8x4xf32> -> vector<8x8x4xf32>
    %528 = vector.shape_cast %504 : vector<8x4xf32> to vector<1x8x4xf32>
    %529 = vector.shape_cast %444 : vector<8x4xf32> to vector<1x8x4xf32>
    %530 = vector.shape_cast %384 : vector<8x4xf32> to vector<1x8x4xf32>
    %531 = vector.shape_cast %324 : vector<8x4xf32> to vector<1x8x4xf32>
    %532 = vector.shape_cast %264 : vector<8x4xf32> to vector<1x8x4xf32>
    %533 = vector.shape_cast %204 : vector<8x4xf32> to vector<1x8x4xf32>
    %534 = vector.shape_cast %144 : vector<8x4xf32> to vector<1x8x4xf32>
    %535 = vector.shape_cast %84 : vector<8x4xf32> to vector<1x8x4xf32>
    %536 = tpu.concatenate %528, %529, %530, %531, %532, %533, %534, %535 in 0 : vector<1x8x4xf32>, vector<1x8x4xf32>, vector<1x8x4xf32>, vector<1x8x4xf32>, vector<1x8x4xf32>, vector<1x8x4xf32>, vector<1x8x4xf32>, vector<1x8x4xf32> -> vector<8x8x4xf32>
    %537 = vector.shape_cast %509 : vector<8x4xf32> to vector<1x8x4xf32>
    %538 = vector.shape_cast %449 : vector<8x4xf32> to vector<1x8x4xf32>
    %539 = vector.shape_cast %389 : vector<8x4xf32> to vector<1x8x4xf32>
    %540 = vector.shape_cast %329 : vector<8x4xf32> to vector<1x8x4xf32>
    %541 = vector.shape_cast %269 : vector<8x4xf32> to vector<1x8x4xf32>
    %542 = vector.shape_cast %209 : vector<8x4xf32> to vector<1x8x4xf32>
    %543 = vector.shape_cast %149 : vector<8x4xf32> to vector<1x8x4xf32>
    %544 = vector.shape_cast %89 : vector<8x4xf32> to vector<1x8x4xf32>
    %545 = tpu.concatenate %537, %538, %539, %540, %541, %542, %543, %544 in 0 : vector<1x8x4xf32>, vector<1x8x4xf32>, vector<1x8x4xf32>, vector<1x8x4xf32>, vector<1x8x4xf32>, vector<1x8x4xf32>, vector<1x8x4xf32>, vector<1x8x4xf32> -> vector<8x8x4xf32>
    %c1_i32 = arith.constant 1 : i32
    %546 = arith.cmpi eq, %arg0, %c1_i32 : i32
    %547 = arith.select %546, %536, %518 : vector<8x8x4xf32>
    %c0_119 = arith.constant 0 : index
    %c0_120 = arith.constant 0 : index
    %c0_121 = arith.constant 0 : index
    %c0_122 = arith.constant 0 : index
    %548 = vector.load %arg15[%c0_119, %c0_120, %c0_121, %c0_122] : memref<1x8x8x4xf32, #tpu.memory_space<vmem>>, vector<1x8x8x4xf32>
    %549 = vector.shape_cast %548 : vector<1x8x8x4xf32> to vector<8x8x4xf32>
    %550 = vector.shape_cast %547 : vector<8x8x4xf32> to vector<1x8x8x4xf32>
    tpu.vector_store %arg15[%c0_119, %c0_120, %c0_121, %c0_122], %550 {strides = array<i32>} : memref<1x8x8x4xf32, #tpu.memory_space<vmem>>, vector<1x8x8x4xf32>,
    %551 = arith.select %546, %545, %527 : vector<8x8x4xf32>
    %c0_123 = arith.constant 0 : index
    %c0_124 = arith.constant 0 : index
    %c0_125 = arith.constant 0 : index
    %c0_126 = arith.constant 0 : index
    %552 = vector.load %arg16[%c0_123, %c0_124, %c0_125, %c0_126] : memref<1x8x8x4xf32, #tpu.memory_space<vmem>>, vector<1x8x8x4xf32>
    %553 = vector.shape_cast %552 : vector<1x8x8x4xf32> to vector<8x8x4xf32>
    %554 = vector.shape_cast %551 : vector<8x8x4xf32> to vector<1x8x8x4xf32>
    tpu.vector_store %arg16[%c0_123, %c0_124, %c0_125, %c0_126], %554 {strides = array<i32>} : memref<1x8x8x4xf32, #tpu.memory_space<vmem>>, vector<1x8x8x4xf32>,
    return
  }
  func.func @transform_0(%arg0: i32) -> (i32, i32, i32, i32) {
    %c0_i32 = arith.constant 0 : i32
    %c0_i32_0 = arith.constant 0 : i32
    %c0_i32_1 = arith.constant 0 : i32
    %c0_i32_2 = arith.constant 0 : i32
    return %arg0, %c0_i32, %c0_i32_0, %c0_i32_1 : i32, i32, i32, i32
  }
  func.func @transform_1(%arg0: i32) -> (i32, i32, i32, i32) {
    %c0_i32 = arith.constant 0 : i32
    %c0_i32_0 = arith.constant 0 : i32
    %c0_i32_1 = arith.constant 0 : i32
    %c0_i32_2 = arith.constant 0 : i32
    return %arg0, %c0_i32, %c0_i32_0, %c0_i32_1 : i32, i32, i32, i32
  }
  func.func @transform_2(%arg0: i32) -> (i32, i32, i32, i32) {
    %c0_i32 = arith.constant 0 : i32
    %c0_i32_0 = arith.constant 0 : i32
    %c0_i32_1 = arith.constant 0 : i32
    %c0_i32_2 = arith.constant 0 : i32
    return %arg0, %c0_i32, %c0_i32_0, %c0_i32_1 : i32, i32, i32, i32
  }
  func.func @transform_3(%arg0: i32) -> (i32, i32, i32) {
    %c0_i32 = arith.constant 0 : i32
    %c0_i32_0 = arith.constant 0 : i32
    %c0_i32_1 = arith.constant 0 : i32
    return %arg0, %c0_i32, %c0_i32_0 : i32, i32, i32
  }
  func.func @transform_4(%arg0: i32) -> (i32, i32, i32) {
    %c0_i32 = arith.constant 0 : i32
    %c0_i32_0 = arith.constant 0 : i32
    %c0_i32_1 = arith.constant 0 : i32
    return %arg0, %c0_i32, %c0_i32_0 : i32, i32, i32
  }
  func.func @transform_5(%arg0: i32) -> (i32, i32, i32) {
    %c0_i32 = arith.constant 0 : i32
    %c0_i32_0 = arith.constant 0 : i32
    %c0_i32_1 = arith.constant 0 : i32
    return %arg0, %c0_i32, %c0_i32_0 : i32, i32, i32
  }
  func.func @transform_6(%arg0: i32) -> (i32, i32, i32) {
    %c0_i32 = arith.constant 0 : i32
    %c0_i32_0 = arith.constant 0 : i32
    %c0_i32_1 = arith.constant 0 : i32
    return %arg0, %c0_i32, %c0_i32_0 : i32, i32, i32
  }
  func.func @transform_7(%arg0: i32) -> (i32, i32, i32) {
    %c0_i32 = arith.constant 0 : i32
    %c0_i32_0 = arith.constant 0 : i32
    %c0_i32_1 = arith.constant 0 : i32
    return %arg0, %c0_i32, %c0_i32_0 : i32, i32, i32
  }
  func.func @transform_8(%arg0: i32) -> (i32, i32, i32) {
    %c0_i32 = arith.constant 0 : i32
    %c0_i32_0 = arith.constant 0 : i32
    %c0_i32_1 = arith.constant 0 : i32
    return %arg0, %c0_i32, %c0_i32_0 : i32, i32, i32
  }
  func.func @transform_9(%arg0: i32) -> (i32, i32, i32) {
    %c0_i32 = arith.constant 0 : i32
    %c0_i32_0 = arith.constant 0 : i32
    %c0_i32_1 = arith.constant 0 : i32
    return %arg0, %c0_i32, %c0_i32_0 : i32, i32, i32
  }
  func.func @transform_10(%arg0: i32) -> (i32, i32, i32) {
    %c0_i32 = arith.constant 0 : i32
    %c0_i32_0 = arith.constant 0 : i32
    %c0_i32_1 = arith.constant 0 : i32
    return %arg0, %c0_i32, %c0_i32_0 : i32, i32, i32
  }
  func.func @transform_11(%arg0: i32) -> (i32, i32, i32) {
    %c0_i32 = arith.constant 0 : i32
    %c0_i32_0 = arith.constant 0 : i32
    %c0_i32_1 = arith.constant 0 : i32
    return %arg0, %c0_i32, %c0_i32_0 : i32, i32, i32
  }
  func.func @transform_12(%arg0: i32) -> (i32, i32, i32) {
    %c0_i32 = arith.constant 0 : i32
    %c0_i32_0 = arith.constant 0 : i32
    %c0_i32_1 = arith.constant 0 : i32
    return %arg0, %c0_i32, %c0_i32_0 : i32, i32, i32
  }
  func.func @transform_13(%arg0: i32) -> (i32, i32, i32) {
    %c0_i32 = arith.constant 0 : i32
    %c0_i32_0 = arith.constant 0 : i32
    %c0_i32_1 = arith.constant 0 : i32
    return %arg0, %c0_i32, %c0_i32_0 : i32, i32, i32
  }
  func.func @transform_14(%arg0: i32) -> (i32, i32, i32, i32) {
    %c0_i32 = arith.constant 0 : i32
    %c0_i32_0 = arith.constant 0 : i32
    %c0_i32_1 = arith.constant 0 : i32
    %c0_i32_2 = arith.constant 0 : i32
    return %arg0, %c0_i32, %c0_i32_0, %c0_i32_1 : i32, i32, i32, i32
  }
  func.func @transform_15(%arg0: i32) -> (i32, i32, i32, i32) {
    %c0_i32 = arith.constant 0 : i32
    %c0_i32_0 = arith.constant 0 : i32
    %c0_i32_1 = arith.constant 0 : i32
    %c0_i32_2 = arith.constant 0 : i32
    return %arg0, %c0_i32, %c0_i32_0, %c0_i32_1 : i32, i32, i32, i32
  }
}

module attributes {stable_mosaic.version = 11 : i64} {
  func.func @disc_loss_kernel(%arg0: memref<8x8x8xf32, #tpu.memory_space<vmem>>, %arg1: memref<8x8x4xf32, #tpu.memory_space<vmem>>, %arg2: memref<8x8x4xf32, #tpu.memory_space<vmem>>, %arg3: memref<8x8x4xf32, #tpu.memory_space<vmem>>, %arg4: memref<8x8x4xf32, #tpu.memory_space<vmem>>, %arg5: memref<8x192xf32, #tpu.memory_space<vmem>>, %arg6: memref<1x192xf32, #tpu.memory_space<vmem>>, %arg7: memref<32x96xf32, #tpu.memory_space<vmem>>, %arg8: memref<1x96xf32, #tpu.memory_space<vmem>>, %arg9: memref<32x96xf32, #tpu.memory_space<vmem>>, %arg10: memref<1x96xf32, #tpu.memory_space<vmem>>, %arg11: memref<64x4xf32, #tpu.memory_space<vmem>>, %arg12: memref<1x4xf32, #tpu.memory_space<vmem>>, %arg13: memref<1xf32, #tpu.memory_space<smem>>) attributes {dimension_semantics = [], scalar_prefetch = 0 : i64, scratch_operands = 0 : i64, tpu.core_type = #tpu.core_type<tc>} {
    %c0 = arith.constant 0 : index
    %c0_0 = arith.constant 0 : index
    %0 = vector.load %arg5[%c0, %c0_0] : memref<8x192xf32, #tpu.memory_space<vmem>>, vector<8x192xf32>
    %c0_1 = arith.constant 0 : index
    %c0_2 = arith.constant 0 : index
    %1 = vector.load %arg6[%c0_1, %c0_2] : memref<1x192xf32, #tpu.memory_space<vmem>>, vector<1x192xf32>
    %c0_3 = arith.constant 0 : index
    %c0_4 = arith.constant 0 : index
    %2 = vector.load %arg7[%c0_3, %c0_4] : memref<32x96xf32, #tpu.memory_space<vmem>>, vector<32x96xf32>
    %c0_5 = arith.constant 0 : index
    %c0_6 = arith.constant 0 : index
    %3 = vector.load %arg9[%c0_5, %c0_6] : memref<32x96xf32, #tpu.memory_space<vmem>>, vector<32x96xf32>
    %c0_7 = arith.constant 0 : index
    %c0_8 = arith.constant 0 : index
    %4 = vector.load %arg8[%c0_7, %c0_8] : memref<1x96xf32, #tpu.memory_space<vmem>>, vector<1x96xf32>
    %5 = vector.shape_cast %4 : vector<1x96xf32> to vector<1x96xf32>
    %6 = vector.broadcast %5 : vector<1x96xf32> to vector<8x96xf32>
    %c0_9 = arith.constant 0 : index
    %c0_10 = arith.constant 0 : index
    %7 = vector.load %arg10[%c0_9, %c0_10] : memref<1x96xf32, #tpu.memory_space<vmem>>, vector<1x96xf32>
    %8 = vector.shape_cast %7 : vector<1x96xf32> to vector<1x96xf32>
    %9 = vector.broadcast %8 : vector<1x96xf32> to vector<8x96xf32>
    %c0_11 = arith.constant 0 : index
    %c0_12 = arith.constant 0 : index
    %10 = vector.load %arg11[%c0_11, %c0_12] : memref<64x4xf32, #tpu.memory_space<vmem>>, vector<64x4xf32>
    %c0_13 = arith.constant 0 : index
    %c0_14 = arith.constant 0 : index
    %11 = vector.load %arg12[%c0_13, %c0_14] : memref<1x4xf32, #tpu.memory_space<vmem>>, vector<1x4xf32>
    %c0_15 = arith.constant 0 : index
    %c0_16 = arith.constant 0 : index
    %c0_17 = arith.constant 0 : index
    %12 = vector.load %arg0[%c0_15, %c0_16, %c0_17] : memref<8x8x8xf32, #tpu.memory_space<vmem>>, vector<8x8x8xf32>
    %13 = vector.shape_cast %12 : vector<8x8x8xf32> to vector<64x8xf32>
    %cst = arith.constant dense<0.000000e+00> : vector<64x192xf32>
    %14 = tpu.matmul %13, %0, %cst {dimension_numbers = #tpu.dot_dimension_numbers<[1], [0], [0], [1], [0, 0, 1, 1], [], []>} : vector<64x8xf32>, vector<8x192xf32>, vector<64x192xf32> -> vector<64x192xf32>
    %15 = vector.broadcast %1 : vector<1x192xf32> to vector<64x192xf32>
    %16 = arith.addf %14, %15 : vector<64x192xf32>
    %17 = vector.extract_strided_slice %16 {offsets = [0, 0], sizes = [64, 96], strides = [1, 1]} : vector<64x192xf32> to vector<64x96xf32>
    %18 = vector.shape_cast %17 : vector<64x96xf32> to vector<8x8x96xf32>
    %19 = vector.extract_strided_slice %16 {offsets = [0, 96], sizes = [64, 96], strides = [1, 1]} : vector<64x192xf32> to vector<64x96xf32>
    %20 = vector.shape_cast %19 : vector<64x96xf32> to vector<8x8x96xf32>
    %cst_18 = arith.constant 0.000000e+00 : f32
    %21 = vector.broadcast %cst_18 : f32 to vector<8x32xf32>
    %22 = vector.extract_strided_slice %18 {offsets = [0, 0, 0], sizes = [1, 8, 96], strides = [1, 1, 1]} : vector<8x8x96xf32> to vector<1x8x96xf32>
    %23 = vector.shape_cast %22 : vector<1x8x96xf32> to vector<8x96xf32>
    %cst_19 = arith.constant dense<0.000000e+00> : vector<8x96xf32>
    %24 = tpu.matmul %21, %2, %cst_19 {dimension_numbers = #tpu.dot_dimension_numbers<[1], [0], [0], [1], [0, 0, 1, 1], [], []>} : vector<8x32xf32>, vector<32x96xf32>, vector<8x96xf32> -> vector<8x96xf32>
    %25 = arith.addf %24, %6 : vector<8x96xf32>
    %26 = vector.extract_strided_slice %23 {offsets = [0, 0], sizes = [8, 32], strides = [1, 1]} : vector<8x96xf32> to vector<8x32xf32>
    %27 = vector.extract_strided_slice %25 {offsets = [0, 0], sizes = [8, 32], strides = [1, 1]} : vector<8x96xf32> to vector<8x32xf32>
    %28 = arith.addf %26, %27 : vector<8x32xf32>
    %29 = arith.negf %28 : vector<8x32xf32>
    %30 = math.exp %29 : vector<8x32xf32>
    %cst_20 = arith.constant 1.000000e+00 : f32
    %31 = vector.broadcast %cst_20 : f32 to vector<8x32xf32>
    %32 = arith.addf %31, %30 : vector<8x32xf32>
    %33 = arith.divf %31, %32 : vector<8x32xf32>
    %34 = vector.extract_strided_slice %23 {offsets = [0, 32], sizes = [8, 32], strides = [1, 1]} : vector<8x96xf32> to vector<8x32xf32>
    %35 = vector.extract_strided_slice %25 {offsets = [0, 32], sizes = [8, 32], strides = [1, 1]} : vector<8x96xf32> to vector<8x32xf32>
    %36 = arith.addf %34, %35 : vector<8x32xf32>
    %37 = arith.negf %36 : vector<8x32xf32>
    %38 = math.exp %37 : vector<8x32xf32>
    %cst_21 = arith.constant 1.000000e+00 : f32
    %39 = vector.broadcast %cst_21 : f32 to vector<8x32xf32>
    %40 = arith.addf %39, %38 : vector<8x32xf32>
    %41 = arith.divf %39, %40 : vector<8x32xf32>
    %42 = vector.extract_strided_slice %23 {offsets = [0, 64], sizes = [8, 32], strides = [1, 1]} : vector<8x96xf32> to vector<8x32xf32>
    %43 = vector.extract_strided_slice %25 {offsets = [0, 64], sizes = [8, 32], strides = [1, 1]} : vector<8x96xf32> to vector<8x32xf32>
    %44 = arith.mulf %33, %43 : vector<8x32xf32>
    %45 = arith.addf %42, %44 : vector<8x32xf32>
    %46 = math.tanh %45 : vector<8x32xf32>
    %cst_22 = arith.constant 1.000000e+00 : f32
    %47 = vector.broadcast %cst_22 : f32 to vector<8x32xf32>
    %48 = arith.subf %47, %41 : vector<8x32xf32>
    %49 = arith.mulf %48, %46 : vector<8x32xf32>
    %50 = arith.mulf %41, %21 : vector<8x32xf32>
    %51 = arith.addf %49, %50 : vector<8x32xf32>
    %52 = vector.extract_strided_slice %18 {offsets = [1, 0, 0], sizes = [1, 8, 96], strides = [1, 1, 1]} : vector<8x8x96xf32> to vector<1x8x96xf32>
    %53 = vector.shape_cast %52 : vector<1x8x96xf32> to vector<8x96xf32>
    %cst_23 = arith.constant dense<0.000000e+00> : vector<8x96xf32>
    %54 = tpu.matmul %51, %2, %cst_23 {dimension_numbers = #tpu.dot_dimension_numbers<[1], [0], [0], [1], [0, 0, 1, 1], [], []>} : vector<8x32xf32>, vector<32x96xf32>, vector<8x96xf32> -> vector<8x96xf32>
    %55 = arith.addf %54, %6 : vector<8x96xf32>
    %56 = vector.extract_strided_slice %53 {offsets = [0, 0], sizes = [8, 32], strides = [1, 1]} : vector<8x96xf32> to vector<8x32xf32>
    %57 = vector.extract_strided_slice %55 {offsets = [0, 0], sizes = [8, 32], strides = [1, 1]} : vector<8x96xf32> to vector<8x32xf32>
    %58 = arith.addf %56, %57 : vector<8x32xf32>
    %59 = arith.negf %58 : vector<8x32xf32>
    %60 = math.exp %59 : vector<8x32xf32>
    %cst_24 = arith.constant 1.000000e+00 : f32
    %61 = vector.broadcast %cst_24 : f32 to vector<8x32xf32>
    %62 = arith.addf %61, %60 : vector<8x32xf32>
    %63 = arith.divf %61, %62 : vector<8x32xf32>
    %64 = vector.extract_strided_slice %53 {offsets = [0, 32], sizes = [8, 32], strides = [1, 1]} : vector<8x96xf32> to vector<8x32xf32>
    %65 = vector.extract_strided_slice %55 {offsets = [0, 32], sizes = [8, 32], strides = [1, 1]} : vector<8x96xf32> to vector<8x32xf32>
    %66 = arith.addf %64, %65 : vector<8x32xf32>
    %67 = arith.negf %66 : vector<8x32xf32>
    %68 = math.exp %67 : vector<8x32xf32>
    %cst_25 = arith.constant 1.000000e+00 : f32
    %69 = vector.broadcast %cst_25 : f32 to vector<8x32xf32>
    %70 = arith.addf %69, %68 : vector<8x32xf32>
    %71 = arith.divf %69, %70 : vector<8x32xf32>
    %72 = vector.extract_strided_slice %53 {offsets = [0, 64], sizes = [8, 32], strides = [1, 1]} : vector<8x96xf32> to vector<8x32xf32>
    %73 = vector.extract_strided_slice %55 {offsets = [0, 64], sizes = [8, 32], strides = [1, 1]} : vector<8x96xf32> to vector<8x32xf32>
    %74 = arith.mulf %63, %73 : vector<8x32xf32>
    %75 = arith.addf %72, %74 : vector<8x32xf32>
    %76 = math.tanh %75 : vector<8x32xf32>
    %cst_26 = arith.constant 1.000000e+00 : f32
    %77 = vector.broadcast %cst_26 : f32 to vector<8x32xf32>
    %78 = arith.subf %77, %71 : vector<8x32xf32>
    %79 = arith.mulf %78, %76 : vector<8x32xf32>
    %80 = arith.mulf %71, %51 : vector<8x32xf32>
    %81 = arith.addf %79, %80 : vector<8x32xf32>
    %82 = vector.extract_strided_slice %18 {offsets = [2, 0, 0], sizes = [1, 8, 96], strides = [1, 1, 1]} : vector<8x8x96xf32> to vector<1x8x96xf32>
    %83 = vector.shape_cast %82 : vector<1x8x96xf32> to vector<8x96xf32>
    %cst_27 = arith.constant dense<0.000000e+00> : vector<8x96xf32>
    %84 = tpu.matmul %81, %2, %cst_27 {dimension_numbers = #tpu.dot_dimension_numbers<[1], [0], [0], [1], [0, 0, 1, 1], [], []>} : vector<8x32xf32>, vector<32x96xf32>, vector<8x96xf32> -> vector<8x96xf32>
    %85 = arith.addf %84, %6 : vector<8x96xf32>
    %86 = vector.extract_strided_slice %83 {offsets = [0, 0], sizes = [8, 32], strides = [1, 1]} : vector<8x96xf32> to vector<8x32xf32>
    %87 = vector.extract_strided_slice %85 {offsets = [0, 0], sizes = [8, 32], strides = [1, 1]} : vector<8x96xf32> to vector<8x32xf32>
    %88 = arith.addf %86, %87 : vector<8x32xf32>
    %89 = arith.negf %88 : vector<8x32xf32>
    %90 = math.exp %89 : vector<8x32xf32>
    %cst_28 = arith.constant 1.000000e+00 : f32
    %91 = vector.broadcast %cst_28 : f32 to vector<8x32xf32>
    %92 = arith.addf %91, %90 : vector<8x32xf32>
    %93 = arith.divf %91, %92 : vector<8x32xf32>
    %94 = vector.extract_strided_slice %83 {offsets = [0, 32], sizes = [8, 32], strides = [1, 1]} : vector<8x96xf32> to vector<8x32xf32>
    %95 = vector.extract_strided_slice %85 {offsets = [0, 32], sizes = [8, 32], strides = [1, 1]} : vector<8x96xf32> to vector<8x32xf32>
    %96 = arith.addf %94, %95 : vector<8x32xf32>
    %97 = arith.negf %96 : vector<8x32xf32>
    %98 = math.exp %97 : vector<8x32xf32>
    %cst_29 = arith.constant 1.000000e+00 : f32
    %99 = vector.broadcast %cst_29 : f32 to vector<8x32xf32>
    %100 = arith.addf %99, %98 : vector<8x32xf32>
    %101 = arith.divf %99, %100 : vector<8x32xf32>
    %102 = vector.extract_strided_slice %83 {offsets = [0, 64], sizes = [8, 32], strides = [1, 1]} : vector<8x96xf32> to vector<8x32xf32>
    %103 = vector.extract_strided_slice %85 {offsets = [0, 64], sizes = [8, 32], strides = [1, 1]} : vector<8x96xf32> to vector<8x32xf32>
    %104 = arith.mulf %93, %103 : vector<8x32xf32>
    %105 = arith.addf %102, %104 : vector<8x32xf32>
    %106 = math.tanh %105 : vector<8x32xf32>
    %cst_30 = arith.constant 1.000000e+00 : f32
    %107 = vector.broadcast %cst_30 : f32 to vector<8x32xf32>
    %108 = arith.subf %107, %101 : vector<8x32xf32>
    %109 = arith.mulf %108, %106 : vector<8x32xf32>
    %110 = arith.mulf %101, %81 : vector<8x32xf32>
    %111 = arith.addf %109, %110 : vector<8x32xf32>
    %112 = vector.extract_strided_slice %18 {offsets = [3, 0, 0], sizes = [1, 8, 96], strides = [1, 1, 1]} : vector<8x8x96xf32> to vector<1x8x96xf32>
    %113 = vector.shape_cast %112 : vector<1x8x96xf32> to vector<8x96xf32>
    %cst_31 = arith.constant dense<0.000000e+00> : vector<8x96xf32>
    %114 = tpu.matmul %111, %2, %cst_31 {dimension_numbers = #tpu.dot_dimension_numbers<[1], [0], [0], [1], [0, 0, 1, 1], [], []>} : vector<8x32xf32>, vector<32x96xf32>, vector<8x96xf32> -> vector<8x96xf32>
    %115 = arith.addf %114, %6 : vector<8x96xf32>
    %116 = vector.extract_strided_slice %113 {offsets = [0, 0], sizes = [8, 32], strides = [1, 1]} : vector<8x96xf32> to vector<8x32xf32>
    %117 = vector.extract_strided_slice %115 {offsets = [0, 0], sizes = [8, 32], strides = [1, 1]} : vector<8x96xf32> to vector<8x32xf32>
    %118 = arith.addf %116, %117 : vector<8x32xf32>
    %119 = arith.negf %118 : vector<8x32xf32>
    %120 = math.exp %119 : vector<8x32xf32>
    %cst_32 = arith.constant 1.000000e+00 : f32
    %121 = vector.broadcast %cst_32 : f32 to vector<8x32xf32>
    %122 = arith.addf %121, %120 : vector<8x32xf32>
    %123 = arith.divf %121, %122 : vector<8x32xf32>
    %124 = vector.extract_strided_slice %113 {offsets = [0, 32], sizes = [8, 32], strides = [1, 1]} : vector<8x96xf32> to vector<8x32xf32>
    %125 = vector.extract_strided_slice %115 {offsets = [0, 32], sizes = [8, 32], strides = [1, 1]} : vector<8x96xf32> to vector<8x32xf32>
    %126 = arith.addf %124, %125 : vector<8x32xf32>
    %127 = arith.negf %126 : vector<8x32xf32>
    %128 = math.exp %127 : vector<8x32xf32>
    %cst_33 = arith.constant 1.000000e+00 : f32
    %129 = vector.broadcast %cst_33 : f32 to vector<8x32xf32>
    %130 = arith.addf %129, %128 : vector<8x32xf32>
    %131 = arith.divf %129, %130 : vector<8x32xf32>
    %132 = vector.extract_strided_slice %113 {offsets = [0, 64], sizes = [8, 32], strides = [1, 1]} : vector<8x96xf32> to vector<8x32xf32>
    %133 = vector.extract_strided_slice %115 {offsets = [0, 64], sizes = [8, 32], strides = [1, 1]} : vector<8x96xf32> to vector<8x32xf32>
    %134 = arith.mulf %123, %133 : vector<8x32xf32>
    %135 = arith.addf %132, %134 : vector<8x32xf32>
    %136 = math.tanh %135 : vector<8x32xf32>
    %cst_34 = arith.constant 1.000000e+00 : f32
    %137 = vector.broadcast %cst_34 : f32 to vector<8x32xf32>
    %138 = arith.subf %137, %131 : vector<8x32xf32>
    %139 = arith.mulf %138, %136 : vector<8x32xf32>
    %140 = arith.mulf %131, %111 : vector<8x32xf32>
    %141 = arith.addf %139, %140 : vector<8x32xf32>
    %142 = vector.extract_strided_slice %18 {offsets = [4, 0, 0], sizes = [1, 8, 96], strides = [1, 1, 1]} : vector<8x8x96xf32> to vector<1x8x96xf32>
    %143 = vector.shape_cast %142 : vector<1x8x96xf32> to vector<8x96xf32>
    %cst_35 = arith.constant dense<0.000000e+00> : vector<8x96xf32>
    %144 = tpu.matmul %141, %2, %cst_35 {dimension_numbers = #tpu.dot_dimension_numbers<[1], [0], [0], [1], [0, 0, 1, 1], [], []>} : vector<8x32xf32>, vector<32x96xf32>, vector<8x96xf32> -> vector<8x96xf32>
    %145 = arith.addf %144, %6 : vector<8x96xf32>
    %146 = vector.extract_strided_slice %143 {offsets = [0, 0], sizes = [8, 32], strides = [1, 1]} : vector<8x96xf32> to vector<8x32xf32>
    %147 = vector.extract_strided_slice %145 {offsets = [0, 0], sizes = [8, 32], strides = [1, 1]} : vector<8x96xf32> to vector<8x32xf32>
    %148 = arith.addf %146, %147 : vector<8x32xf32>
    %149 = arith.negf %148 : vector<8x32xf32>
    %150 = math.exp %149 : vector<8x32xf32>
    %cst_36 = arith.constant 1.000000e+00 : f32
    %151 = vector.broadcast %cst_36 : f32 to vector<8x32xf32>
    %152 = arith.addf %151, %150 : vector<8x32xf32>
    %153 = arith.divf %151, %152 : vector<8x32xf32>
    %154 = vector.extract_strided_slice %143 {offsets = [0, 32], sizes = [8, 32], strides = [1, 1]} : vector<8x96xf32> to vector<8x32xf32>
    %155 = vector.extract_strided_slice %145 {offsets = [0, 32], sizes = [8, 32], strides = [1, 1]} : vector<8x96xf32> to vector<8x32xf32>
    %156 = arith.addf %154, %155 : vector<8x32xf32>
    %157 = arith.negf %156 : vector<8x32xf32>
    %158 = math.exp %157 : vector<8x32xf32>
    %cst_37 = arith.constant 1.000000e+00 : f32
    %159 = vector.broadcast %cst_37 : f32 to vector<8x32xf32>
    %160 = arith.addf %159, %158 : vector<8x32xf32>
    %161 = arith.divf %159, %160 : vector<8x32xf32>
    %162 = vector.extract_strided_slice %143 {offsets = [0, 64], sizes = [8, 32], strides = [1, 1]} : vector<8x96xf32> to vector<8x32xf32>
    %163 = vector.extract_strided_slice %145 {offsets = [0, 64], sizes = [8, 32], strides = [1, 1]} : vector<8x96xf32> to vector<8x32xf32>
    %164 = arith.mulf %153, %163 : vector<8x32xf32>
    %165 = arith.addf %162, %164 : vector<8x32xf32>
    %166 = math.tanh %165 : vector<8x32xf32>
    %cst_38 = arith.constant 1.000000e+00 : f32
    %167 = vector.broadcast %cst_38 : f32 to vector<8x32xf32>
    %168 = arith.subf %167, %161 : vector<8x32xf32>
    %169 = arith.mulf %168, %166 : vector<8x32xf32>
    %170 = arith.mulf %161, %141 : vector<8x32xf32>
    %171 = arith.addf %169, %170 : vector<8x32xf32>
    %172 = vector.extract_strided_slice %18 {offsets = [5, 0, 0], sizes = [1, 8, 96], strides = [1, 1, 1]} : vector<8x8x96xf32> to vector<1x8x96xf32>
    %173 = vector.shape_cast %172 : vector<1x8x96xf32> to vector<8x96xf32>
    %cst_39 = arith.constant dense<0.000000e+00> : vector<8x96xf32>
    %174 = tpu.matmul %171, %2, %cst_39 {dimension_numbers = #tpu.dot_dimension_numbers<[1], [0], [0], [1], [0, 0, 1, 1], [], []>} : vector<8x32xf32>, vector<32x96xf32>, vector<8x96xf32> -> vector<8x96xf32>
    %175 = arith.addf %174, %6 : vector<8x96xf32>
    %176 = vector.extract_strided_slice %173 {offsets = [0, 0], sizes = [8, 32], strides = [1, 1]} : vector<8x96xf32> to vector<8x32xf32>
    %177 = vector.extract_strided_slice %175 {offsets = [0, 0], sizes = [8, 32], strides = [1, 1]} : vector<8x96xf32> to vector<8x32xf32>
    %178 = arith.addf %176, %177 : vector<8x32xf32>
    %179 = arith.negf %178 : vector<8x32xf32>
    %180 = math.exp %179 : vector<8x32xf32>
    %cst_40 = arith.constant 1.000000e+00 : f32
    %181 = vector.broadcast %cst_40 : f32 to vector<8x32xf32>
    %182 = arith.addf %181, %180 : vector<8x32xf32>
    %183 = arith.divf %181, %182 : vector<8x32xf32>
    %184 = vector.extract_strided_slice %173 {offsets = [0, 32], sizes = [8, 32], strides = [1, 1]} : vector<8x96xf32> to vector<8x32xf32>
    %185 = vector.extract_strided_slice %175 {offsets = [0, 32], sizes = [8, 32], strides = [1, 1]} : vector<8x96xf32> to vector<8x32xf32>
    %186 = arith.addf %184, %185 : vector<8x32xf32>
    %187 = arith.negf %186 : vector<8x32xf32>
    %188 = math.exp %187 : vector<8x32xf32>
    %cst_41 = arith.constant 1.000000e+00 : f32
    %189 = vector.broadcast %cst_41 : f32 to vector<8x32xf32>
    %190 = arith.addf %189, %188 : vector<8x32xf32>
    %191 = arith.divf %189, %190 : vector<8x32xf32>
    %192 = vector.extract_strided_slice %173 {offsets = [0, 64], sizes = [8, 32], strides = [1, 1]} : vector<8x96xf32> to vector<8x32xf32>
    %193 = vector.extract_strided_slice %175 {offsets = [0, 64], sizes = [8, 32], strides = [1, 1]} : vector<8x96xf32> to vector<8x32xf32>
    %194 = arith.mulf %183, %193 : vector<8x32xf32>
    %195 = arith.addf %192, %194 : vector<8x32xf32>
    %196 = math.tanh %195 : vector<8x32xf32>
    %cst_42 = arith.constant 1.000000e+00 : f32
    %197 = vector.broadcast %cst_42 : f32 to vector<8x32xf32>
    %198 = arith.subf %197, %191 : vector<8x32xf32>
    %199 = arith.mulf %198, %196 : vector<8x32xf32>
    %200 = arith.mulf %191, %171 : vector<8x32xf32>
    %201 = arith.addf %199, %200 : vector<8x32xf32>
    %202 = vector.extract_strided_slice %18 {offsets = [6, 0, 0], sizes = [1, 8, 96], strides = [1, 1, 1]} : vector<8x8x96xf32> to vector<1x8x96xf32>
    %203 = vector.shape_cast %202 : vector<1x8x96xf32> to vector<8x96xf32>
    %cst_43 = arith.constant dense<0.000000e+00> : vector<8x96xf32>
    %204 = tpu.matmul %201, %2, %cst_43 {dimension_numbers = #tpu.dot_dimension_numbers<[1], [0], [0], [1], [0, 0, 1, 1], [], []>} : vector<8x32xf32>, vector<32x96xf32>, vector<8x96xf32> -> vector<8x96xf32>
    %205 = arith.addf %204, %6 : vector<8x96xf32>
    %206 = vector.extract_strided_slice %203 {offsets = [0, 0], sizes = [8, 32], strides = [1, 1]} : vector<8x96xf32> to vector<8x32xf32>
    %207 = vector.extract_strided_slice %205 {offsets = [0, 0], sizes = [8, 32], strides = [1, 1]} : vector<8x96xf32> to vector<8x32xf32>
    %208 = arith.addf %206, %207 : vector<8x32xf32>
    %209 = arith.negf %208 : vector<8x32xf32>
    %210 = math.exp %209 : vector<8x32xf32>
    %cst_44 = arith.constant 1.000000e+00 : f32
    %211 = vector.broadcast %cst_44 : f32 to vector<8x32xf32>
    %212 = arith.addf %211, %210 : vector<8x32xf32>
    %213 = arith.divf %211, %212 : vector<8x32xf32>
    %214 = vector.extract_strided_slice %203 {offsets = [0, 32], sizes = [8, 32], strides = [1, 1]} : vector<8x96xf32> to vector<8x32xf32>
    %215 = vector.extract_strided_slice %205 {offsets = [0, 32], sizes = [8, 32], strides = [1, 1]} : vector<8x96xf32> to vector<8x32xf32>
    %216 = arith.addf %214, %215 : vector<8x32xf32>
    %217 = arith.negf %216 : vector<8x32xf32>
    %218 = math.exp %217 : vector<8x32xf32>
    %cst_45 = arith.constant 1.000000e+00 : f32
    %219 = vector.broadcast %cst_45 : f32 to vector<8x32xf32>
    %220 = arith.addf %219, %218 : vector<8x32xf32>
    %221 = arith.divf %219, %220 : vector<8x32xf32>
    %222 = vector.extract_strided_slice %203 {offsets = [0, 64], sizes = [8, 32], strides = [1, 1]} : vector<8x96xf32> to vector<8x32xf32>
    %223 = vector.extract_strided_slice %205 {offsets = [0, 64], sizes = [8, 32], strides = [1, 1]} : vector<8x96xf32> to vector<8x32xf32>
    %224 = arith.mulf %213, %223 : vector<8x32xf32>
    %225 = arith.addf %222, %224 : vector<8x32xf32>
    %226 = math.tanh %225 : vector<8x32xf32>
    %cst_46 = arith.constant 1.000000e+00 : f32
    %227 = vector.broadcast %cst_46 : f32 to vector<8x32xf32>
    %228 = arith.subf %227, %221 : vector<8x32xf32>
    %229 = arith.mulf %228, %226 : vector<8x32xf32>
    %230 = arith.mulf %221, %201 : vector<8x32xf32>
    %231 = arith.addf %229, %230 : vector<8x32xf32>
    %232 = vector.extract_strided_slice %18 {offsets = [7, 0, 0], sizes = [1, 8, 96], strides = [1, 1, 1]} : vector<8x8x96xf32> to vector<1x8x96xf32>
    %233 = vector.shape_cast %232 : vector<1x8x96xf32> to vector<8x96xf32>
    %cst_47 = arith.constant dense<0.000000e+00> : vector<8x96xf32>
    %234 = tpu.matmul %231, %2, %cst_47 {dimension_numbers = #tpu.dot_dimension_numbers<[1], [0], [0], [1], [0, 0, 1, 1], [], []>} : vector<8x32xf32>, vector<32x96xf32>, vector<8x96xf32> -> vector<8x96xf32>
    %235 = arith.addf %234, %6 : vector<8x96xf32>
    %236 = vector.extract_strided_slice %233 {offsets = [0, 0], sizes = [8, 32], strides = [1, 1]} : vector<8x96xf32> to vector<8x32xf32>
    %237 = vector.extract_strided_slice %235 {offsets = [0, 0], sizes = [8, 32], strides = [1, 1]} : vector<8x96xf32> to vector<8x32xf32>
    %238 = arith.addf %236, %237 : vector<8x32xf32>
    %239 = arith.negf %238 : vector<8x32xf32>
    %240 = math.exp %239 : vector<8x32xf32>
    %cst_48 = arith.constant 1.000000e+00 : f32
    %241 = vector.broadcast %cst_48 : f32 to vector<8x32xf32>
    %242 = arith.addf %241, %240 : vector<8x32xf32>
    %243 = arith.divf %241, %242 : vector<8x32xf32>
    %244 = vector.extract_strided_slice %233 {offsets = [0, 32], sizes = [8, 32], strides = [1, 1]} : vector<8x96xf32> to vector<8x32xf32>
    %245 = vector.extract_strided_slice %235 {offsets = [0, 32], sizes = [8, 32], strides = [1, 1]} : vector<8x96xf32> to vector<8x32xf32>
    %246 = arith.addf %244, %245 : vector<8x32xf32>
    %247 = arith.negf %246 : vector<8x32xf32>
    %248 = math.exp %247 : vector<8x32xf32>
    %cst_49 = arith.constant 1.000000e+00 : f32
    %249 = vector.broadcast %cst_49 : f32 to vector<8x32xf32>
    %250 = arith.addf %249, %248 : vector<8x32xf32>
    %251 = arith.divf %249, %250 : vector<8x32xf32>
    %252 = vector.extract_strided_slice %233 {offsets = [0, 64], sizes = [8, 32], strides = [1, 1]} : vector<8x96xf32> to vector<8x32xf32>
    %253 = vector.extract_strided_slice %235 {offsets = [0, 64], sizes = [8, 32], strides = [1, 1]} : vector<8x96xf32> to vector<8x32xf32>
    %254 = arith.mulf %243, %253 : vector<8x32xf32>
    %255 = arith.addf %252, %254 : vector<8x32xf32>
    %256 = math.tanh %255 : vector<8x32xf32>
    %cst_50 = arith.constant 1.000000e+00 : f32
    %257 = vector.broadcast %cst_50 : f32 to vector<8x32xf32>
    %258 = arith.subf %257, %251 : vector<8x32xf32>
    %259 = arith.mulf %258, %256 : vector<8x32xf32>
    %260 = arith.mulf %251, %231 : vector<8x32xf32>
    %261 = arith.addf %259, %260 : vector<8x32xf32>
    %cst_51 = arith.constant 0.000000e+00 : f32
    %262 = vector.broadcast %cst_51 : f32 to vector<8x32xf32>
    %263 = vector.extract_strided_slice %20 {offsets = [7, 0, 0], sizes = [1, 8, 96], strides = [1, 1, 1]} : vector<8x8x96xf32> to vector<1x8x96xf32>
    %264 = vector.shape_cast %263 : vector<1x8x96xf32> to vector<8x96xf32>
    %cst_52 = arith.constant dense<0.000000e+00> : vector<8x96xf32>
    %265 = tpu.matmul %262, %3, %cst_52 {dimension_numbers = #tpu.dot_dimension_numbers<[1], [0], [0], [1], [0, 0, 1, 1], [], []>} : vector<8x32xf32>, vector<32x96xf32>, vector<8x96xf32> -> vector<8x96xf32>
    %266 = arith.addf %265, %9 : vector<8x96xf32>
    %267 = vector.extract_strided_slice %264 {offsets = [0, 0], sizes = [8, 32], strides = [1, 1]} : vector<8x96xf32> to vector<8x32xf32>
    %268 = vector.extract_strided_slice %266 {offsets = [0, 0], sizes = [8, 32], strides = [1, 1]} : vector<8x96xf32> to vector<8x32xf32>
    %269 = arith.addf %267, %268 : vector<8x32xf32>
    %270 = arith.negf %269 : vector<8x32xf32>
    %271 = math.exp %270 : vector<8x32xf32>
    %cst_53 = arith.constant 1.000000e+00 : f32
    %272 = vector.broadcast %cst_53 : f32 to vector<8x32xf32>
    %273 = arith.addf %272, %271 : vector<8x32xf32>
    %274 = arith.divf %272, %273 : vector<8x32xf32>
    %275 = vector.extract_strided_slice %264 {offsets = [0, 32], sizes = [8, 32], strides = [1, 1]} : vector<8x96xf32> to vector<8x32xf32>
    %276 = vector.extract_strided_slice %266 {offsets = [0, 32], sizes = [8, 32], strides = [1, 1]} : vector<8x96xf32> to vector<8x32xf32>
    %277 = arith.addf %275, %276 : vector<8x32xf32>
    %278 = arith.negf %277 : vector<8x32xf32>
    %279 = math.exp %278 : vector<8x32xf32>
    %cst_54 = arith.constant 1.000000e+00 : f32
    %280 = vector.broadcast %cst_54 : f32 to vector<8x32xf32>
    %281 = arith.addf %280, %279 : vector<8x32xf32>
    %282 = arith.divf %280, %281 : vector<8x32xf32>
    %283 = vector.extract_strided_slice %264 {offsets = [0, 64], sizes = [8, 32], strides = [1, 1]} : vector<8x96xf32> to vector<8x32xf32>
    %284 = vector.extract_strided_slice %266 {offsets = [0, 64], sizes = [8, 32], strides = [1, 1]} : vector<8x96xf32> to vector<8x32xf32>
    %285 = arith.mulf %274, %284 : vector<8x32xf32>
    %286 = arith.addf %283, %285 : vector<8x32xf32>
    %287 = math.tanh %286 : vector<8x32xf32>
    %cst_55 = arith.constant 1.000000e+00 : f32
    %288 = vector.broadcast %cst_55 : f32 to vector<8x32xf32>
    %289 = arith.subf %288, %282 : vector<8x32xf32>
    %290 = arith.mulf %289, %287 : vector<8x32xf32>
    %291 = arith.mulf %282, %262 : vector<8x32xf32>
    %292 = arith.addf %290, %291 : vector<8x32xf32>
    %293 = vector.extract_strided_slice %20 {offsets = [6, 0, 0], sizes = [1, 8, 96], strides = [1, 1, 1]} : vector<8x8x96xf32> to vector<1x8x96xf32>
    %294 = vector.shape_cast %293 : vector<1x8x96xf32> to vector<8x96xf32>
    %cst_56 = arith.constant dense<0.000000e+00> : vector<8x96xf32>
    %295 = tpu.matmul %292, %3, %cst_56 {dimension_numbers = #tpu.dot_dimension_numbers<[1], [0], [0], [1], [0, 0, 1, 1], [], []>} : vector<8x32xf32>, vector<32x96xf32>, vector<8x96xf32> -> vector<8x96xf32>
    %296 = arith.addf %295, %9 : vector<8x96xf32>
    %297 = vector.extract_strided_slice %294 {offsets = [0, 0], sizes = [8, 32], strides = [1, 1]} : vector<8x96xf32> to vector<8x32xf32>
    %298 = vector.extract_strided_slice %296 {offsets = [0, 0], sizes = [8, 32], strides = [1, 1]} : vector<8x96xf32> to vector<8x32xf32>
    %299 = arith.addf %297, %298 : vector<8x32xf32>
    %300 = arith.negf %299 : vector<8x32xf32>
    %301 = math.exp %300 : vector<8x32xf32>
    %cst_57 = arith.constant 1.000000e+00 : f32
    %302 = vector.broadcast %cst_57 : f32 to vector<8x32xf32>
    %303 = arith.addf %302, %301 : vector<8x32xf32>
    %304 = arith.divf %302, %303 : vector<8x32xf32>
    %305 = vector.extract_strided_slice %294 {offsets = [0, 32], sizes = [8, 32], strides = [1, 1]} : vector<8x96xf32> to vector<8x32xf32>
    %306 = vector.extract_strided_slice %296 {offsets = [0, 32], sizes = [8, 32], strides = [1, 1]} : vector<8x96xf32> to vector<8x32xf32>
    %307 = arith.addf %305, %306 : vector<8x32xf32>
    %308 = arith.negf %307 : vector<8x32xf32>
    %309 = math.exp %308 : vector<8x32xf32>
    %cst_58 = arith.constant 1.000000e+00 : f32
    %310 = vector.broadcast %cst_58 : f32 to vector<8x32xf32>
    %311 = arith.addf %310, %309 : vector<8x32xf32>
    %312 = arith.divf %310, %311 : vector<8x32xf32>
    %313 = vector.extract_strided_slice %294 {offsets = [0, 64], sizes = [8, 32], strides = [1, 1]} : vector<8x96xf32> to vector<8x32xf32>
    %314 = vector.extract_strided_slice %296 {offsets = [0, 64], sizes = [8, 32], strides = [1, 1]} : vector<8x96xf32> to vector<8x32xf32>
    %315 = arith.mulf %304, %314 : vector<8x32xf32>
    %316 = arith.addf %313, %315 : vector<8x32xf32>
    %317 = math.tanh %316 : vector<8x32xf32>
    %cst_59 = arith.constant 1.000000e+00 : f32
    %318 = vector.broadcast %cst_59 : f32 to vector<8x32xf32>
    %319 = arith.subf %318, %312 : vector<8x32xf32>
    %320 = arith.mulf %319, %317 : vector<8x32xf32>
    %321 = arith.mulf %312, %292 : vector<8x32xf32>
    %322 = arith.addf %320, %321 : vector<8x32xf32>
    %323 = vector.extract_strided_slice %20 {offsets = [5, 0, 0], sizes = [1, 8, 96], strides = [1, 1, 1]} : vector<8x8x96xf32> to vector<1x8x96xf32>
    %324 = vector.shape_cast %323 : vector<1x8x96xf32> to vector<8x96xf32>
    %cst_60 = arith.constant dense<0.000000e+00> : vector<8x96xf32>
    %325 = tpu.matmul %322, %3, %cst_60 {dimension_numbers = #tpu.dot_dimension_numbers<[1], [0], [0], [1], [0, 0, 1, 1], [], []>} : vector<8x32xf32>, vector<32x96xf32>, vector<8x96xf32> -> vector<8x96xf32>
    %326 = arith.addf %325, %9 : vector<8x96xf32>
    %327 = vector.extract_strided_slice %324 {offsets = [0, 0], sizes = [8, 32], strides = [1, 1]} : vector<8x96xf32> to vector<8x32xf32>
    %328 = vector.extract_strided_slice %326 {offsets = [0, 0], sizes = [8, 32], strides = [1, 1]} : vector<8x96xf32> to vector<8x32xf32>
    %329 = arith.addf %327, %328 : vector<8x32xf32>
    %330 = arith.negf %329 : vector<8x32xf32>
    %331 = math.exp %330 : vector<8x32xf32>
    %cst_61 = arith.constant 1.000000e+00 : f32
    %332 = vector.broadcast %cst_61 : f32 to vector<8x32xf32>
    %333 = arith.addf %332, %331 : vector<8x32xf32>
    %334 = arith.divf %332, %333 : vector<8x32xf32>
    %335 = vector.extract_strided_slice %324 {offsets = [0, 32], sizes = [8, 32], strides = [1, 1]} : vector<8x96xf32> to vector<8x32xf32>
    %336 = vector.extract_strided_slice %326 {offsets = [0, 32], sizes = [8, 32], strides = [1, 1]} : vector<8x96xf32> to vector<8x32xf32>
    %337 = arith.addf %335, %336 : vector<8x32xf32>
    %338 = arith.negf %337 : vector<8x32xf32>
    %339 = math.exp %338 : vector<8x32xf32>
    %cst_62 = arith.constant 1.000000e+00 : f32
    %340 = vector.broadcast %cst_62 : f32 to vector<8x32xf32>
    %341 = arith.addf %340, %339 : vector<8x32xf32>
    %342 = arith.divf %340, %341 : vector<8x32xf32>
    %343 = vector.extract_strided_slice %324 {offsets = [0, 64], sizes = [8, 32], strides = [1, 1]} : vector<8x96xf32> to vector<8x32xf32>
    %344 = vector.extract_strided_slice %326 {offsets = [0, 64], sizes = [8, 32], strides = [1, 1]} : vector<8x96xf32> to vector<8x32xf32>
    %345 = arith.mulf %334, %344 : vector<8x32xf32>
    %346 = arith.addf %343, %345 : vector<8x32xf32>
    %347 = math.tanh %346 : vector<8x32xf32>
    %cst_63 = arith.constant 1.000000e+00 : f32
    %348 = vector.broadcast %cst_63 : f32 to vector<8x32xf32>
    %349 = arith.subf %348, %342 : vector<8x32xf32>
    %350 = arith.mulf %349, %347 : vector<8x32xf32>
    %351 = arith.mulf %342, %322 : vector<8x32xf32>
    %352 = arith.addf %350, %351 : vector<8x32xf32>
    %353 = vector.extract_strided_slice %20 {offsets = [4, 0, 0], sizes = [1, 8, 96], strides = [1, 1, 1]} : vector<8x8x96xf32> to vector<1x8x96xf32>
    %354 = vector.shape_cast %353 : vector<1x8x96xf32> to vector<8x96xf32>
    %cst_64 = arith.constant dense<0.000000e+00> : vector<8x96xf32>
    %355 = tpu.matmul %352, %3, %cst_64 {dimension_numbers = #tpu.dot_dimension_numbers<[1], [0], [0], [1], [0, 0, 1, 1], [], []>} : vector<8x32xf32>, vector<32x96xf32>, vector<8x96xf32> -> vector<8x96xf32>
    %356 = arith.addf %355, %9 : vector<8x96xf32>
    %357 = vector.extract_strided_slice %354 {offsets = [0, 0], sizes = [8, 32], strides = [1, 1]} : vector<8x96xf32> to vector<8x32xf32>
    %358 = vector.extract_strided_slice %356 {offsets = [0, 0], sizes = [8, 32], strides = [1, 1]} : vector<8x96xf32> to vector<8x32xf32>
    %359 = arith.addf %357, %358 : vector<8x32xf32>
    %360 = arith.negf %359 : vector<8x32xf32>
    %361 = math.exp %360 : vector<8x32xf32>
    %cst_65 = arith.constant 1.000000e+00 : f32
    %362 = vector.broadcast %cst_65 : f32 to vector<8x32xf32>
    %363 = arith.addf %362, %361 : vector<8x32xf32>
    %364 = arith.divf %362, %363 : vector<8x32xf32>
    %365 = vector.extract_strided_slice %354 {offsets = [0, 32], sizes = [8, 32], strides = [1, 1]} : vector<8x96xf32> to vector<8x32xf32>
    %366 = vector.extract_strided_slice %356 {offsets = [0, 32], sizes = [8, 32], strides = [1, 1]} : vector<8x96xf32> to vector<8x32xf32>
    %367 = arith.addf %365, %366 : vector<8x32xf32>
    %368 = arith.negf %367 : vector<8x32xf32>
    %369 = math.exp %368 : vector<8x32xf32>
    %cst_66 = arith.constant 1.000000e+00 : f32
    %370 = vector.broadcast %cst_66 : f32 to vector<8x32xf32>
    %371 = arith.addf %370, %369 : vector<8x32xf32>
    %372 = arith.divf %370, %371 : vector<8x32xf32>
    %373 = vector.extract_strided_slice %354 {offsets = [0, 64], sizes = [8, 32], strides = [1, 1]} : vector<8x96xf32> to vector<8x32xf32>
    %374 = vector.extract_strided_slice %356 {offsets = [0, 64], sizes = [8, 32], strides = [1, 1]} : vector<8x96xf32> to vector<8x32xf32>
    %375 = arith.mulf %364, %374 : vector<8x32xf32>
    %376 = arith.addf %373, %375 : vector<8x32xf32>
    %377 = math.tanh %376 : vector<8x32xf32>
    %cst_67 = arith.constant 1.000000e+00 : f32
    %378 = vector.broadcast %cst_67 : f32 to vector<8x32xf32>
    %379 = arith.subf %378, %372 : vector<8x32xf32>
    %380 = arith.mulf %379, %377 : vector<8x32xf32>
    %381 = arith.mulf %372, %352 : vector<8x32xf32>
    %382 = arith.addf %380, %381 : vector<8x32xf32>
    %383 = vector.extract_strided_slice %20 {offsets = [3, 0, 0], sizes = [1, 8, 96], strides = [1, 1, 1]} : vector<8x8x96xf32> to vector<1x8x96xf32>
    %384 = vector.shape_cast %383 : vector<1x8x96xf32> to vector<8x96xf32>
    %cst_68 = arith.constant dense<0.000000e+00> : vector<8x96xf32>
    %385 = tpu.matmul %382, %3, %cst_68 {dimension_numbers = #tpu.dot_dimension_numbers<[1], [0], [0], [1], [0, 0, 1, 1], [], []>} : vector<8x32xf32>, vector<32x96xf32>, vector<8x96xf32> -> vector<8x96xf32>
    %386 = arith.addf %385, %9 : vector<8x96xf32>
    %387 = vector.extract_strided_slice %384 {offsets = [0, 0], sizes = [8, 32], strides = [1, 1]} : vector<8x96xf32> to vector<8x32xf32>
    %388 = vector.extract_strided_slice %386 {offsets = [0, 0], sizes = [8, 32], strides = [1, 1]} : vector<8x96xf32> to vector<8x32xf32>
    %389 = arith.addf %387, %388 : vector<8x32xf32>
    %390 = arith.negf %389 : vector<8x32xf32>
    %391 = math.exp %390 : vector<8x32xf32>
    %cst_69 = arith.constant 1.000000e+00 : f32
    %392 = vector.broadcast %cst_69 : f32 to vector<8x32xf32>
    %393 = arith.addf %392, %391 : vector<8x32xf32>
    %394 = arith.divf %392, %393 : vector<8x32xf32>
    %395 = vector.extract_strided_slice %384 {offsets = [0, 32], sizes = [8, 32], strides = [1, 1]} : vector<8x96xf32> to vector<8x32xf32>
    %396 = vector.extract_strided_slice %386 {offsets = [0, 32], sizes = [8, 32], strides = [1, 1]} : vector<8x96xf32> to vector<8x32xf32>
    %397 = arith.addf %395, %396 : vector<8x32xf32>
    %398 = arith.negf %397 : vector<8x32xf32>
    %399 = math.exp %398 : vector<8x32xf32>
    %cst_70 = arith.constant 1.000000e+00 : f32
    %400 = vector.broadcast %cst_70 : f32 to vector<8x32xf32>
    %401 = arith.addf %400, %399 : vector<8x32xf32>
    %402 = arith.divf %400, %401 : vector<8x32xf32>
    %403 = vector.extract_strided_slice %384 {offsets = [0, 64], sizes = [8, 32], strides = [1, 1]} : vector<8x96xf32> to vector<8x32xf32>
    %404 = vector.extract_strided_slice %386 {offsets = [0, 64], sizes = [8, 32], strides = [1, 1]} : vector<8x96xf32> to vector<8x32xf32>
    %405 = arith.mulf %394, %404 : vector<8x32xf32>
    %406 = arith.addf %403, %405 : vector<8x32xf32>
    %407 = math.tanh %406 : vector<8x32xf32>
    %cst_71 = arith.constant 1.000000e+00 : f32
    %408 = vector.broadcast %cst_71 : f32 to vector<8x32xf32>
    %409 = arith.subf %408, %402 : vector<8x32xf32>
    %410 = arith.mulf %409, %407 : vector<8x32xf32>
    %411 = arith.mulf %402, %382 : vector<8x32xf32>
    %412 = arith.addf %410, %411 : vector<8x32xf32>
    %413 = vector.extract_strided_slice %20 {offsets = [2, 0, 0], sizes = [1, 8, 96], strides = [1, 1, 1]} : vector<8x8x96xf32> to vector<1x8x96xf32>
    %414 = vector.shape_cast %413 : vector<1x8x96xf32> to vector<8x96xf32>
    %cst_72 = arith.constant dense<0.000000e+00> : vector<8x96xf32>
    %415 = tpu.matmul %412, %3, %cst_72 {dimension_numbers = #tpu.dot_dimension_numbers<[1], [0], [0], [1], [0, 0, 1, 1], [], []>} : vector<8x32xf32>, vector<32x96xf32>, vector<8x96xf32> -> vector<8x96xf32>
    %416 = arith.addf %415, %9 : vector<8x96xf32>
    %417 = vector.extract_strided_slice %414 {offsets = [0, 0], sizes = [8, 32], strides = [1, 1]} : vector<8x96xf32> to vector<8x32xf32>
    %418 = vector.extract_strided_slice %416 {offsets = [0, 0], sizes = [8, 32], strides = [1, 1]} : vector<8x96xf32> to vector<8x32xf32>
    %419 = arith.addf %417, %418 : vector<8x32xf32>
    %420 = arith.negf %419 : vector<8x32xf32>
    %421 = math.exp %420 : vector<8x32xf32>
    %cst_73 = arith.constant 1.000000e+00 : f32
    %422 = vector.broadcast %cst_73 : f32 to vector<8x32xf32>
    %423 = arith.addf %422, %421 : vector<8x32xf32>
    %424 = arith.divf %422, %423 : vector<8x32xf32>
    %425 = vector.extract_strided_slice %414 {offsets = [0, 32], sizes = [8, 32], strides = [1, 1]} : vector<8x96xf32> to vector<8x32xf32>
    %426 = vector.extract_strided_slice %416 {offsets = [0, 32], sizes = [8, 32], strides = [1, 1]} : vector<8x96xf32> to vector<8x32xf32>
    %427 = arith.addf %425, %426 : vector<8x32xf32>
    %428 = arith.negf %427 : vector<8x32xf32>
    %429 = math.exp %428 : vector<8x32xf32>
    %cst_74 = arith.constant 1.000000e+00 : f32
    %430 = vector.broadcast %cst_74 : f32 to vector<8x32xf32>
    %431 = arith.addf %430, %429 : vector<8x32xf32>
    %432 = arith.divf %430, %431 : vector<8x32xf32>
    %433 = vector.extract_strided_slice %414 {offsets = [0, 64], sizes = [8, 32], strides = [1, 1]} : vector<8x96xf32> to vector<8x32xf32>
    %434 = vector.extract_strided_slice %416 {offsets = [0, 64], sizes = [8, 32], strides = [1, 1]} : vector<8x96xf32> to vector<8x32xf32>
    %435 = arith.mulf %424, %434 : vector<8x32xf32>
    %436 = arith.addf %433, %435 : vector<8x32xf32>
    %437 = math.tanh %436 : vector<8x32xf32>
    %cst_75 = arith.constant 1.000000e+00 : f32
    %438 = vector.broadcast %cst_75 : f32 to vector<8x32xf32>
    %439 = arith.subf %438, %432 : vector<8x32xf32>
    %440 = arith.mulf %439, %437 : vector<8x32xf32>
    %441 = arith.mulf %432, %412 : vector<8x32xf32>
    %442 = arith.addf %440, %441 : vector<8x32xf32>
    %443 = vector.extract_strided_slice %20 {offsets = [1, 0, 0], sizes = [1, 8, 96], strides = [1, 1, 1]} : vector<8x8x96xf32> to vector<1x8x96xf32>
    %444 = vector.shape_cast %443 : vector<1x8x96xf32> to vector<8x96xf32>
    %cst_76 = arith.constant dense<0.000000e+00> : vector<8x96xf32>
    %445 = tpu.matmul %442, %3, %cst_76 {dimension_numbers = #tpu.dot_dimension_numbers<[1], [0], [0], [1], [0, 0, 1, 1], [], []>} : vector<8x32xf32>, vector<32x96xf32>, vector<8x96xf32> -> vector<8x96xf32>
    %446 = arith.addf %445, %9 : vector<8x96xf32>
    %447 = vector.extract_strided_slice %444 {offsets = [0, 0], sizes = [8, 32], strides = [1, 1]} : vector<8x96xf32> to vector<8x32xf32>
    %448 = vector.extract_strided_slice %446 {offsets = [0, 0], sizes = [8, 32], strides = [1, 1]} : vector<8x96xf32> to vector<8x32xf32>
    %449 = arith.addf %447, %448 : vector<8x32xf32>
    %450 = arith.negf %449 : vector<8x32xf32>
    %451 = math.exp %450 : vector<8x32xf32>
    %cst_77 = arith.constant 1.000000e+00 : f32
    %452 = vector.broadcast %cst_77 : f32 to vector<8x32xf32>
    %453 = arith.addf %452, %451 : vector<8x32xf32>
    %454 = arith.divf %452, %453 : vector<8x32xf32>
    %455 = vector.extract_strided_slice %444 {offsets = [0, 32], sizes = [8, 32], strides = [1, 1]} : vector<8x96xf32> to vector<8x32xf32>
    %456 = vector.extract_strided_slice %446 {offsets = [0, 32], sizes = [8, 32], strides = [1, 1]} : vector<8x96xf32> to vector<8x32xf32>
    %457 = arith.addf %455, %456 : vector<8x32xf32>
    %458 = arith.negf %457 : vector<8x32xf32>
    %459 = math.exp %458 : vector<8x32xf32>
    %cst_78 = arith.constant 1.000000e+00 : f32
    %460 = vector.broadcast %cst_78 : f32 to vector<8x32xf32>
    %461 = arith.addf %460, %459 : vector<8x32xf32>
    %462 = arith.divf %460, %461 : vector<8x32xf32>
    %463 = vector.extract_strided_slice %444 {offsets = [0, 64], sizes = [8, 32], strides = [1, 1]} : vector<8x96xf32> to vector<8x32xf32>
    %464 = vector.extract_strided_slice %446 {offsets = [0, 64], sizes = [8, 32], strides = [1, 1]} : vector<8x96xf32> to vector<8x32xf32>
    %465 = arith.mulf %454, %464 : vector<8x32xf32>
    %466 = arith.addf %463, %465 : vector<8x32xf32>
    %467 = math.tanh %466 : vector<8x32xf32>
    %cst_79 = arith.constant 1.000000e+00 : f32
    %468 = vector.broadcast %cst_79 : f32 to vector<8x32xf32>
    %469 = arith.subf %468, %462 : vector<8x32xf32>
    %470 = arith.mulf %469, %467 : vector<8x32xf32>
    %471 = arith.mulf %462, %442 : vector<8x32xf32>
    %472 = arith.addf %470, %471 : vector<8x32xf32>
    %473 = vector.extract_strided_slice %20 {offsets = [0, 0, 0], sizes = [1, 8, 96], strides = [1, 1, 1]} : vector<8x8x96xf32> to vector<1x8x96xf32>
    %474 = vector.shape_cast %473 : vector<1x8x96xf32> to vector<8x96xf32>
    %cst_80 = arith.constant dense<0.000000e+00> : vector<8x96xf32>
    %475 = tpu.matmul %472, %3, %cst_80 {dimension_numbers = #tpu.dot_dimension_numbers<[1], [0], [0], [1], [0, 0, 1, 1], [], []>} : vector<8x32xf32>, vector<32x96xf32>, vector<8x96xf32> -> vector<8x96xf32>
    %476 = arith.addf %475, %9 : vector<8x96xf32>
    %477 = vector.extract_strided_slice %474 {offsets = [0, 0], sizes = [8, 32], strides = [1, 1]} : vector<8x96xf32> to vector<8x32xf32>
    %478 = vector.extract_strided_slice %476 {offsets = [0, 0], sizes = [8, 32], strides = [1, 1]} : vector<8x96xf32> to vector<8x32xf32>
    %479 = arith.addf %477, %478 : vector<8x32xf32>
    %480 = arith.negf %479 : vector<8x32xf32>
    %481 = math.exp %480 : vector<8x32xf32>
    %cst_81 = arith.constant 1.000000e+00 : f32
    %482 = vector.broadcast %cst_81 : f32 to vector<8x32xf32>
    %483 = arith.addf %482, %481 : vector<8x32xf32>
    %484 = arith.divf %482, %483 : vector<8x32xf32>
    %485 = vector.extract_strided_slice %474 {offsets = [0, 32], sizes = [8, 32], strides = [1, 1]} : vector<8x96xf32> to vector<8x32xf32>
    %486 = vector.extract_strided_slice %476 {offsets = [0, 32], sizes = [8, 32], strides = [1, 1]} : vector<8x96xf32> to vector<8x32xf32>
    %487 = arith.addf %485, %486 : vector<8x32xf32>
    %488 = arith.negf %487 : vector<8x32xf32>
    %489 = math.exp %488 : vector<8x32xf32>
    %cst_82 = arith.constant 1.000000e+00 : f32
    %490 = vector.broadcast %cst_82 : f32 to vector<8x32xf32>
    %491 = arith.addf %490, %489 : vector<8x32xf32>
    %492 = arith.divf %490, %491 : vector<8x32xf32>
    %493 = vector.extract_strided_slice %474 {offsets = [0, 64], sizes = [8, 32], strides = [1, 1]} : vector<8x96xf32> to vector<8x32xf32>
    %494 = vector.extract_strided_slice %476 {offsets = [0, 64], sizes = [8, 32], strides = [1, 1]} : vector<8x96xf32> to vector<8x32xf32>
    %495 = arith.mulf %484, %494 : vector<8x32xf32>
    %496 = arith.addf %493, %495 : vector<8x32xf32>
    %497 = math.tanh %496 : vector<8x32xf32>
    %cst_83 = arith.constant 1.000000e+00 : f32
    %498 = vector.broadcast %cst_83 : f32 to vector<8x32xf32>
    %499 = arith.subf %498, %492 : vector<8x32xf32>
    %500 = arith.mulf %499, %497 : vector<8x32xf32>
    %501 = arith.mulf %492, %472 : vector<8x32xf32>
    %502 = arith.addf %500, %501 : vector<8x32xf32>
    %503 = vector.shape_cast %51 : vector<8x32xf32> to vector<1x8x32xf32>
    %504 = vector.shape_cast %81 : vector<8x32xf32> to vector<1x8x32xf32>
    %505 = vector.shape_cast %111 : vector<8x32xf32> to vector<1x8x32xf32>
    %506 = vector.shape_cast %141 : vector<8x32xf32> to vector<1x8x32xf32>
    %507 = vector.shape_cast %171 : vector<8x32xf32> to vector<1x8x32xf32>
    %508 = vector.shape_cast %201 : vector<8x32xf32> to vector<1x8x32xf32>
    %509 = vector.shape_cast %231 : vector<8x32xf32> to vector<1x8x32xf32>
    %510 = vector.shape_cast %261 : vector<8x32xf32> to vector<1x8x32xf32>
    %511 = tpu.concatenate %503, %504, %505, %506, %507, %508, %509, %510 in 0 : vector<1x8x32xf32>, vector<1x8x32xf32>, vector<1x8x32xf32>, vector<1x8x32xf32>, vector<1x8x32xf32>, vector<1x8x32xf32>, vector<1x8x32xf32>, vector<1x8x32xf32> -> vector<8x8x32xf32>
    %512 = vector.shape_cast %502 : vector<8x32xf32> to vector<1x8x32xf32>
    %513 = vector.shape_cast %472 : vector<8x32xf32> to vector<1x8x32xf32>
    %514 = vector.shape_cast %442 : vector<8x32xf32> to vector<1x8x32xf32>
    %515 = vector.shape_cast %412 : vector<8x32xf32> to vector<1x8x32xf32>
    %516 = vector.shape_cast %382 : vector<8x32xf32> to vector<1x8x32xf32>
    %517 = vector.shape_cast %352 : vector<8x32xf32> to vector<1x8x32xf32>
    %518 = vector.shape_cast %322 : vector<8x32xf32> to vector<1x8x32xf32>
    %519 = vector.shape_cast %292 : vector<8x32xf32> to vector<1x8x32xf32>
    %520 = tpu.concatenate %512, %513, %514, %515, %516, %517, %518, %519 in 0 : vector<1x8x32xf32>, vector<1x8x32xf32>, vector<1x8x32xf32>, vector<1x8x32xf32>, vector<1x8x32xf32>, vector<1x8x32xf32>, vector<1x8x32xf32>, vector<1x8x32xf32> -> vector<8x8x32xf32>
    %521 = tpu.concatenate %511, %520 in 2 : vector<8x8x32xf32>, vector<8x8x32xf32> -> vector<8x8x64xf32>
    %522 = vector.shape_cast %521 : vector<8x8x64xf32> to vector<64x64xf32>
    %cst_84 = arith.constant dense<0.000000e+00> : vector<64x4xf32>
    %523 = tpu.matmul %522, %10, %cst_84 {dimension_numbers = #tpu.dot_dimension_numbers<[1], [0], [0], [1], [0, 0, 1, 1], [], []>} : vector<64x64xf32>, vector<64x4xf32>, vector<64x4xf32> -> vector<64x4xf32>
    %524 = vector.broadcast %11 : vector<1x4xf32> to vector<64x4xf32>
    %525 = arith.addf %523, %524 : vector<64x4xf32>
    %526 = vector.shape_cast %525 : vector<64x4xf32> to vector<8x8x4xf32>
    %c0_85 = arith.constant 0 : index
    %c0_86 = arith.constant 0 : index
    %c0_87 = arith.constant 0 : index
    %527 = vector.load %arg1[%c0_85, %c0_86, %c0_87] : memref<8x8x4xf32, #tpu.memory_space<vmem>>, vector<8x8x4xf32>
    %cst_88 = arith.constant 0.000000e+00 : f32
    %528 = vector.broadcast %cst_88 : f32 to vector<8x8x4xf32>
    %529 = arith.maximumf %526, %528 : vector<8x8x4xf32>
    %530 = arith.mulf %526, %527 : vector<8x8x4xf32>
    %531 = arith.subf %529, %530 : vector<8x8x4xf32>
    %532 = math.absf %526 : vector<8x8x4xf32>
    %cst_89 = arith.constant 0.000000e+00 : f32
    %533 = vector.broadcast %cst_89 : f32 to vector<8x8x4xf32>
    %534 = arith.subf %533, %532 : vector<8x8x4xf32>
    %535 = math.exp %534 : vector<8x8x4xf32>
    %cst_90 = arith.constant 1.000000e+00 : f32
    %536 = vector.broadcast %cst_90 : f32 to vector<8x8x4xf32>
    %537 = arith.addf %536, %535 : vector<8x8x4xf32>
    %538 = math.log %537 : vector<8x8x4xf32>
    %539 = arith.addf %531, %538 : vector<8x8x4xf32>
    %cst_91 = arith.constant 1.000000e+00 : f32
    %540 = vector.broadcast %cst_91 : f32 to vector<8x8x4xf32>
    %541 = arith.subf %540, %527 : vector<8x8x4xf32>
    %542 = arith.mulf %541, %539 : vector<8x8x4xf32>
    %543 = vector.shape_cast %542 : vector<8x8x4xf32> to vector<1x8x8x4xf32>
    %cst_92 = arith.constant dense<0.000000e+00> : vector<1xf32>
    %544 = vector.multi_reduction <add>, %543, %cst_92 [1, 2, 3] : vector<1x8x8x4xf32> to vector<1xf32>
    %545 = vector.shape_cast %544 : vector<1xf32> to vector<1x1x1x1xf32>
    %546 = vector.extract %545[0, 0, 0, 0] : f32 from vector<1x1x1x1xf32>
    %cst_93 = arith.constant 2.560000e+02 : f32
    %547 = arith.divf %546, %cst_93 : f32
    %cst_94 = arith.constant 0.000000e+00 : f32
    %548 = arith.subf %cst_94, %547 : f32
    %c0_95 = arith.constant 0 : index
    %c0_96 = arith.constant 0 : index
    %c0_97 = arith.constant 0 : index
    %549 = vector.load %arg3[%c0_95, %c0_96, %c0_97] : memref<8x8x4xf32, #tpu.memory_space<vmem>>, vector<8x8x4xf32>
    %c0_98 = arith.constant 0 : index
    %c0_99 = arith.constant 0 : index
    %c0_100 = arith.constant 0 : index
    %550 = vector.load %arg4[%c0_98, %c0_99, %c0_100] : memref<8x8x4xf32, #tpu.memory_space<vmem>>, vector<8x8x4xf32>
    %c0_101 = arith.constant 0 : index
    %c0_102 = arith.constant 0 : index
    %c0_103 = arith.constant 0 : index
    %551 = vector.load %arg2[%c0_101, %c0_102, %c0_103] : memref<8x8x4xf32, #tpu.memory_space<vmem>>, vector<8x8x4xf32>
    %552 = arith.addf %549, %550 : vector<8x8x4xf32>
    %cst_104 = arith.constant 5.000000e-01 : f32
    %553 = vector.broadcast %cst_104 : f32 to vector<8x8x4xf32>
    %554 = arith.mulf %552, %553 : vector<8x8x4xf32>
    %555 = arith.subf %551, %554 : vector<8x8x4xf32>
    %556 = arith.mulf %555, %555 : vector<8x8x4xf32>
    %557 = arith.mulf %556, %527 : vector<8x8x4xf32>
    %558 = vector.shape_cast %557 : vector<8x8x4xf32> to vector<1x8x8x4xf32>
    %cst_105 = arith.constant dense<0.000000e+00> : vector<1xf32>
    %559 = vector.multi_reduction <add>, %558, %cst_105 [1, 2, 3] : vector<1x8x8x4xf32> to vector<1xf32>
    %560 = vector.shape_cast %559 : vector<1xf32> to vector<1x1x1x1xf32>
    %561 = vector.extract %560[0, 0, 0, 0] : f32 from vector<1x1x1x1xf32>
    %562 = vector.shape_cast %527 : vector<8x8x4xf32> to vector<1x8x8x4xf32>
    %cst_106 = arith.constant dense<0.000000e+00> : vector<1xf32>
    %563 = vector.multi_reduction <add>, %562, %cst_106 [1, 2, 3] : vector<1x8x8x4xf32> to vector<1xf32>
    %564 = vector.shape_cast %563 : vector<1xf32> to vector<1x1x1x1xf32>
    %565 = vector.extract %564[0, 0, 0, 0] : f32 from vector<1x1x1x1xf32>
    %cst_107 = arith.constant 9.99999996E-13 : f32
    %566 = arith.addf %565, %cst_107 : f32
    %567 = arith.divf %561, %566 : f32
    %568 = arith.subf %549, %550 : vector<8x8x4xf32>
    %569 = arith.mulf %568, %568 : vector<8x8x4xf32>
    %570 = vector.shape_cast %569 : vector<8x8x4xf32> to vector<1x8x8x4xf32>
    %cst_108 = arith.constant dense<0.000000e+00> : vector<1xf32>
    %571 = vector.multi_reduction <add>, %570, %cst_108 [1, 2, 3] : vector<1x8x8x4xf32> to vector<1xf32>
    %572 = vector.shape_cast %571 : vector<1xf32> to vector<1x1x1x1xf32>
    %573 = vector.extract %572[0, 0, 0, 0] : f32 from vector<1x1x1x1xf32>
    %cst_109 = arith.constant 2.560000e+02 : f32
    %574 = arith.divf %573, %cst_109 : f32
    %cst_110 = arith.constant 1.000000e-01 : f32
    %575 = arith.mulf %cst_110, %574 : f32
    %576 = arith.addf %567, %575 : f32
    %cst_111 = arith.constant 1.000000e+00 : f32
    %577 = arith.mulf %cst_111, %576 : f32
    %578 = arith.addf %548, %577 : f32
    %c0_112 = arith.constant 0 : index
    %579 = memref.load %arg13[%c0_112] : memref<1xf32, #tpu.memory_space<smem>>
    memref.store %578, %arg13[%c0_112] : memref<1xf32, #tpu.memory_space<smem>>
    return
  }
}

</mosaic_0001>

<llo_original>
// kernel: usgan_forward.2
$region0: #{usgan_forward.2}
  #allocation0 [shape = 'u32[]', space=smem, size = 0x4, offset = 0x4, fixed_abs, tag = 'smem constant byte address 0x4 - core index']
  #allocation1 [shape = 'u32[72,128]{1,0:T(1,128)}', space=vmem, size = 0x9000, scoped, tag = 'internal scratch']
  %s0 = inlined_call_operand.vmem [shape: f32[2,8,8,4], index: 0, kind: input, shape index: {}]
  %s1 = inlined_call_operand.vmem [shape: f32[2,8,8,4], index: 1, kind: input, shape index: {}]
  %s2 = inlined_call_operand.vmem [shape: f32[2,8,8,4], index: 2, kind: input, shape index: {}]
  %s3 = inlined_call_operand.vmem [shape: f32[2,4,36], index: 3, kind: input, shape index: {}]
  %s4 = inlined_call_operand.vmem [shape: f32[2,1,36], index: 4, kind: input, shape index: {}]
  %s5 = inlined_call_operand.vmem [shape: f32[2,8,4], index: 5, kind: input, shape index: {}]
  %s6 = inlined_call_operand.vmem [shape: f32[2,1,4], index: 6, kind: input, shape index: {}]
  %s7 = inlined_call_operand.vmem [shape: f32[2,32,132], index: 7, kind: input, shape index: {}]
  %s8 = inlined_call_operand.vmem [shape: f32[2,1,132], index: 8, kind: input, shape index: {}]
  %s9 = inlined_call_operand.vmem [shape: f32[2,4,4], index: 9, kind: input, shape index: {}]
  %s10 = inlined_call_operand.vmem [shape: f32[2,1,4], index: 10, kind: input, shape index: {}]
  %s11 = inlined_call_operand.vmem [shape: f32[2,4,128], index: 11, kind: input, shape index: {}]
  %s12 = inlined_call_operand.vmem [shape: f32[2,1,128], index: 12, kind: input, shape index: {}]
  %s13 = inlined_call_operand.vmem [shape: f32[2,4,128], index: 13, kind: input, shape index: {}]
  %s14 = inlined_call_operand.vmem [shape: f32[2,8,8,4], index: 14, kind: output, shape index: {0}]
  %s15 = inlined_call_operand.vmem [shape: f32[2,8,8,4], index: 15, kind: output, shape index: {1}]
  %16 = xla_tuple %s14, %s15
  %s17 = sld [smem:[#allocation0]]
  $region97: #{usgan_forward.2} parent=0
    _
  %s19 = ssub.s32 1, %s17
  %s20 = scalar_select 0, %s19, %s17
  loop: start=0, step=1, limit=4
  $region2: #{usgan_forward.2} parent=0 // loop_pre_header
    _
  $region3: #{usgan_forward.2} parent=0 // loop_header
    %s22 = sphi 0, %s26
    %p23 = scmp.ge.s32.totalorder %s22, 4
    %s32 = sphi 0, %s34
    %s35 = sphi 0, %s32
    %s36 = sphi 0, %s35
    %s52 = sphi 0, %s36
    %s58 = sphi 0, %s60
    %s61 = sphi 0, %s58
    %s62 = sphi 0, %s61
    %s78 = sphi 0, %s62
    %s84 = sphi 0, %s86
    %s87 = sphi 0, %s84
    %s88 = sphi 0, %s87
    %s104 = sphi 0, %s88
    %s110 = sphi 0, %s112
    %s113 = sphi 0, %s110
    %s114 = sphi 0, %s113
    %s130 = sphi 0, %s114
    %s136 = sphi 0, %s138
    %s139 = sphi 0, %s136
    %s140 = sphi 0, %s139
    %s156 = sphi 0, %s140
    %s162 = sphi 0, %s164
    %s165 = sphi 0, %s162
    %s166 = sphi 0, %s165
    %s182 = sphi 0, %s166
    %s188 = sphi 0, %s190
    %s191 = sphi 0, %s188
    %s192 = sphi 0, %s191
    %s208 = sphi 0, %s192
    %s214 = sphi 0, %s216
    %s217 = sphi 0, %s214
    %s218 = sphi 0, %s217
    %s234 = sphi 0, %s218
    %s240 = sphi 0, %s242
    %s243 = sphi 0, %s240
    %s244 = sphi 0, %s243
    %s260 = sphi 0, %s244
    %s266 = sphi 0, %s268
    %s269 = sphi 0, %s266
    %s270 = sphi 0, %s269
    %s286 = sphi 0, %s270
    %s292 = sphi 0, %s294
    %s295 = sphi 0, %s292
    %s296 = sphi 0, %s295
    %s312 = sphi 0, %s296
    %s318 = sphi 0, %s320
    %s321 = sphi 0, %s318
    %s322 = sphi 0, %s321
    %s338 = sphi 0, %s322
    %s344 = sphi 0, %s346
    %s347 = sphi 0, %s344
    %s348 = sphi 0, %s347
    %s364 = sphi 0, %s348
    %s370 = sphi 0, %s372
    %s373 = sphi 0, %s370
    %s374 = sphi 0, %s373
    %s390 = sphi 0, %s374
    %s396 = sphi 0, %s398
    %s399 = sphi 0, %s396
    %s400 = sphi 0, %s399
    %s416 = sphi 0, %s400
    %s422 = sphi 0, %s424
    %s425 = sphi 0, %s422
    %s426 = sphi 0, %s425
    %s442 = sphi 0, %s426
  $region4: #{usgan_forward.2} parent=0 // loop_header_branch
    %25 = sbr.rel (%p23) target = $region8
  $region5: #{usgan_forward.2} parent=0 // loop_body
    %s27 = ssub.s32 %s22, 1
    %s28 = ssub.s32 %s22, 2
    %s29 = sadd.s32 %s22, 1
    %s30 = ssub.s32 %s22, %s29
    %p31 = scmp.eq.s32.totalorder %s30, 0
    %s33 = sadd.s32 %s32, 1
    %s34 = scalar_select %p31, %s32, %s33
    %p37 = pneg %p31
    %p38 = scmp.eq.s32.totalorder %s22, 1
    %p39 = por %p37, %p38
    %p40 = scmp.ne.s32.totalorder %s32, %s35
    %p41 = scmp.eq.s32.totalorder %s22, 0
    %p42 = por %p40, %p41
    %p43 = scmp.ne.s32.totalorder %s32, %s35
    %p44 = scmp.eq.s32.totalorder %s27, 1
    %p45 = por %p43, %p44
    %p46 = scmp.ne.s32.totalorder %s35, %s36
    %p47 = scmp.eq.s32.totalorder %s27, 0
    %p48 = por %p46, %p47
    %p49 = scmp.ne.s32.totalorder %s35, %s36
    %p50 = scmp.eq.s32.totalorder %s28, 1
    %p51 = por %p49, %p50
    %p53 = scmp.ne.s32.totalorder %s36, %s52
    %p54 = scmp.eq.s32.totalorder %s28, 0
    %p55 = por %p53, %p54
    %s56 = ssub.s32 %s22, %s29
    %p57 = scmp.eq.s32.totalorder %s56, 0
    %s59 = sadd.s32 %s58, 1
    %s60 = scalar_select %p57, %s58, %s59
    %p63 = pneg %p57
    %p64 = scmp.eq.s32.totalorder %s22, 1
    %p65 = por %p63, %p64
    %p66 = scmp.ne.s32.totalorder %s58, %s61
    %p67 = scmp.eq.s32.totalorder %s22, 0
    %p68 = por %p66, %p67
    %p69 = scmp.ne.s32.totalorder %s58, %s61
    %p70 = scmp.eq.s32.totalorder %s27, 1
    %p71 = por %p69, %p70
    %p72 = scmp.ne.s32.totalorder %s61, %s62
    %p73 = scmp.eq.s32.totalorder %s27, 0
    %p74 = por %p72, %p73
    %p75 = scmp.ne.s32.totalorder %s61, %s62
    %p76 = scmp.eq.s32.totalorder %s28, 1
    %p77 = por %p75, %p76
    %p79 = scmp.ne.s32.totalorder %s62, %s78
    %p80 = scmp.eq.s32.totalorder %s28, 0
    %p81 = por %p79, %p80
    %s82 = ssub.s32 %s22, %s29
    %p83 = scmp.eq.s32.totalorder %s82, 0
    %s85 = sadd.s32 %s84, 1
    %s86 = scalar_select %p83, %s84, %s85
    %p89 = pneg %p83
    %p90 = scmp.eq.s32.totalorder %s22, 1
    %p91 = por %p89, %p90
    %p92 = scmp.ne.s32.totalorder %s84, %s87
    %p93 = scmp.eq.s32.totalorder %s22, 0
    %p94 = por %p92, %p93
    %p95 = scmp.ne.s32.totalorder %s84, %s87
    %p96 = scmp.eq.s32.totalorder %s27, 1
    %p97 = por %p95, %p96
    %p98 = scmp.ne.s32.totalorder %s87, %s88
    %p99 = scmp.eq.s32.totalorder %s27, 0
    %p100 = por %p98, %p99
    %p101 = scmp.ne.s32.totalorder %s87, %s88
    %p102 = scmp.eq.s32.totalorder %s28, 1
    %p103 = por %p101, %p102
    %p105 = scmp.ne.s32.totalorder %s88, %s104
    %p106 = scmp.eq.s32.totalorder %s28, 0
    %p107 = por %p105, %p106
    %s108 = ssub.s32 %s22, %s29
    %p109 = scmp.eq.s32.totalorder %s108, 0
    %s111 = sadd.s32 %s110, 1
    %s112 = scalar_select %p109, %s110, %s111
    %p115 = pneg %p109
    %p116 = scmp.eq.s32.totalorder %s22, 1
    %p117 = por %p115, %p116
    %p118 = scmp.ne.s32.totalorder %s110, %s113
    %p119 = scmp.eq.s32.totalorder %s22, 0
    %p120 = por %p118, %p119
    %p121 = scmp.ne.s32.totalorder %s110, %s113
    %p122 = scmp.eq.s32.totalorder %s27, 1
    %p123 = por %p121, %p122
    %p124 = scmp.ne.s32.totalorder %s113, %s114
    %p125 = scmp.eq.s32.totalorder %s27, 0
    %p126 = por %p124, %p125
    %p127 = scmp.ne.s32.totalorder %s113, %s114
    %p128 = scmp.eq.s32.totalorder %s28, 1
    %p129 = por %p127, %p128
    %p131 = scmp.ne.s32.totalorder %s114, %s130
    %p132 = scmp.eq.s32.totalorder %s28, 0
    %p133 = por %p131, %p132
    %s134 = ssub.s32 %s22, %s29
    %p135 = scmp.eq.s32.totalorder %s134, 0
    %s137 = sadd.s32 %s136, 1
    %s138 = scalar_select %p135, %s136, %s137
    %p141 = pneg %p135
    %p142 = scmp.eq.s32.totalorder %s22, 1
    %p143 = por %p141, %p142
    %p144 = scmp.ne.s32.totalorder %s136, %s139
    %p145 = scmp.eq.s32.totalorder %s22, 0
    %p146 = por %p144, %p145
    %p147 = scmp.ne.s32.totalorder %s136, %s139
    %p148 = scmp.eq.s32.totalorder %s27, 1
    %p149 = por %p147, %p148
    %p150 = scmp.ne.s32.totalorder %s139, %s140
    %p151 = scmp.eq.s32.totalorder %s27, 0
    %p152 = por %p150, %p151
    %p153 = scmp.ne.s32.totalorder %s139, %s140
    %p154 = scmp.eq.s32.totalorder %s28, 1
    %p155 = por %p153, %p154
    %p157 = scmp.ne.s32.totalorder %s140, %s156
    %p158 = scmp.eq.s32.totalorder %s28, 0
    %p159 = por %p157, %p158
    %s160 = ssub.s32 %s22, %s29
    %p161 = scmp.eq.s32.totalorder %s160, 0
    %s163 = sadd.s32 %s162, 1
    %s164 = scalar_select %p161, %s162, %s163
    %p167 = pneg %p161
    %p168 = scmp.eq.s32.totalorder %s22, 1
    %p169 = por %p167, %p168
    %p170 = scmp.ne.s32.totalorder %s162, %s165
    %p171 = scmp.eq.s32.totalorder %s22, 0
    %p172 = por %p170, %p171
    %p173 = scmp.ne.s32.totalorder %s162, %s165
    %p174 = scmp.eq.s32.totalorder %s27, 1
    %p175 = por %p173, %p174
    %p176 = scmp.ne.s32.totalorder %s165, %s166
    %p177 = scmp.eq.s32.totalorder %s27, 0
    %p178 = por %p176, %p177
    %p179 = scmp.ne.s32.totalorder %s165, %s166
    %p180 = scmp.eq.s32.totalorder %s28, 1
    %p181 = por %p179, %p180
    %p183 = scmp.ne.s32.totalorder %s166, %s182
    %p184 = scmp.eq.s32.totalorder %s28, 0
    %p185 = por %p183, %p184
    %s186 = ssub.s32 %s22, %s29
    %p187 = scmp.eq.s32.totalorder %s186, 0
    %s189 = sadd.s32 %s188, 1
    %s190 = scalar_select %p187, %s188, %s189
    %p193 = pneg %p187
    %p194 = scmp.eq.s32.totalorder %s22, 1
    %p195 = por %p193, %p194
    %p196 = scmp.ne.s32.totalorder %s188, %s191
    %p197 = scmp.eq.s32.totalorder %s22, 0
    %p198 = por %p196, %p197
    %p199 = scmp.ne.s32.totalorder %s188, %s191
    %p200 = scmp.eq.s32.totalorder %s27, 1
    %p201 = por %p199, %p200
    %p202 = scmp.ne.s32.totalorder %s191, %s192
    %p203 = scmp.eq.s32.totalorder %s27, 0
    %p204 = por %p202, %p203
    %p205 = scmp.ne.s32.totalorder %s191, %s192
    %p206 = scmp.eq.s32.totalorder %s28, 1
    %p207 = por %p205, %p206
    %p209 = scmp.ne.s32.totalorder %s192, %s208
    %p210 = scmp.eq.s32.totalorder %s28, 0
    %p211 = por %p209, %p210
    %s212 = ssub.s32 %s22, %s29
    %p213 = scmp.eq.s32.totalorder %s212, 0
    %s215 = sadd.s32 %s214, 1
    %s216 = scalar_select %p213, %s214, %s215
    %p219 = pneg %p213
    %p220 = scmp.eq.s32.totalorder %s22, 1
    %p221 = por %p219, %p220
    %p222 = scmp.ne.s32.totalorder %s214, %s217
    %p223 = scmp.eq.s32.totalorder %s22, 0
    %p224 = por %p222, %p223
    %p225 = scmp.ne.s32.totalorder %s214, %s217
    %p226 = scmp.eq.s32.totalorder %s27, 1
    %p227 = por %p225, %p226
    %p228 = scmp.ne.s32.totalorder %s217, %s218
    %p229 = scmp.eq.s32.totalorder %s27, 0
    %p230 = por %p228, %p229
    %p231 = scmp.ne.s32.totalorder %s217, %s218
    %p232 = scmp.eq.s32.totalorder %s28, 1
    %p233 = por %p231, %p232
    %p235 = scmp.ne.s32.totalorder %s218, %s234
    %p236 = scmp.eq.s32.totalorder %s28, 0
    %p237 = por %p235, %p236
    %s238 = ssub.s32 %s22, %s29
    %p239 = scmp.eq.s32.totalorder %s238, 0
    %s241 = sadd.s32 %s240, 1
    %s242 = scalar_select %p239, %s240, %s241
    %p245 = pneg %p239
    %p246 = scmp.eq.s32.totalorder %s22, 1
    %p247 = por %p245, %p246
    %p248 = scmp.ne.s32.totalorder %s240, %s243
    %p249 = scmp.eq.s32.totalorder %s22, 0
    %p250 = por %p248, %p249
    %p251 = scmp.ne.s32.totalorder %s240, %s243
    %p252 = scmp.eq.s32.totalorder %s27, 1
    %p253 = por %p251, %p252
    %p254 = scmp.ne.s32.totalorder %s243, %s244
    %p255 = scmp.eq.s32.totalorder %s27, 0
    %p256 = por %p254, %p255
    %p257 = scmp.ne.s32.totalorder %s243, %s244
    %p258 = scmp.eq.s32.totalorder %s28, 1
    %p259 = por %p257, %p258
    %p261 = scmp.ne.s32.totalorder %s244, %s260
    %p262 = scmp.eq.s32.totalorder %s28, 0
    %p263 = por %p261, %p262
    %s264 = ssub.s32 %s22, %s29
    %p265 = scmp.eq.s32.totalorder %s264, 0
    %s267 = sadd.s32 %s266, 1
    %s268 = scalar_select %p265, %s266, %s267
    %p271 = pneg %p265
    %p272 = scmp.eq.s32.totalorder %s22, 1
    %p273 = por %p271, %p272
    %p274 = scmp.ne.s32.totalorder %s266, %s269
    %p275 = scmp.eq.s32.totalorder %s22, 0
    %p276 = por %p274, %p275
    %p277 = scmp.ne.s32.totalorder %s266, %s269
    %p278 = scmp.eq.s32.totalorder %s27, 1
    %p279 = por %p277, %p278
    %p280 = scmp.ne.s32.totalorder %s269, %s270
    %p281 = scmp.eq.s32.totalorder %s27, 0
    %p282 = por %p280, %p281
    %p283 = scmp.ne.s32.totalorder %s269, %s270
    %p284 = scmp.eq.s32.totalorder %s28, 1
    %p285 = por %p283, %p284
    %p287 = scmp.ne.s32.totalorder %s270, %s286
    %p288 = scmp.eq.s32.totalorder %s28, 0
    %p289 = por %p287, %p288
    %s290 = ssub.s32 %s22, %s29
    %p291 = scmp.eq.s32.totalorder %s290, 0
    %s293 = sadd.s32 %s292, 1
    %s294 = scalar_select %p291, %s292, %s293
    %p297 = pneg %p291
    %p298 = scmp.eq.s32.totalorder %s22, 1
    %p299 = por %p297, %p298
    %p300 = scmp.ne.s32.totalorder %s292, %s295
    %p301 = scmp.eq.s32.totalorder %s22, 0
    %p302 = por %p300, %p301
    %p303 = scmp.ne.s32.totalorder %s292, %s295
    %p304 = scmp.eq.s32.totalorder %s27, 1
    %p305 = por %p303, %p304
    %p306 = scmp.ne.s32.totalorder %s295, %s296
    %p307 = scmp.eq.s32.totalorder %s27, 0
    %p308 = por %p306, %p307
    %p309 = scmp.ne.s32.totalorder %s295, %s296
    %p310 = scmp.eq.s32.totalorder %s28, 1
    %p311 = por %p309, %p310
    %p313 = scmp.ne.s32.totalorder %s296, %s312
    %p314 = scmp.eq.s32.totalorder %s28, 0
    %p315 = por %p313, %p314
    %s316 = ssub.s32 %s22, %s29
    %p317 = scmp.eq.s32.totalorder %s316, 0
    %s319 = sadd.s32 %s318, 1
    %s320 = scalar_select %p317, %s318, %s319
    %p323 = pneg %p317
    %p324 = scmp.eq.s32.totalorder %s22, 1
    %p325 = por %p323, %p324
    %p326 = scmp.ne.s32.totalorder %s318, %s321
    %p327 = scmp.eq.s32.totalorder %s22, 0
    %p328 = por %p326, %p327
    %p329 = scmp.ne.s32.totalorder %s318, %s321
    %p330 = scmp.eq.s32.totalorder %s27, 1
    %p331 = por %p329, %p330
    %p332 = scmp.ne.s32.totalorder %s321, %s322
    %p333 = scmp.eq.s32.totalorder %s27, 0
    %p334 = por %p332, %p333
    %p335 = scmp.ne.s32.totalorder %s321, %s322
    %p336 = scmp.eq.s32.totalorder %s28, 1
    %p337 = por %p335, %p336
    %p339 = scmp.ne.s32.totalorder %s322, %s338
    %p340 = scmp.eq.s32.totalorder %s28, 0
    %p341 = por %p339, %p340
    %s342 = ssub.s32 %s22, %s29
    %p343 = scmp.eq.s32.totalorder %s342, 0
    %s345 = sadd.s32 %s344, 1
    %s346 = scalar_select %p343, %s344, %s345
    %p349 = pneg %p343
    %p350 = scmp.eq.s32.totalorder %s22, 1
    %p351 = por %p349, %p350
    %p352 = scmp.ne.s32.totalorder %s344, %s347
    %p353 = scmp.eq.s32.totalorder %s22, 0
    %p354 = por %p352, %p353
    %p355 = scmp.ne.s32.totalorder %s344, %s347
    %p356 = scmp.eq.s32.totalorder %s27, 1
    %p357 = por %p355, %p356
    %p358 = scmp.ne.s32.totalorder %s347, %s348
    %p359 = scmp.eq.s32.totalorder %s27, 0
    %p360 = por %p358, %p359
    %p361 = scmp.ne.s32.totalorder %s347, %s348
    %p362 = scmp.eq.s32.totalorder %s28, 1
    %p363 = por %p361, %p362
    %p365 = scmp.ne.s32.totalorder %s348, %s364
    %p366 = scmp.eq.s32.totalorder %s28, 0
    %p367 = por %p365, %p366
    %s368 = ssub.s32 %s22, %s29
    %p369 = scmp.eq.s32.totalorder %s368, 0
    %s371 = sadd.s32 %s370, 1
    %s372 = scalar_select %p369, %s370, %s371
    %p375 = pneg %p369
    %p376 = scmp.eq.s32.totalorder %s22, 1
    %p377 = por %p375, %p376
    %p378 = scmp.ne.s32.totalorder %s370, %s373
    %p379 = scmp.eq.s32.totalorder %s22, 0
    %p380 = por %p378, %p379
    %p381 = scmp.ne.s32.totalorder %s370, %s373
    %p382 = scmp.eq.s32.totalorder %s27, 1
    %p383 = por %p381, %p382
    %p384 = scmp.ne.s32.totalorder %s373, %s374
    %p385 = scmp.eq.s32.totalorder %s27, 0
    %p386 = por %p384, %p385
    %p387 = scmp.ne.s32.totalorder %s373, %s374
    %p388 = scmp.eq.s32.totalorder %s28, 1
    %p389 = por %p387, %p388
    %p391 = scmp.ne.s32.totalorder %s374, %s390
    %p392 = scmp.eq.s32.totalorder %s28, 0
    %p393 = por %p391, %p392
    %s394 = ssub.s32 %s22, %s29
    %p395 = scmp.eq.s32.totalorder %s394, 0
    %s397 = sadd.s32 %s396, 1
    %s398 = scalar_select %p395, %s396, %s397
    %p401 = pneg %p395
    %p402 = scmp.eq.s32.totalorder %s22, 1
    %p403 = por %p401, %p402
    %p404 = scmp.ne.s32.totalorder %s396, %s399
    %p405 = scmp.eq.s32.totalorder %s22, 0
    %p406 = por %p404, %p405
    %p407 = scmp.ne.s32.totalorder %s396, %s399
    %p408 = scmp.eq.s32.totalorder %s27, 1
    %p409 = por %p407, %p408
    %p410 = scmp.ne.s32.totalorder %s399, %s400
    %p411 = scmp.eq.s32.totalorder %s27, 0
    %p412 = por %p410, %p411
    %p413 = scmp.ne.s32.totalorder %s399, %s400
    %p414 = scmp.eq.s32.totalorder %s28, 1
    %p415 = por %p413, %p414
    %p417 = scmp.ne.s32.totalorder %s400, %s416
    %p418 = scmp.eq.s32.totalorder %s28, 0
    %p419 = por %p417, %p418
    %s420 = ssub.s32 %s22, %s29
    %p421 = scmp.eq.s32.totalorder %s420, 0
    %s423 = sadd.s32 %s422, 1
    %s424 = scalar_select %p421, %s422, %s423
    %p427 = pneg %p421
    %p428 = scmp.eq.s32.totalorder %s22, 1
    %p429 = por %p427, %p428
    %p430 = scmp.ne.s32.totalorder %s422, %s425
    %p431 = scmp.eq.s32.totalorder %s22, 0
    %p432 = por %p430, %p431
    %p433 = scmp.ne.s32.totalorder %s422, %s425
    %p434 = scmp.eq.s32.totalorder %s27, 1
    %p435 = por %p433, %p434
    %p436 = scmp.ne.s32.totalorder %s425, %s426
    %p437 = scmp.eq.s32.totalorder %s27, 0
    %p438 = por %p436, %p437
    %p439 = scmp.ne.s32.totalorder %s425, %s426
    %p440 = scmp.eq.s32.totalorder %s28, 1
    %p441 = por %p439, %p440
    %p443 = scmp.ne.s32.totalorder %s426, %s442
    %p444 = scmp.eq.s32.totalorder %s28, 0
    %p445 = por %p443, %p444
    %p446 = scmp.le.s32.totalorder 1, %s22
    %p447 = scmp.lt.s32.totalorder %s22, 3
    %p448 = pnand %p446, %p447
    %p449 = pneg %p448
    // Predicated region
    $region9: #{usgan_forward.2} parent=5 // pred_check
      _
    $region10: #{usgan_forward.2} parent=5 // pred_check_branch
      %451 = sbr.rel (%p448) target = $region12
    $region11: #{usgan_forward.2} parent=5 // pred_region
      %s452 = ssub.s32 %s22, 1
    $region12: #{usgan_forward.2} parent=5 // pred_fallthru
      _
    %p453 = scmp.lt.s32.totalorder %s22, 2
    // Predicated region
    $region13: #{usgan_forward.2} parent=5 // pred_check
      %p454 = pneg %p453
    $region14: #{usgan_forward.2} parent=5 // pred_check_branch
      %456 = sbr.rel (%p454) target = $region16
    $region15: #{usgan_forward.2} parent=5 // pred_region
      // Predicated region
      $region17: #{usgan_forward.2} parent=15 // pred_check
        %p457 = pneg %p42
      $region18: #{usgan_forward.2} parent=15 // pred_check_branch
        %459 = sbr.rel (%p457) target = $region20
      $region19: #{usgan_forward.2} parent=15 // pred_region
        %p460 = scmp.lt.s32.totalorder %s22, 1
        %s461 = scalar_select %p460, %s22, 1
        %s462 = smul.addr %s461, 8
        %s463 = smul.addr %s462, 8
        %s464 = scalar_lea.vmem %s0, %s463
      $region20: #{usgan_forward.2} parent=15 // pred_fallthru
        _
      // Predicated region
      $region21: #{usgan_forward.2} parent=15 // pred_check
        %p465 = pneg %p68
      $region22: #{usgan_forward.2} parent=15 // pred_check_branch
        %467 = sbr.rel (%p465) target = $region24
      $region23: #{usgan_forward.2} parent=15 // pred_region
        %p468 = scmp.lt.s32.totalorder %s22, 1
        %s469 = scalar_select %p468, %s22, 1
        %s470 = smul.addr %s469, 8
        %s471 = smul.addr %s470, 8
        %s472 = scalar_lea.vmem %s1, %s471
      $region24: #{usgan_forward.2} parent=15 // pred_fallthru
        _
      // Predicated region
      $region25: #{usgan_forward.2} parent=15 // pred_check
        %p473 = pneg %p94
      $region26: #{usgan_forward.2} parent=15 // pred_check_branch
        %475 = sbr.rel (%p473) target = $region28
      $region27: #{usgan_forward.2} parent=15 // pred_region
        %p476 = scmp.lt.s32.totalorder %s22, 1
        %s477 = scalar_select %p476, %s22, 1
        %s478 = smul.addr %s477, 8
        %s479 = smul.addr %s478, 8
        %s480 = scalar_lea.vmem %s2, %s479
      $region28: #{usgan_forward.2} parent=15 // pred_fallthru
        _
      // Predicated region
      $region29: #{usgan_forward.2} parent=15 // pred_check
        %p481 = pneg %p120
      $region30: #{usgan_forward.2} parent=15 // pred_check_branch
        %483 = sbr.rel (%p481) target = $region32
      $region31: #{usgan_forward.2} parent=15 // pred_region
        %p484 = scmp.lt.s32.totalorder %s22, 1
        %s485 = scalar_select %p484, %s22, 1
        %s486 = smul.addr %s485, 4
        %s487 = scalar_lea.vmem %s3, %s486
      $region32: #{usgan_forward.2} parent=15 // pred_fallthru
        _
      // Predicated region
      $region33: #{usgan_forward.2} parent=15 // pred_check
        %p488 = pneg %p146
      $region34: #{usgan_forward.2} parent=15 // pred_check_branch
        %490 = sbr.rel (%p488) target = $region36
      $region35: #{usgan_forward.2} parent=15 // pred_region
        %p491 = scmp.lt.s32.totalorder %s22, 1
        %s492 = scalar_select %p491, %s22, 1
        %s493 = scalar_lea.vmem %s4, %s492
      $region36: #{usgan_forward.2} parent=15 // pred_fallthru
        _
      // Predicated region
      $region37: #{usgan_forward.2} parent=15 // pred_check
        %p494 = pneg %p172
      $region38: #{usgan_forward.2} parent=15 // pred_check_branch
        %496 = sbr.rel (%p494) target = $region40
      $region39: #{usgan_forward.2} parent=15 // pred_region
        %p497 = scmp.lt.s32.totalorder %s22, 1
        %s498 = scalar_select %p497, %s22, 1
        %s499 = smul.addr %s498, 8
        %s500 = scalar_lea.vmem %s5, %s499
      $region40: #{usgan_forward.2} parent=15 // pred_fallthru
        _
      // Predicated region
      $region41: #{usgan_forward.2} parent=15 // pred_check
        %p501 = pneg %p198
      $region42: #{usgan_forward.2} parent=15 // pred_check_branch
        %503 = sbr.rel (%p501) target = $region44
      $region43: #{usgan_forward.2} parent=15 // pred_region
        %p504 = scmp.lt.s32.totalorder %s22, 1
        %s505 = scalar_select %p504, %s22, 1
        %s506 = scalar_lea.vmem %s6, %s505
      $region44: #{usgan_forward.2} parent=15 // pred_fallthru
        _
      // Predicated region
      $region45: #{usgan_forward.2} parent=15 // pred_check
        %p507 = pneg %p224
      $region46: #{usgan_forward.2} parent=15 // pred_check_branch
        %509 = sbr.rel (%p507) target = $region48
      $region47: #{usgan_forward.2} parent=15 // pred_region
        %p510 = scmp.lt.s32.totalorder %s22, 1
        %s511 = scalar_select %p510, %s22, 1
        %s512 = smul.addr %s511, 8
        %s513 = smul.addr %s512, 8
        %s514 = scalar_lea.vmem %s7, %s513
      $region48: #{usgan_forward.2} parent=15 // pred_fallthru
        _
      // Predicated region
      $region49: #{usgan_forward.2} parent=15 // pred_check
        %p515 = pneg %p250
      $region50: #{usgan_forward.2} parent=15 // pred_check_branch
        %517 = sbr.rel (%p515) target = $region52
      $region51: #{usgan_forward.2} parent=15 // pred_region
        %p518 = scmp.lt.s32.totalorder %s22, 1
        %s519 = scalar_select %p518, %s22, 1
        %s520 = smul.addr %s519, 2
        %s521 = scalar_lea.vmem %s8, %s520
      $region52: #{usgan_forward.2} parent=15 // pred_fallthru
        _
      // Predicated region
      $region53: #{usgan_forward.2} parent=15 // pred_check
        %p522 = pneg %p276
      $region54: #{usgan_forward.2} parent=15 // pred_check_branch
        %524 = sbr.rel (%p522) target = $region56
      $region55: #{usgan_forward.2} parent=15 // pred_region
        %p525 = scmp.lt.s32.totalorder %s22, 1
        %s526 = scalar_select %p525, %s22, 1
        %s527 = smul.addr %s526, 4
        %s528 = scalar_lea.vmem %s9, %s527
      $region56: #{usgan_forward.2} parent=15 // pred_fallthru
        _
      // Predicated region
      $region57: #{usgan_forward.2} parent=15 // pred_check
        %p529 = pneg %p302
      $region58: #{usgan_forward.2} parent=15 // pred_check_branch
        %531 = sbr.rel (%p529) target = $region60
      $region59: #{usgan_forward.2} parent=15 // pred_region
        %p532 = scmp.lt.s32.totalorder %s22, 1
        %s533 = scalar_select %p532, %s22, 1
        %s534 = scalar_lea.vmem %s10, %s533
      $region60: #{usgan_forward.2} parent=15 // pred_fallthru
        _
      // Predicated region
      $region61: #{usgan_forward.2} parent=15 // pred_check
        %p535 = pneg %p328
      $region62: #{usgan_forward.2} parent=15 // pred_check_branch
        %537 = sbr.rel (%p535) target = $region64
      $region63: #{usgan_forward.2} parent=15 // pred_region
        %p538 = scmp.lt.s32.totalorder %s22, 1
        %s539 = scalar_select %p538, %s22, 1
        %s540 = smul.addr %s539, 4
        %s541 = scalar_lea.vmem %s11, %s540
      $region64: #{usgan_forward.2} parent=15 // pred_fallthru
        _
      // Predicated region
      $region65: #{usgan_forward.2} parent=15 // pred_check
        %p542 = pneg %p354
      $region66: #{usgan_forward.2} parent=15 // pred_check_branch
        %544 = sbr.rel (%p542) target = $region68
      $region67: #{usgan_forward.2} parent=15 // pred_region
        %p545 = scmp.lt.s32.totalorder %s22, 1
        %s546 = scalar_select %p545, %s22, 1
        %s547 = scalar_lea.vmem %s12, %s546
      $region68: #{usgan_forward.2} parent=15 // pred_fallthru
        _
      // Predicated region
      $region69: #{usgan_forward.2} parent=15 // pred_check
        %p548 = pneg %p380
      $region70: #{usgan_forward.2} parent=15 // pred_check_branch
        %550 = sbr.rel (%p548) target = $region72
      $region71: #{usgan_forward.2} parent=15 // pred_region
        %p551 = scmp.lt.s32.totalorder %s22, 1
        %s552 = scalar_select %p551, %s22, 1
        %s553 = smul.addr %s552, 4
        %s554 = scalar_lea.vmem %s13, %s553
      $region72: #{usgan_forward.2} parent=15 // pred_fallthru
        _
    $region16: #{usgan_forward.2} parent=5 // pred_fallthru
      _
    %p555 = scmp.le.s32.totalorder 1, %s22
    %p556 = scmp.lt.s32.totalorder %s22, 3
    %p557 = pnand %p555, %p556
    %p558 = pneg %p557
    // Predicated region
    $region73: #{usgan_forward.2} parent=5 // pred_check
      _
    $region74: #{usgan_forward.2} parent=5 // pred_check_branch
      %560 = sbr.rel (%p557) target = $region76
    $region75: #{usgan_forward.2} parent=5 // pred_region
      %s561 = ssub.s32 %s22, 1
      %p562 = scmp.lt.s32.totalorder %s27, 1
      %s563 = scalar_select %p562, %s27, 1
      %s564 = smul.addr %s563, 8
      %s565 = smul.addr %s564, 8
      %s566 = scalar_lea.vmem %s0, %s565
      %p567 = pneg %p48
      %p568 = pneg %p45
      %p569 = scmp.lt.s32.totalorder %s27, 1
      %s570 = scalar_select %p569, %s27, 1
      %s571 = smul.addr %s570, 8
      %s572 = smul.addr %s571, 8
      %s573 = scalar_lea.vmem %s1, %s572
      %p574 = pneg %p74
      %p575 = pneg %p71
      %p576 = scmp.lt.s32.totalorder %s27, 1
      %s577 = scalar_select %p576, %s27, 1
      %s578 = smul.addr %s577, 8
      %s579 = smul.addr %s578, 8
      %s580 = scalar_lea.vmem %s2, %s579
      %p581 = pneg %p100
      %p582 = pneg %p97
      %p583 = scmp.lt.s32.totalorder %s27, 1
      %s584 = scalar_select %p583, %s27, 1
      %s585 = smul.addr %s584, 4
      %s586 = scalar_lea.vmem %s3, %s585
      %p587 = pneg %p126
      %p588 = pneg %p123
      %p589 = scmp.lt.s32.totalorder %s27, 1
      %s590 = scalar_select %p589, %s27, 1
      %s591 = scalar_lea.vmem %s4, %s590
      %p592 = pneg %p152
      %p593 = pneg %p149
      %p594 = scmp.lt.s32.totalorder %s27, 1
      %s595 = scalar_select %p594, %s27, 1
      %s596 = smul.addr %s595, 8
      %s597 = scalar_lea.vmem %s5, %s596
      %p598 = pneg %p178
      %p599 = pneg %p175
      %p600 = scmp.lt.s32.totalorder %s27, 1
      %s601 = scalar_select %p600, %s27, 1
      %s602 = scalar_lea.vmem %s6, %s601
      %p603 = pneg %p204
      %p604 = pneg %p201
      %p605 = scmp.lt.s32.totalorder %s27, 1
      %s606 = scalar_select %p605, %s27, 1
      %s607 = smul.addr %s606, 8
      %s608 = smul.addr %s607, 8
      %s609 = scalar_lea.vmem %s7, %s608
      %p610 = pneg %p230
      %p611 = pneg %p227
      %p612 = scmp.lt.s32.totalorder %s27, 1
      %s613 = scalar_select %p612, %s27, 1
      %s614 = smul.addr %s613, 2
      %s615 = scalar_lea.vmem %s8, %s614
      %p616 = pneg %p256
      %p617 = pneg %p253
      %p618 = scmp.lt.s32.totalorder %s27, 1
      %s619 = scalar_select %p618, %s27, 1
      %s620 = smul.addr %s619, 4
      %s621 = scalar_lea.vmem %s9, %s620
      %p622 = pneg %p282
      %p623 = pneg %p279
      %p624 = scmp.lt.s32.totalorder %s27, 1
      %s625 = scalar_select %p624, %s27, 1
      %s626 = scalar_lea.vmem %s10, %s625
      %p627 = pneg %p308
      %p628 = pneg %p305
      %p629 = scmp.lt.s32.totalorder %s27, 1
      %s630 = scalar_select %p629, %s27, 1
      %s631 = smul.addr %s630, 4
      %s632 = scalar_lea.vmem %s11, %s631
      %p633 = pneg %p334
      %p634 = pneg %p331
      %p635 = scmp.lt.s32.totalorder %s27, 1
      %s636 = scalar_select %p635, %s27, 1
      %s637 = scalar_lea.vmem %s12, %s636
      %p638 = pneg %p360
      %p639 = pneg %p357
      %p640 = scmp.lt.s32.totalorder %s27, 1
      %s641 = scalar_select %p640, %s27, 1
      %s642 = smul.addr %s641, 4
      %s643 = scalar_lea.vmem %s13, %s642
      %p644 = pneg %p386
      %p645 = pneg %p383
      %p646 = pneg %p412
      %p647 = pneg %p409
      %p648 = scmp.lt.s32.totalorder %s27, 1
      %s649 = scalar_select %p648, %s27, 1
      %s650 = smul.addr %s649, 8
      %s651 = smul.addr %s650, 8
      %s652 = scalar_lea.vmem %s14, %s651
      %p653 = pneg %p438
      %p654 = pneg %p435
      %p655 = scmp.lt.s32.totalorder %s27, 1
      %s656 = scalar_select %p655, %s27, 1
      %s657 = smul.addr %s656, 8
      %s658 = smul.addr %s657, 8
      %s659 = scalar_lea.vmem %s15, %s658
      %p660 = scmp.lt.s32.totalorder %s27, 1
      %s661 = scalar_select %p660, %s27, 1
      %s662 = smul.addr %s661, 8
      %s663 = smul.addr %s662, 8
      %s664 = scalar_lea.vmem %s0, %s663
      %p665 = scmp.lt.s32.totalorder %s27, 1
      %s666 = scalar_select %p665, %s27, 1
      %s667 = smul.addr %s666, 8
      %s668 = smul.addr %s667, 8
      %s669 = scalar_lea.vmem %s1, %s668
      %p670 = scmp.lt.s32.totalorder %s27, 1
      %s671 = scalar_select %p670, %s27, 1
      %s672 = smul.addr %s671, 8
      %s673 = smul.addr %s672, 8
      %s674 = scalar_lea.vmem %s2, %s673
      %p675 = scmp.lt.s32.totalorder %s27, 1
      %s676 = scalar_select %p675, %s27, 1
      %s677 = smul.addr %s676, 4
      %s678 = scalar_lea.vmem %s3, %s677
      %p679 = scmp.lt.s32.totalorder %s27, 1
      %s680 = scalar_select %p679, %s27, 1
      %s681 = scalar_lea.vmem %s4, %s680
      %p682 = scmp.lt.s32.totalorder %s27, 1
      %s683 = scalar_select %p682, %s27, 1
      %s684 = smul.addr %s683, 8
      %s685 = scalar_lea.vmem %s5, %s684
      %p686 = scmp.lt.s32.totalorder %s27, 1
      %s687 = scalar_select %p686, %s27, 1
      %s688 = scalar_lea.vmem %s6, %s687
      %p689 = scmp.lt.s32.totalorder %s27, 1
      %s690 = scalar_select %p689, %s27, 1
      %s691 = smul.addr %s690, 8
      %s692 = smul.addr %s691, 8
      %s693 = scalar_lea.vmem %s7, %s692
      %p694 = scmp.lt.s32.totalorder %s27, 1
      %s695 = scalar_select %p694, %s27, 1
      %s696 = smul.addr %s695, 2
      %s697 = scalar_lea.vmem %s8, %s696
      %p698 = scmp.lt.s32.totalorder %s27, 1
      %s699 = scalar_select %p698, %s27, 1
      %s700 = smul.addr %s699, 4
      %s701 = scalar_lea.vmem %s9, %s700
      %p702 = scmp.lt.s32.totalorder %s27, 1
      %s703 = scalar_select %p702, %s27, 1
      %s704 = scalar_lea.vmem %s10, %s703
      %p705 = scmp.lt.s32.totalorder %s27, 1
      %s706 = scalar_select %p705, %s27, 1
      %s707 = smul.addr %s706, 4
      %s708 = scalar_lea.vmem %s11, %s707
      %p709 = scmp.lt.s32.totalorder %s27, 1
      %s710 = scalar_select %p709, %s27, 1
      %s711 = scalar_lea.vmem %s12, %s710
      %p712 = scmp.lt.s32.totalorder %s27, 1
      %s713 = scalar_select %p712, %s27, 1
      %s714 = smul.addr %s713, 4
      %s715 = scalar_lea.vmem %s13, %s714
      %p716 = scmp.lt.s32.totalorder %s27, 1
      %s717 = scalar_select %p716, %s27, 1
      %s718 = smul.addr %s717, 8
      %s719 = smul.addr %s718, 8
      %s720 = scalar_lea.vmem %s14, %s719
      %p721 = scmp.lt.s32.totalorder %s27, 1
      %s722 = scalar_select %p721, %s27, 1
      %s723 = smul.addr %s722, 8
      %s724 = smul.addr %s723, 8
      %s725 = scalar_lea.vmem %s15, %s724
      %v726 = vld [vmem:[%s664] sm:$0xff]
      %v727 = vld [vmem:[%s664 + $0x8] sm:$0xff]
      %v728 = vld [vmem:[%s664 + $0x10] sm:$0xff]
      %v729 = vld [vmem:[%s664 + $0x18] sm:$0xff]
      %v730 = vld [vmem:[%s664 + $0x20] sm:$0xff]
      %v731 = vld [vmem:[%s664 + $0x28] sm:$0xff]
      %v732 = vld [vmem:[%s664 + $0x30] sm:$0xff]
      %v733 = vld [vmem:[%s664 + $0x38] sm:$0xff]
      %v734 = vld [vmem:[%s669] sm:$0xff]
      %v735 = vld [vmem:[%s669 + $0x8] sm:$0xff]
      %v736 = vld [vmem:[%s669 + $0x10] sm:$0xff]
      %v737 = vld [vmem:[%s669 + $0x18] sm:$0xff]
      %v738 = vld [vmem:[%s669 + $0x20] sm:$0xff]
      %v739 = vld [vmem:[%s669 + $0x28] sm:$0xff]
      %v740 = vld [vmem:[%s669 + $0x30] sm:$0xff]
      %v741 = vld [vmem:[%s669 + $0x38] sm:$0xff]
      %v742 = vld [vmem:[%s674] sm:$0xff]
      %v743 = vld [vmem:[%s674 + $0x8] sm:$0xff]
      %v744 = vld [vmem:[%s674 + $0x10] sm:$0xff]
      %v745 = vld [vmem:[%s674 + $0x18] sm:$0xff]
      %v746 = vld [vmem:[%s674 + $0x20] sm:$0xff]
      %v747 = vld [vmem:[%s674 + $0x28] sm:$0xff]
      %v748 = vld [vmem:[%s674 + $0x30] sm:$0xff]
      %v749 = vld [vmem:[%s674 + $0x38] sm:$0xff]
      %v750 = vld [vmem:[%s678] sm:$0xf]
      %v751 = vld [vmem:[%s681] sm:$0x1]
      %v752 = vld [vmem:[%s685] sm:$0xff]
      %v753 = vld [vmem:[%s688] sm:$0x1]
      %v754 = vld [vmem:[%s693] sm:$0xff]
      %v755 = vld [vmem:[%s693 + $0x8] sm:$0xff]
      %v756 = vld [vmem:[%s693 + $0x10] sm:$0xff]
      %v757 = vld [vmem:[%s693 + $0x18] sm:$0xff]
      %v758 = vld [vmem:[%s693 + $0x20] sm:$0xff]
      %v759 = vld [vmem:[%s693 + $0x28] sm:$0xff]
      %v760 = vld [vmem:[%s693 + $0x30] sm:$0xff]
      %v761 = vld [vmem:[%s693 + $0x38] sm:$0xff]
      %v762 = vld [vmem:[%s697] sm:$0x3]
      %v763 = vld [vmem:[%s701] sm:$0xf]
      %v764 = vld [vmem:[%s704] sm:$0x1]
      %v765 = vld [vmem:[%s708] sm:$0xf]
      %v766 = vld [vmem:[%s711] sm:$0x1]
      %v767 = vld [vmem:[%s715] sm:$0xf]
      %v769 = vperm.slane %v751, 0
      %vm771 = vcmask 31744
      %v773 = vsel %vm771, %v742, 0
      %v776 = vsel %vm771, %v743, 0
      %v779 = vsel %vm771, %v744, 0
      %v782 = vsel %vm771, %v745, 0
      %v785 = vsel %vm771, %v746, 0
      %v788 = vsel %vm771, %v747, 0
      %v791 = vsel %vm771, %v748, 0
      %v794 = vsel %vm771, %v749, 0
      %vm796 = vcmask 1043456
      %v798 = vsel %vm796, %v750, 0
      %800 = vmatpush.msra.mxu0 0.0
      %801 = vmatpush.msra.mxu0 0.0
      %802 = vmatpush.msra.mxu0 0.0
      %803 = vmatpush.msra.mxu0 0.0
      %804 = vmatpush.msra.mxu0 0.0
      %805 = vmatpush.msra.mxu0 0.0
      %806 = vmatpush.msra.mxu0 0.0
      %807 = vmatpush.msra.mxu0 0.0
      %808 = vmatpush.msra.mxu0 0.0
      %809 = vmatpush.msra.mxu0 0.0
      %810 = vmatpush.msra.mxu0 0.0
      %811 = vmatpush.msra.mxu0 0.0
      %812 = vmatpush.msra.mxu0 0.0
      %813 = vmatpush.msra.mxu0 0.0
      %814 = vmatpush.msra.mxu0 0.0
      %815 = vmatpush.msra.mxu0 %v798
      %816 = vmatmul.f32.gmra.mxu0 %v773
      %v817 = vpop.f32.mrf.mxu0
      %v818 = vadd.f32 %v769, %v817
      %819 = vmatmul.f32.gmra.mxu0 %v776
      %v820 = vpop.f32.mrf.mxu0
      %v821 = vadd.f32 %v769, %v820
      %822 = vmatmul.f32.gmra.mxu0 %v779
      %v823 = vpop.f32.mrf.mxu0
      %v824 = vadd.f32 %v769, %v823
      %825 = vmatmul.f32.gmra.mxu0 %v782
      %v826 = vpop.f32.mrf.mxu0
      %v827 = vadd.f32 %v769, %v826
      %828 = vmatmul.f32.gmra.mxu0 %v785
      %v829 = vpop.f32.mrf.mxu0
      %v830 = vadd.f32 %v769, %v829
      %831 = vmatmul.f32.gmra.mxu0 %v788
      %v832 = vpop.f32.mrf.mxu0
      %v833 = vadd.f32 %v769, %v832
      %834 = vmatmul.f32.gmra.mxu0 %v791
      %v835 = vpop.f32.mrf.mxu0
      %v836 = vadd.f32 %v769, %v835
      %837 = vmatmul.f32.gmra.mxu0 %v794
      %v838 = vpop.f32.mrf.mxu0
      %v839 = vadd.f32 %v769, %v838
      %840 = vdwg.mxu0
      %v841 = vmax.f32 %v818, 0.0
      %v842 = vmax.f32 %v821, 0.0
      %v843 = vmax.f32 %v824, 0.0
      %v844 = vmax.f32 %v827, 0.0
      %v845 = vmax.f32 %v830, 0.0
      %v846 = vmax.f32 %v833, 0.0
      %v847 = vmax.f32 %v836, 0.0
      %v848 = vmax.f32 %v839, 0.0
      %v849 = vsub.f32 0.0, %v841
      %v850 = vsub.f32 0.0, %v842
      %v851 = vsub.f32 0.0, %v843
      %v852 = vsub.f32 0.0, %v844
      %v853 = vsub.f32 0.0, %v845
      %v854 = vsub.f32 0.0, %v846
      %v855 = vsub.f32 0.0, %v847
      %v856 = vsub.f32 0.0, %v848
      %v857 = vmul.f32 %v849, 1.442695
      %v858 = vpow.pop %v857
      %v859 = vmul.f32 %v850, 1.442695
      %v860 = vpow.pop %v859
      %v861 = vmul.f32 %v851, 1.442695
      %v862 = vpow.pop %v861
      %v863 = vmul.f32 %v852, 1.442695
      %v864 = vpow.pop %v863
      %v865 = vmul.f32 %v853, 1.442695
      %v866 = vpow.pop %v865
      %v867 = vmul.f32 %v854, 1.442695
      %v868 = vpow.pop %v867
      %v869 = vmul.f32 %v855, 1.442695
      %v870 = vpow.pop %v869
      %v871 = vmul.f32 %v856, 1.442695
      %v872 = vpow.pop %v871
      %881 = vrot.lane.b32.xlu0 %v858, 96
      %v882 = vpop.permute.xlu0 %881
      %883 = vrot.lane.b32.xlu0 %v860, 96
      %v884 = vpop.permute.xlu0 %883
      %885 = vrot.lane.b32.xlu0 %v862, 96
      %v886 = vpop.permute.xlu0 %885
      %887 = vrot.lane.b32.xlu0 %v864, 96
      %v888 = vpop.permute.xlu0 %887
      %889 = vrot.lane.b32.xlu0 %v866, 96
      %v890 = vpop.permute.xlu0 %889
      %891 = vrot.lane.b32.xlu0 %v868, 96
      %v892 = vpop.permute.xlu0 %891
      %893 = vrot.lane.b32.xlu0 %v870, 96
      %v894 = vpop.permute.xlu0 %893
      %895 = vrot.lane.b32.xlu0 %v872, 96
      %v896 = vpop.permute.xlu0 %895
      %913 = vrot.lane.b32.xlu0 %v734, 4
      %v914 = vpop.permute.xlu0 %913
      %915 = vrot.lane.b32.xlu0 %v735, 4
      %v916 = vpop.permute.xlu0 %915
      %917 = vrot.lane.b32.xlu0 %v736, 4
      %v918 = vpop.permute.xlu0 %917
      %919 = vrot.lane.b32.xlu0 %v737, 4
      %v920 = vpop.permute.xlu0 %919
      %921 = vrot.lane.b32.xlu0 %v738, 4
      %v922 = vpop.permute.xlu0 %921
      %923 = vrot.lane.b32.xlu0 %v739, 4
      %v924 = vpop.permute.xlu0 %923
      %925 = vrot.lane.b32.xlu0 %v740, 4
      %v926 = vpop.permute.xlu0 %925
      %927 = vrot.lane.b32.xlu0 %v741, 4
      %v928 = vpop.permute.xlu0 %927
      %v937 = vsel %vm771, %v882, %v914
      %v938 = vsel %vm771, %v884, %v916
      %v939 = vsel %vm771, %v886, %v918
      %v940 = vsel %vm771, %v888, %v920
      %v941 = vsel %vm771, %v890, %v922
      %v942 = vsel %vm771, %v892, %v924
      %v943 = vsel %vm771, %v894, %v926
      %v944 = vsel %vm771, %v896, %v928
      %v946 = vperm.slane %v753, 0
      %vm948 = vcmask 64512
      %v950 = vsel %vm948, %v937, 0
      %v953 = vsel %vm948, %v938, 0
      %v956 = vsel %vm948, %v939, 0
      %v959 = vsel %vm948, %v940, 0
      %v962 = vsel %vm948, %v941, 0
      %v965 = vsel %vm948, %v942, 0
      %v968 = vsel %vm948, %v943, 0
      %v971 = vsel %vm948, %v944, 0
      %973 = vmatpush.msra.mxu0 0.0
      %974 = vmatpush.msra.mxu0 0.0
      %975 = vmatpush.msra.mxu0 0.0
      %976 = vmatpush.msra.mxu0 0.0
      %977 = vmatpush.msra.mxu0 0.0
      %978 = vmatpush.msra.mxu0 0.0
      %979 = vmatpush.msra.mxu0 0.0
      %980 = vmatpush.msra.mxu0 0.0
      %981 = vmatpush.msra.mxu0 0.0
      %982 = vmatpush.msra.mxu0 0.0
      %983 = vmatpush.msra.mxu0 0.0
      %984 = vmatpush.msra.mxu0 0.0
      %985 = vmatpush.msra.mxu0 0.0
      %986 = vmatpush.msra.mxu0 0.0
      %987 = vmatpush.msra.mxu0 0.0
      %988 = vmatpush.msra.mxu0 %v752
      %989 = vmatmul.f32.gmra.mxu0 %v950
      %v990 = vpop.f32.mrf.mxu0
      %v991 = vadd.f32 %v946, %v990
      %992 = vmatmul.f32.gmra.mxu0 %v953
      %v993 = vpop.f32.mrf.mxu0
      %v994 = vadd.f32 %v946, %v993
      %995 = vmatmul.f32.gmra.mxu0 %v956
      %v996 = vpop.f32.mrf.mxu0
      %v997 = vadd.f32 %v946, %v996
      %998 = vmatmul.f32.gmra.mxu0 %v959
      %v999 = vpop.f32.mrf.mxu0
      %v1000 = vadd.f32 %v946, %v999
      %1001 = vmatmul.f32.gmra.mxu0 %v962
      %v1002 = vpop.f32.mrf.mxu0
      %v1003 = vadd.f32 %v946, %v1002
      %1004 = vmatmul.f32.gmra.mxu0 %v965
      %v1005 = vpop.f32.mrf.mxu0
      %v1006 = vadd.f32 %v946, %v1005
      %1007 = vmatmul.f32.gmra.mxu0 %v968
      %v1008 = vpop.f32.mrf.mxu0
      %v1009 = vadd.f32 %v946, %v1008
      %1010 = vmatmul.f32.gmra.mxu0 %v971
      %v1011 = vpop.f32.mrf.mxu0
      %v1012 = vadd.f32 %v946, %v1011
      %1013 = vdwg.mxu0
      %v1014 = vxor.u32 %v991, 2147483648
      %v1015 = vxor.u32 %v994, 2147483648
      %v1016 = vxor.u32 %v997, 2147483648
      %v1017 = vxor.u32 %v1000, 2147483648
      %v1018 = vxor.u32 %v1003, 2147483648
      %v1019 = vxor.u32 %v1006, 2147483648
      %v1020 = vxor.u32 %v1009, 2147483648
      %v1021 = vxor.u32 %v1012, 2147483648
      %v1022 = vmul.f32 %v1014, 1.442695
      %v1023 = vpow.pop %v1022
      %v1024 = vmul.f32 %v1015, 1.442695
      %v1025 = vpow.pop %v1024
      %v1026 = vmul.f32 %v1016, 1.442695
      %v1027 = vpow.pop %v1026
      %v1028 = vmul.f32 %v1017, 1.442695
      %v1029 = vpow.pop %v1028
      %v1030 = vmul.f32 %v1018, 1.442695
      %v1031 = vpow.pop %v1030
      %v1032 = vmul.f32 %v1019, 1.442695
      %v1033 = vpow.pop %v1032
      %v1034 = vmul.f32 %v1020, 1.442695
      %v1035 = vpow.pop %v1034
      %v1036 = vmul.f32 %v1021, 1.442695
      %v1037 = vpow.pop %v1036
      %v1038 = vadd.f32 %v1023, 1.0
      %v1039 = vadd.f32 %v1025, 1.0
      %v1040 = vadd.f32 %v1027, 1.0
      %v1041 = vadd.f32 %v1029, 1.0
      %v1042 = vadd.f32 %v1031, 1.0
      %v1043 = vadd.f32 %v1033, 1.0
      %v1044 = vadd.f32 %v1035, 1.0
      %v1045 = vadd.f32 %v1037, 1.0
      %v1046 = vrcp.pop %v1038
      %v1047 = vmul.f32 %v1038, %v1046
      %v1048 = vsub.f32 1.0, %v1047
      %v1049 = vmul.f32 %v1046, %v1048
      %v1050 = vadd.f32 %v1046, %v1049
      %vm1051 = vweird.f32 %v1038
      %vm1052 = vweird.f32 %v1046
      %vm1053 = vmor %vm1051, %vm1052
      %v1054 = vsel %vm1053, %v1046, %v1050
      %v1055 = vand.u32 2147483647, %v1038
      %vm1056 = vcmp.eq.f32.partialorder %v1055, 8.507059e+37
      %v1057 = vand.u32 %v1038, 2147483648
      %v1058 = vor.u32 1.1754944e-38, %v1057
      %v1059 = vsel %vm1056, %v1058, %v1054
      %v1060 = vmul.f32 1.0, %v1059
      %v1061 = vrcp.pop %v1039
      %v1062 = vmul.f32 %v1039, %v1061
      %v1063 = vsub.f32 1.0, %v1062
      %v1064 = vmul.f32 %v1061, %v1063
      %v1065 = vadd.f32 %v1061, %v1064
      %vm1066 = vweird.f32 %v1039
      %vm1067 = vweird.f32 %v1061
      %vm1068 = vmor %vm1066, %vm1067
      %v1069 = vsel %vm1068, %v1061, %v1065
      %v1070 = vand.u32 2147483647, %v1039
      %vm1071 = vcmp.eq.f32.partialorder %v1070, 8.507059e+37
      %v1072 = vand.u32 %v1039, 2147483648
      %v1073 = vor.u32 1.1754944e-38, %v1072
      %v1074 = vsel %vm1071, %v1073, %v1069
      %v1075 = vmul.f32 1.0, %v1074
      %v1076 = vrcp.pop %v1040
      %v1077 = vmul.f32 %v1040, %v1076
      %v1078 = vsub.f32 1.0, %v1077
      %v1079 = vmul.f32 %v1076, %v1078
      %v1080 = vadd.f32 %v1076, %v1079
      %vm1081 = vweird.f32 %v1040
      %vm1082 = vweird.f32 %v1076
      %vm1083 = vmor %vm1081, %vm1082
      %v1084 = vsel %vm1083, %v1076, %v1080
      %v1085 = vand.u32 2147483647, %v1040
      %vm1086 = vcmp.eq.f32.partialorder %v1085, 8.507059e+37
      %v1087 = vand.u32 %v1040, 2147483648
      %v1088 = vor.u32 1.1754944e-38, %v1087
      %v1089 = vsel %vm1086, %v1088, %v1084
      %v1090 = vmul.f32 1.0, %v1089
      %v1091 = vrcp.pop %v1041
      %v1092 = vmul.f32 %v1041, %v1091
      %v1093 = vsub.f32 1.0, %v1092
      %v1094 = vmul.f32 %v1091, %v1093
      %v1095 = vadd.f32 %v1091, %v1094
      %vm1096 = vweird.f32 %v1041
      %vm1097 = vweird.f32 %v1091
      %vm1098 = vmor %vm1096, %vm1097
      %v1099 = vsel %vm1098, %v1091, %v1095
      %v1100 = vand.u32 2147483647, %v1041
      %vm1101 = vcmp.eq.f32.partialorder %v1100, 8.507059e+37
      %v1102 = vand.u32 %v1041, 2147483648
      %v1103 = vor.u32 1.1754944e-38, %v1102
      %v1104 = vsel %vm1101, %v1103, %v1099
      %v1105 = vmul.f32 1.0, %v1104
      %v1106 = vrcp.pop %v1042
      %v1107 = vmul.f32 %v1042, %v1106
      %v1108 = vsub.f32 1.0, %v1107
      %v1109 = vmul.f32 %v1106, %v1108
      %v1110 = vadd.f32 %v1106, %v1109
      %vm1111 = vweird.f32 %v1042
      %vm1112 = vweird.f32 %v1106
      %vm1113 = vmor %vm1111, %vm1112
      %v1114 = vsel %vm1113, %v1106, %v1110
      %v1115 = vand.u32 2147483647, %v1042
      %vm1116 = vcmp.eq.f32.partialorder %v1115, 8.507059e+37
      %v1117 = vand.u32 %v1042, 2147483648
      %v1118 = vor.u32 1.1754944e-38, %v1117
      %v1119 = vsel %vm1116, %v1118, %v1114
      %v1120 = vmul.f32 1.0, %v1119
      %v1121 = vrcp.pop %v1043
      %v1122 = vmul.f32 %v1043, %v1121
      %v1123 = vsub.f32 1.0, %v1122
      %v1124 = vmul.f32 %v1121, %v1123
      %v1125 = vadd.f32 %v1121, %v1124
      %vm1126 = vweird.f32 %v1043
      %vm1127 = vweird.f32 %v1121
      %vm1128 = vmor %vm1126, %vm1127
      %v1129 = vsel %vm1128, %v1121, %v1125
      %v1130 = vand.u32 2147483647, %v1043
      %vm1131 = vcmp.eq.f32.partialorder %v1130, 8.507059e+37
      %v1132 = vand.u32 %v1043, 2147483648
      %v1133 = vor.u32 1.1754944e-38, %v1132
      %v1134 = vsel %vm1131, %v1133, %v1129
      %v1135 = vmul.f32 1.0, %v1134
      %v1136 = vrcp.pop %v1044
      %v1137 = vmul.f32 %v1044, %v1136
      %v1138 = vsub.f32 1.0, %v1137
      %v1139 = vmul.f32 %v1136, %v1138
      %v1140 = vadd.f32 %v1136, %v1139
      %vm1141 = vweird.f32 %v1044
      %vm1142 = vweird.f32 %v1136
      %vm1143 = vmor %vm1141, %vm1142
      %v1144 = vsel %vm1143, %v1136, %v1140
      %v1145 = vand.u32 2147483647, %v1044
      %vm1146 = vcmp.eq.f32.partialorder %v1145, 8.507059e+37
      %v1147 = vand.u32 %v1044, 2147483648
      %v1148 = vor.u32 1.1754944e-38, %v1147
      %v1149 = vsel %vm1146, %v1148, %v1144
      %v1150 = vmul.f32 1.0, %v1149
      %v1151 = vrcp.pop %v1045
      %v1152 = vmul.f32 %v1045, %v1151
      %v1153 = vsub.f32 1.0, %v1152
      %v1154 = vmul.f32 %v1151, %v1153
      %v1155 = vadd.f32 %v1151, %v1154
      %vm1156 = vweird.f32 %v1045
      %vm1157 = vweird.f32 %v1151
      %vm1158 = vmor %vm1156, %vm1157
      %v1159 = vsel %vm1158, %v1151, %v1155
      %v1160 = vand.u32 2147483647, %v1045
      %vm1161 = vcmp.eq.f32.partialorder %v1160, 8.507059e+37
      %v1162 = vand.u32 %v1045, 2147483648
      %v1163 = vor.u32 1.1754944e-38, %v1162
      %v1164 = vsel %vm1161, %v1163, %v1159
      %v1165 = vmul.f32 1.0, %v1164
      %v1167 = vperm.slane %v766, 0
      %v1169 = vsel %vm771, %v734, 0
      %v1171 = vsel %vm771, %v735, 0
      %v1173 = vsel %vm771, %v736, 0
      %v1175 = vsel %vm771, %v737, 0
      %v1177 = vsel %vm771, %v738, 0
      %v1179 = vsel %vm771, %v739, 0
      %v1181 = vsel %vm771, %v740, 0
      %v1183 = vsel %vm771, %v741, 0
      %v1186 = vsel %vm796, %v765, 0
      %1188 = vmatpush.msra.mxu0 0.0
      %1189 = vmatpush.msra.mxu0 0.0
      %1190 = vmatpush.msra.mxu0 0.0
      %1191 = vmatpush.msra.mxu0 0.0
      %1192 = vmatpush.msra.mxu0 0.0
      %1193 = vmatpush.msra.mxu0 0.0
      %1194 = vmatpush.msra.mxu0 0.0
      %1195 = vmatpush.msra.mxu0 0.0
      %1196 = vmatpush.msra.mxu0 0.0
      %1197 = vmatpush.msra.mxu0 0.0
      %1198 = vmatpush.msra.mxu0 0.0
      %1199 = vmatpush.msra.mxu0 0.0
      %1200 = vmatpush.msra.mxu0 0.0
      %1201 = vmatpush.msra.mxu0 0.0
      %1202 = vmatpush.msra.mxu0 0.0
      %1203 = vmatpush.msra.mxu0 %v1186
      %1204 = vmatmul.f32.gmra.mxu0 %v1169
      %v1205 = vpop.f32.mrf.mxu0
      %v1206 = vadd.f32 %v1167, %v1205
      %1207 = vmatmul.f32.gmra.mxu0 %v1171
      %v1208 = vpop.f32.mrf.mxu0
      %v1209 = vadd.f32 %v1167, %v1208
      %1210 = vmatmul.f32.gmra.mxu0 %v1173
      %v1211 = vpop.f32.mrf.mxu0
      %v1212 = vadd.f32 %v1167, %v1211
      %1213 = vmatmul.f32.gmra.mxu0 %v1175
      %v1214 = vpop.f32.mrf.mxu0
      %v1215 = vadd.f32 %v1167, %v1214
      %1216 = vmatmul.f32.gmra.mxu0 %v1177
      %v1217 = vpop.f32.mrf.mxu0
      %v1218 = vadd.f32 %v1167, %v1217
      %1219 = vmatmul.f32.gmra.mxu0 %v1179
      %v1220 = vpop.f32.mrf.mxu0
      %v1221 = vadd.f32 %v1167, %v1220
      %1222 = vmatmul.f32.gmra.mxu0 %v1181
      %v1223 = vpop.f32.mrf.mxu0
      %v1224 = vadd.f32 %v1167, %v1223
      %1225 = vmatmul.f32.gmra.mxu0 %v1183
      %v1226 = vpop.f32.mrf.mxu0
      %1227 = vdwg.mxu0
      %v1229 = vperm.slane %v762, 0
      %v1230 = vperm.slane %v762, 1
      %v1234 = vperm.slane %v764, 0
      %v1236 = vmul.f32 %v858, 0.0
      %vm1237 = vcmask 261120
      %v1239 = vsel %vm1237, %v1236, 0
      %1241 = vmatpush.msra.mxu0 0.0
      %1242 = vmatpush.msra.mxu0 0.0
      %1243 = vmatpush.msra.mxu0 0.0
      %1244 = vmatpush.msra.mxu0 0.0
      %1245 = vmatpush.msra.mxu0 0.0
      %1246 = vmatpush.msra.mxu0 0.0
      %1247 = vmatpush.msra.mxu0 0.0
      %1248 = vmatpush.msra.mxu0 0.0
      %1249 = vmatpush.msra.mxu0 0.0
      %1250 = vmatpush.msra.mxu0 0.0
      %1251 = vmatpush.msra.mxu0 0.0
      %1252 = vmatpush.msra.mxu0 0.0
      %1253 = vmatpush.msra.mxu0 %v760
      %1254 = vmatpush.msra.mxu0 %v758
      %1255 = vmatpush.msra.mxu0 %v756
      %1256 = vmatpush.msra.mxu0 %v754
      %1257 = vmatmul.f32.gmra.mxu0 %v1239
      %v1258 = vpop.f32.mrf.mxu0
      %v1259 = vadd.f32 %v1229, %v1258
      %1260 = vdwg.mxu0
      %1261 = vmatpush.msra.mxu0 0.0
      %1262 = vmatpush.msra.mxu0 0.0
      %1263 = vmatpush.msra.mxu0 0.0
      %1264 = vmatpush.msra.mxu0 0.0
      %1265 = vmatpush.msra.mxu0 0.0
      %1266 = vmatpush.msra.mxu0 0.0
      %1267 = vmatpush.msra.mxu0 0.0
      %1268 = vmatpush.msra.mxu0 0.0
      %1269 = vmatpush.msra.mxu0 0.0
      %1270 = vmatpush.msra.mxu0 0.0
      %1271 = vmatpush.msra.mxu0 0.0
      %1272 = vmatpush.msra.mxu0 0.0
      %1273 = vmatpush.msra.mxu0 %v761
      %1274 = vmatpush.msra.mxu0 %v759
      %1275 = vmatpush.msra.mxu0 %v757
      %1276 = vmatpush.msra.mxu0 %v755
      %1277 = vmatmul.f32.gmra.mxu0 %v1239
      %v1278 = vpop.f32.mrf.mxu0
      %v1279 = vadd.f32 %v1230, %v1278
      %1280 = vdwg.mxu0
      %v1281 = vmul.f32 %v734, %v726
      %v1282 = vsub.f32 1.0, %v734
      %v1283 = vmul.f32 %v1282, %v1259
      %v1284 = vadd.f32 %v1281, %v1283
      %v1286 = vsel %vm771, %v1284, 0
      %v1289 = vsel %vm796, %v763, 0
      %1291 = vmatpush.msra.mxu0 0.0
      %1292 = vmatpush.msra.mxu0 0.0
      %1293 = vmatpush.msra.mxu0 0.0
      %1294 = vmatpush.msra.mxu0 0.0
      %1295 = vmatpush.msra.mxu0 0.0
      %1296 = vmatpush.msra.mxu0 0.0
      %1297 = vmatpush.msra.mxu0 0.0
      %1298 = vmatpush.msra.mxu0 0.0
      %1299 = vmatpush.msra.mxu0 0.0
      %1300 = vmatpush.msra.mxu0 0.0
      %1301 = vmatpush.msra.mxu0 0.0
      %1302 = vmatpush.msra.mxu0 0.0
      %1303 = vmatpush.msra.mxu0 0.0
      %1304 = vmatpush.msra.mxu0 0.0
      %1305 = vmatpush.msra.mxu0 0.0
      %1306 = vmatpush.msra.mxu0 %v1289
      %1307 = vmatmul.f32.gmra.mxu0 %v1286
      %v1308 = vpop.f32.mrf.mxu0
      %v1309 = vadd.f32 %v1234, %v1308
      %1310 = vdwg.mxu0
      %v1311 = vmul.f32 %v1060, %v1309
      %v1312 = vsub.f32 1.0, %v1060
      %v1313 = vmul.f32 %v1312, %v1259
      %v1314 = vadd.f32 %v1311, %v1313
      %v1315 = vmul.f32 %v1282, %v1314
      %v1316 = vadd.f32 %v1281, %v1315
      %1319 = vrot.lane.b32.xlu0 %v1259, 124
      %v1320 = vpop.permute.xlu0 %1319
      %1321 = vrot.lane.b32.xlu0 %v1279, 124
      %v1322 = vpop.permute.xlu0 %1321
      %vm1323 = vcmask 1014784
      %v1324 = vsel %vm1323, %v1320, %v1322
      %v1327 = vsel %vm771, %v1316, 0
      %v1330 = vsel %vm796, %v767, 0
      %1332 = vmatpush.msra.mxu0 0.0
      %1333 = vmatpush.msra.mxu0 0.0
      %1334 = vmatpush.msra.mxu0 0.0
      %1335 = vmatpush.msra.mxu0 0.0
      %1336 = vmatpush.msra.mxu0 0.0
      %1337 = vmatpush.msra.mxu0 0.0
      %1338 = vmatpush.msra.mxu0 0.0
      %1339 = vmatpush.msra.mxu0 0.0
      %1340 = vmatpush.msra.mxu0 0.0
      %1341 = vmatpush.msra.mxu0 0.0
      %1342 = vmatpush.msra.mxu0 0.0
      %1343 = vmatpush.msra.mxu0 0.0
      %1344 = vmatpush.msra.mxu0 0.0
      %1345 = vmatpush.msra.mxu0 0.0
      %1346 = vmatpush.msra.mxu0 0.0
      %1347 = vmatpush.msra.mxu0 %v1330
      %1348 = vmatmul.f32.gmra.mxu0 %v1327
      %v1349 = vpop.f32.mrf.mxu0
      %v1350 = vadd.f32 %v1324, %v1349
      %1351 = vdwg.mxu0
      %v1352 = vadd.f32 %v1350, %v1206
      %v1353 = vxor.u32 %v1352, 2147483648
      %v1354 = vmul.f32 %v1353, 1.442695
      %v1355 = vpow.pop %v1354
      %v1356 = vadd.f32 %v1355, 1.0
      %v1357 = vrcp.pop %v1356
      %v1358 = vmul.f32 %v1356, %v1357
      %v1359 = vsub.f32 1.0, %v1358
      %v1360 = vmul.f32 %v1357, %v1359
      %v1361 = vadd.f32 %v1357, %v1360
      %vm1362 = vweird.f32 %v1356
      %vm1363 = vweird.f32 %v1357
      %vm1364 = vmor %vm1362, %vm1363
      %v1365 = vsel %vm1364, %v1357, %v1361
      %v1366 = vand.u32 2147483647, %v1356
      %vm1367 = vcmp.eq.f32.partialorder %v1366, 8.507059e+37
      %v1368 = vand.u32 %v1356, 2147483648
      %v1369 = vor.u32 1.1754944e-38, %v1368
      %v1370 = vsel %vm1367, %v1369, %v1365
      %v1371 = vmul.f32 1.0, %v1370
      %v1372 = vtanh.pop %v1352
      %v1373 = vmul.f32 %v1371, 0.0
      %1375 = vrot.lane.b32.xlu0 %v1372, 64
      %v1376 = vpop.permute.xlu0 %1375
      %v1378 = vmul.f32 %v1371, %v1376
      %1380 = vrot.lane.b32.xlu0 %v1378, 32
      %v1381 = vpop.permute.xlu0 %1380
      %v1383 = vadd.f32 %v1373, %v1381
      %v1384 = vtanh.pop %v1383
      %1386 = vrot.lane.b32.xlu0 %v1384, 64
      %v1387 = vpop.permute.xlu0 %1386
      %v1389 = vmul.f32 %v1371, %v1387
      %v1390 = vmul.f32 %v1389, %v884
      %1392 = vrot.lane.b32.xlu0 %v1390, 32
      %v1393 = vpop.permute.xlu0 %1392
      %v1394 = vsel %vm1237, %v1393, 0
      %1396 = vmatpush.msra.mxu0 0.0
      %1397 = vmatpush.msra.mxu0 0.0
      %1398 = vmatpush.msra.mxu0 0.0
      %1399 = vmatpush.msra.mxu0 0.0
      %1400 = vmatpush.msra.mxu0 0.0
      %1401 = vmatpush.msra.mxu0 0.0
      %1402 = vmatpush.msra.mxu0 0.0
      %1403 = vmatpush.msra.mxu0 0.0
      %1404 = vmatpush.msra.mxu0 0.0
      %1405 = vmatpush.msra.mxu0 0.0
      %1406 = vmatpush.msra.mxu0 0.0
      %1407 = vmatpush.msra.mxu0 0.0
      %1408 = vmatpush.msra.mxu0 %v760
      %1409 = vmatpush.msra.mxu0 %v758
      %1410 = vmatpush.msra.mxu0 %v756
      %1411 = vmatpush.msra.mxu0 %v754
      %1412 = vmatmul.f32.gmra.mxu0 %v1394
      %v1413 = vpop.f32.mrf.mxu0
      %v1414 = vadd.f32 %v1229, %v1413
      %1415 = vdwg.mxu0
      %1416 = vmatpush.msra.mxu0 0.0
      %1417 = vmatpush.msra.mxu0 0.0
      %1418 = vmatpush.msra.mxu0 0.0
      %1419 = vmatpush.msra.mxu0 0.0
      %1420 = vmatpush.msra.mxu0 0.0
      %1421 = vmatpush.msra.mxu0 0.0
      %1422 = vmatpush.msra.mxu0 0.0
      %1423 = vmatpush.msra.mxu0 0.0
      %1424 = vmatpush.msra.mxu0 0.0
      %1425 = vmatpush.msra.mxu0 0.0
      %1426 = vmatpush.msra.mxu0 0.0
      %1427 = vmatpush.msra.mxu0 0.0
      %1428 = vmatpush.msra.mxu0 %v761
      %1429 = vmatpush.msra.mxu0 %v759
      %1430 = vmatpush.msra.mxu0 %v757
      %1431 = vmatpush.msra.mxu0 %v755
      %1432 = vmatmul.f32.gmra.mxu0 %v1394
      %v1433 = vpop.f32.mrf.mxu0
      %v1434 = vadd.f32 %v1230, %v1433
      %1435 = vdwg.mxu0
      %v1436 = vmul.f32 %v735, %v727
      %v1437 = vsub.f32 1.0, %v735
      %v1438 = vmul.f32 %v1437, %v1414
      %v1439 = vadd.f32 %v1436, %v1438
      %v1441 = vsel %vm771, %v1439, 0
      %1443 = vmatpush.msra.mxu0 0.0
      %1444 = vmatpush.msra.mxu0 0.0
      %1445 = vmatpush.msra.mxu0 0.0
      %1446 = vmatpush.msra.mxu0 0.0
      %1447 = vmatpush.msra.mxu0 0.0
      %1448 = vmatpush.msra.mxu0 0.0
      %1449 = vmatpush.msra.mxu0 0.0
      %1450 = vmatpush.msra.mxu0 0.0
      %1451 = vmatpush.msra.mxu0 0.0
      %1452 = vmatpush.msra.mxu0 0.0
      %1453 = vmatpush.msra.mxu0 0.0
      %1454 = vmatpush.msra.mxu0 0.0
      %1455 = vmatpush.msra.mxu0 0.0
      %1456 = vmatpush.msra.mxu0 0.0
      %1457 = vmatpush.msra.mxu0 0.0
      %1458 = vmatpush.msra.mxu0 %v1289
      %1459 = vmatmul.f32.gmra.mxu0 %v1441
      %v1460 = vpop.f32.mrf.mxu0
      %v1461 = vadd.f32 %v1234, %v1460
      %1462 = vdwg.mxu0
      %v1463 = vmul.f32 %v1075, %v1461
      %v1464 = vsub.f32 1.0, %v1075
      %v1465 = vmul.f32 %v1464, %v1414
      %v1466 = vadd.f32 %v1463, %v1465
      %v1467 = vmul.f32 %v1437, %v1466
      %v1468 = vadd.f32 %v1436, %v1467
      %1471 = vrot.lane.b32.xlu0 %v1414, 124
      %v1472 = vpop.permute.xlu0 %1471
      %1473 = vrot.lane.b32.xlu0 %v1434, 124
      %v1474 = vpop.permute.xlu0 %1473
      %v1475 = vsel %vm1323, %v1472, %v1474
      %v1478 = vsel %vm771, %v1468, 0
      %1480 = vmatpush.msra.mxu0 0.0
      %1481 = vmatpush.msra.mxu0 0.0
      %1482 = vmatpush.msra.mxu0 0.0
      %1483 = vmatpush.msra.mxu0 0.0
      %1484 = vmatpush.msra.mxu0 0.0
      %1485 = vmatpush.msra.mxu0 0.0
      %1486 = vmatpush.msra.mxu0 0.0
      %1487 = vmatpush.msra.mxu0 0.0
      %1488 = vmatpush.msra.mxu0 0.0
      %1489 = vmatpush.msra.mxu0 0.0
      %1490 = vmatpush.msra.mxu0 0.0
      %1491 = vmatpush.msra.mxu0 0.0
      %1492 = vmatpush.msra.mxu0 0.0
      %1493 = vmatpush.msra.mxu0 0.0
      %1494 = vmatpush.msra.mxu0 0.0
      %1495 = vmatpush.msra.mxu0 %v1330
      %1496 = vmatmul.f32.gmra.mxu0 %v1478
      %v1497 = vpop.f32.mrf.mxu0
      %v1498 = vadd.f32 %v1475, %v1497
      %1499 = vdwg.mxu0
      %v1500 = vadd.f32 %v1498, %v1209
      %v1501 = vxor.u32 %v1500, 2147483648
      %v1502 = vmul.f32 %v1501, 1.442695
      %v1503 = vpow.pop %v1502
      %v1504 = vadd.f32 %v1503, 1.0
      %v1505 = vrcp.pop %v1504
      %v1506 = vmul.f32 %v1504, %v1505
      %v1507 = vsub.f32 1.0, %v1506
      %v1508 = vmul.f32 %v1505, %v1507
      %v1509 = vadd.f32 %v1505, %v1508
      %vm1510 = vweird.f32 %v1504
      %vm1511 = vweird.f32 %v1505
      %vm1512 = vmor %vm1510, %vm1511
      %v1513 = vsel %vm1512, %v1505, %v1509
      %v1514 = vand.u32 2147483647, %v1504
      %vm1515 = vcmp.eq.f32.partialorder %v1514, 8.507059e+37
      %v1516 = vand.u32 %v1504, 2147483648
      %v1517 = vor.u32 1.1754944e-38, %v1516
      %v1518 = vsel %vm1515, %v1517, %v1513
      %v1519 = vmul.f32 1.0, %v1518
      %v1520 = vtanh.pop %v1500
      %v1521 = vmul.f32 %v1519, %v1383
      %1523 = vrot.lane.b32.xlu0 %v1520, 64
      %v1524 = vpop.permute.xlu0 %1523
      %v1526 = vmul.f32 %v1519, %v1524
      %1528 = vrot.lane.b32.xlu0 %v1526, 32
      %v1529 = vpop.permute.xlu0 %1528
      %v1531 = vadd.f32 %v1521, %v1529
      %v1532 = vtanh.pop %v1531
      %1534 = vrot.lane.b32.xlu0 %v1532, 64
      %v1535 = vpop.permute.xlu0 %1534
      %v1537 = vmul.f32 %v1519, %v1535
      %v1538 = vmul.f32 %v1537, %v886
      %1540 = vrot.lane.b32.xlu0 %v1538, 32
      %v1541 = vpop.permute.xlu0 %1540
      %v1542 = vsel %vm1237, %v1541, 0
      %1544 = vmatpush.msra.mxu0 0.0
      %1545 = vmatpush.msra.mxu0 0.0
      %1546 = vmatpush.msra.mxu0 0.0
      %1547 = vmatpush.msra.mxu0 0.0
      %1548 = vmatpush.msra.mxu0 0.0
      %1549 = vmatpush.msra.mxu0 0.0
      %1550 = vmatpush.msra.mxu0 0.0
      %1551 = vmatpush.msra.mxu0 0.0
      %1552 = vmatpush.msra.mxu0 0.0
      %1553 = vmatpush.msra.mxu0 0.0
      %1554 = vmatpush.msra.mxu0 0.0
      %1555 = vmatpush.msra.mxu0 0.0
      %1556 = vmatpush.msra.mxu0 %v760
      %1557 = vmatpush.msra.mxu0 %v758
      %1558 = vmatpush.msra.mxu0 %v756
      %1559 = vmatpush.msra.mxu0 %v754
      %1560 = vmatmul.f32.gmra.mxu0 %v1542
      %v1561 = vpop.f32.mrf.mxu0
      %v1562 = vadd.f32 %v1229, %v1561
      %1563 = vdwg.mxu0
      %1564 = vmatpush.msra.mxu0 0.0
      %1565 = vmatpush.msra.mxu0 0.0
      %1566 = vmatpush.msra.mxu0 0.0
      %1567 = vmatpush.msra.mxu0 0.0
      %1568 = vmatpush.msra.mxu0 0.0
      %1569 = vmatpush.msra.mxu0 0.0
      %1570 = vmatpush.msra.mxu0 0.0
      %1571 = vmatpush.msra.mxu0 0.0
      %1572 = vmatpush.msra.mxu0 0.0
      %1573 = vmatpush.msra.mxu0 0.0
      %1574 = vmatpush.msra.mxu0 0.0
      %1575 = vmatpush.msra.mxu0 0.0
      %1576 = vmatpush.msra.mxu0 %v761
      %1577 = vmatpush.msra.mxu0 %v759
      %1578 = vmatpush.msra.mxu0 %v757
      %1579 = vmatpush.msra.mxu0 %v755
      %1580 = vmatmul.f32.gmra.mxu0 %v1542
      %v1581 = vpop.f32.mrf.mxu0
      %v1582 = vadd.f32 %v1230, %v1581
      %1583 = vdwg.mxu0
      %v1584 = vmul.f32 %v736, %v728
      %v1585 = vsub.f32 1.0, %v736
      %v1586 = vmul.f32 %v1585, %v1562
      %v1587 = vadd.f32 %v1584, %v1586
      %v1589 = vsel %vm771, %v1587, 0
      %1591 = vmatpush.msra.mxu0 0.0
      %1592 = vmatpush.msra.mxu0 0.0
      %1593 = vmatpush.msra.mxu0 0.0
      %1594 = vmatpush.msra.mxu0 0.0
      %1595 = vmatpush.msra.mxu0 0.0
      %1596 = vmatpush.msra.mxu0 0.0
      %1597 = vmatpush.msra.mxu0 0.0
      %1598 = vmatpush.msra.mxu0 0.0
      %1599 = vmatpush.msra.mxu0 0.0
      %1600 = vmatpush.msra.mxu0 0.0
      %1601 = vmatpush.msra.mxu0 0.0
      %1602 = vmatpush.msra.mxu0 0.0
      %1603 = vmatpush.msra.mxu0 0.0
      %1604 = vmatpush.msra.mxu0 0.0
      %1605 = vmatpush.msra.mxu0 0.0
      %1606 = vmatpush.msra.mxu0 %v1289
      %1607 = vmatmul.f32.gmra.mxu0 %v1589
      %v1608 = vpop.f32.mrf.mxu0
      %v1609 = vadd.f32 %v1234, %v1608
      %1610 = vdwg.mxu0
      %v1611 = vmul.f32 %v1090, %v1609
      %v1612 = vsub.f32 1.0, %v1090
      %v1613 = vmul.f32 %v1612, %v1562
      %v1614 = vadd.f32 %v1611, %v1613
      %v1615 = vmul.f32 %v1585, %v1614
      %v1616 = vadd.f32 %v1584, %v1615
      %1619 = vrot.lane.b32.xlu0 %v1562, 124
      %v1620 = vpop.permute.xlu0 %1619
      %1621 = vrot.lane.b32.xlu0 %v1582, 124
      %v1622 = vpop.permute.xlu0 %1621
      %v1623 = vsel %vm1323, %v1620, %v1622
      %v1626 = vsel %vm771, %v1616, 0
      %1628 = vmatpush.msra.mxu0 0.0
      %1629 = vmatpush.msra.mxu0 0.0
      %1630 = vmatpush.msra.mxu0 0.0
      %1631 = vmatpush.msra.mxu0 0.0
      %1632 = vmatpush.msra.mxu0 0.0
      %1633 = vmatpush.msra.mxu0 0.0
      %1634 = vmatpush.msra.mxu0 0.0
      %1635 = vmatpush.msra.mxu0 0.0
      %1636 = vmatpush.msra.mxu0 0.0
      %1637 = vmatpush.msra.mxu0 0.0
      %1638 = vmatpush.msra.mxu0 0.0
      %1639 = vmatpush.msra.mxu0 0.0
      %1640 = vmatpush.msra.mxu0 0.0
      %1641 = vmatpush.msra.mxu0 0.0
      %1642 = vmatpush.msra.mxu0 0.0
      %1643 = vmatpush.msra.mxu0 %v1330
      %1644 = vmatmul.f32.gmra.mxu0 %v1626
      %v1645 = vpop.f32.mrf.mxu0
      %v1646 = vadd.f32 %v1623, %v1645
      %1647 = vdwg.mxu0
      %v1648 = vadd.f32 %v1646, %v1212
      %v1649 = vxor.u32 %v1648, 2147483648
      %v1650 = vmul.f32 %v1649, 1.442695
      %v1651 = vpow.pop %v1650
      %v1652 = vadd.f32 %v1651, 1.0
      %v1653 = vrcp.pop %v1652
      %v1654 = vmul.f32 %v1652, %v1653
      %v1655 = vsub.f32 1.0, %v1654
      %v1656 = vmul.f32 %v1653, %v1655
      %v1657 = vadd.f32 %v1653, %v1656
      %vm1658 = vweird.f32 %v1652
      %vm1659 = vweird.f32 %v1653
      %vm1660 = vmor %vm1658, %vm1659
      %v1661 = vsel %vm1660, %v1653, %v1657
      %v1662 = vand.u32 2147483647, %v1652
      %vm1663 = vcmp.eq.f32.partialorder %v1662, 8.507059e+37
      %v1664 = vand.u32 %v1652, 2147483648
      %v1665 = vor.u32 1.1754944e-38, %v1664
      %v1666 = vsel %vm1663, %v1665, %v1661
      %v1667 = vmul.f32 1.0, %v1666
      %v1668 = vtanh.pop %v1648
      %v1669 = vmul.f32 %v1667, %v1531
      %1671 = vrot.lane.b32.xlu0 %v1668, 64
      %v1672 = vpop.permute.xlu0 %1671
      %v1674 = vmul.f32 %v1667, %v1672
      %1676 = vrot.lane.b32.xlu0 %v1674, 32
      %v1677 = vpop.permute.xlu0 %1676
      %v1679 = vadd.f32 %v1669, %v1677
      %v1680 = vtanh.pop %v1679
      %1682 = vrot.lane.b32.xlu0 %v1680, 64
      %v1683 = vpop.permute.xlu0 %1682
      %v1685 = vmul.f32 %v1667, %v1683
      %v1686 = vmul.f32 %v1685, %v888
      %1688 = vrot.lane.b32.xlu0 %v1686, 32
      %v1689 = vpop.permute.xlu0 %1688
      %v1690 = vsel %vm1237, %v1689, 0
      %1692 = vmatpush.msra.mxu0 0.0
      %1693 = vmatpush.msra.mxu0 0.0
      %1694 = vmatpush.msra.mxu0 0.0
      %1695 = vmatpush.msra.mxu0 0.0
      %1696 = vmatpush.msra.mxu0 0.0
      %1697 = vmatpush.msra.mxu0 0.0
      %1698 = vmatpush.msra.mxu0 0.0
      %1699 = vmatpush.msra.mxu0 0.0
      %1700 = vmatpush.msra.mxu0 0.0
      %1701 = vmatpush.msra.mxu0 0.0
      %1702 = vmatpush.msra.mxu0 0.0
      %1703 = vmatpush.msra.mxu0 0.0
      %1704 = vmatpush.msra.mxu0 %v760
      %1705 = vmatpush.msra.mxu0 %v758
      %1706 = vmatpush.msra.mxu0 %v756
      %1707 = vmatpush.msra.mxu0 %v754
      %1708 = vmatmul.f32.gmra.mxu0 %v1690
      %v1709 = vpop.f32.mrf.mxu0
      %v1710 = vadd.f32 %v1229, %v1709
      %1711 = vdwg.mxu0
      %1712 = vmatpush.msra.mxu0 0.0
      %1713 = vmatpush.msra.mxu0 0.0
      %1714 = vmatpush.msra.mxu0 0.0
      %1715 = vmatpush.msra.mxu0 0.0
      %1716 = vmatpush.msra.mxu0 0.0
      %1717 = vmatpush.msra.mxu0 0.0
      %1718 = vmatpush.msra.mxu0 0.0
      %1719 = vmatpush.msra.mxu0 0.0
      %1720 = vmatpush.msra.mxu0 0.0
      %1721 = vmatpush.msra.mxu0 0.0
      %1722 = vmatpush.msra.mxu0 0.0
      %1723 = vmatpush.msra.mxu0 0.0
      %1724 = vmatpush.msra.mxu0 %v761
      %1725 = vmatpush.msra.mxu0 %v759
      %1726 = vmatpush.msra.mxu0 %v757
      %1727 = vmatpush.msra.mxu0 %v755
      %1728 = vmatmul.f32.gmra.mxu0 %v1690
      %v1729 = vpop.f32.mrf.mxu0
      %v1730 = vadd.f32 %v1230, %v1729
      %1731 = vdwg.mxu0
      %v1732 = vmul.f32 %v737, %v729
      %v1733 = vsub.f32 1.0, %v737
      %v1734 = vmul.f32 %v1733, %v1710
      %v1735 = vadd.f32 %v1732, %v1734
      %v1737 = vsel %vm771, %v1735, 0
      %1739 = vmatpush.msra.mxu0 0.0
      %1740 = vmatpush.msra.mxu0 0.0
      %1741 = vmatpush.msra.mxu0 0.0
      %1742 = vmatpush.msra.mxu0 0.0
      %1743 = vmatpush.msra.mxu0 0.0
      %1744 = vmatpush.msra.mxu0 0.0
      %1745 = vmatpush.msra.mxu0 0.0
      %1746 = vmatpush.msra.mxu0 0.0
      %1747 = vmatpush.msra.mxu0 0.0
      %1748 = vmatpush.msra.mxu0 0.0
      %1749 = vmatpush.msra.mxu0 0.0
      %1750 = vmatpush.msra.mxu0 0.0
      %1751 = vmatpush.msra.mxu0 0.0
      %1752 = vmatpush.msra.mxu0 0.0
      %1753 = vmatpush.msra.mxu0 0.0
      %1754 = vmatpush.msra.mxu0 %v1289
      %1755 = vmatmul.f32.gmra.mxu0 %v1737
      %v1756 = vpop.f32.mrf.mxu0
      %v1757 = vadd.f32 %v1234, %v1756
      %1758 = vdwg.mxu0
      %v1759 = vmul.f32 %v1105, %v1757
      %v1760 = vsub.f32 1.0, %v1105
      %v1761 = vmul.f32 %v1760, %v1710
      %v1762 = vadd.f32 %v1759, %v1761
      %v1763 = vmul.f32 %v1733, %v1762
      %v1764 = vadd.f32 %v1732, %v1763
      %1767 = vrot.lane.b32.xlu0 %v1710, 124
      %v1768 = vpop.permute.xlu0 %1767
      %1769 = vrot.lane.b32.xlu0 %v1730, 124
      %v1770 = vpop.permute.xlu0 %1769
      %v1771 = vsel %vm1323, %v1768, %v1770
      %v1774 = vsel %vm771, %v1764, 0
      %1776 = vmatpush.msra.mxu0 0.0
      %1777 = vmatpush.msra.mxu0 0.0
      %1778 = vmatpush.msra.mxu0 0.0
      %1779 = vmatpush.msra.mxu0 0.0
      %1780 = vmatpush.msra.mxu0 0.0
      %1781 = vmatpush.msra.mxu0 0.0
      %1782 = vmatpush.msra.mxu0 0.0
      %1783 = vmatpush.msra.mxu0 0.0
      %1784 = vmatpush.msra.mxu0 0.0
      %1785 = vmatpush.msra.mxu0 0.0
      %1786 = vmatpush.msra.mxu0 0.0
      %1787 = vmatpush.msra.mxu0 0.0
      %1788 = vmatpush.msra.mxu0 0.0
      %1789 = vmatpush.msra.mxu0 0.0
      %1790 = vmatpush.msra.mxu0 0.0
      %1791 = vmatpush.msra.mxu0 %v1330
      %1792 = vmatmul.f32.gmra.mxu0 %v1774
      %v1793 = vpop.f32.mrf.mxu0
      %v1794 = vadd.f32 %v1771, %v1793
      %1795 = vdwg.mxu0
      %v1796 = vadd.f32 %v1794, %v1215
      %v1797 = vxor.u32 %v1796, 2147483648
      %v1798 = vmul.f32 %v1797, 1.442695
      %v1799 = vpow.pop %v1798
      %v1800 = vadd.f32 %v1799, 1.0
      %v1801 = vrcp.pop %v1800
      %v1802 = vmul.f32 %v1800, %v1801
      %v1803 = vsub.f32 1.0, %v1802
      %v1804 = vmul.f32 %v1801, %v1803
      %v1805 = vadd.f32 %v1801, %v1804
      %vm1806 = vweird.f32 %v1800
      %vm1807 = vweird.f32 %v1801
      %vm1808 = vmor %vm1806, %vm1807
      %v1809 = vsel %vm1808, %v1801, %v1805
      %v1810 = vand.u32 2147483647, %v1800
      %vm1811 = vcmp.eq.f32.partialorder %v1810, 8.507059e+37
      %v1812 = vand.u32 %v1800, 2147483648
      %v1813 = vor.u32 1.1754944e-38, %v1812
      %v1814 = vsel %vm1811, %v1813, %v1809
      %v1815 = vmul.f32 1.0, %v1814
      %v1816 = vtanh.pop %v1796
      %v1817 = vmul.f32 %v1815, %v1679
      %1819 = vrot.lane.b32.xlu0 %v1816, 64
      %v1820 = vpop.permute.xlu0 %1819
      %v1822 = vmul.f32 %v1815, %v1820
      %1824 = vrot.lane.b32.xlu0 %v1822, 32
      %v1825 = vpop.permute.xlu0 %1824
      %v1827 = vadd.f32 %v1817, %v1825
      %v1828 = vtanh.pop %v1827
      %1830 = vrot.lane.b32.xlu0 %v1828, 64
      %v1831 = vpop.permute.xlu0 %1830
      %v1833 = vmul.f32 %v1815, %v1831
      %v1834 = vmul.f32 %v1833, %v890
      %1836 = vrot.lane.b32.xlu0 %v1834, 32
      %v1837 = vpop.permute.xlu0 %1836
      %v1838 = vsel %vm1237, %v1837, 0
      %1840 = vmatpush.msra.mxu0 0.0
      %1841 = vmatpush.msra.mxu0 0.0
      %1842 = vmatpush.msra.mxu0 0.0
      %1843 = vmatpush.msra.mxu0 0.0
      %1844 = vmatpush.msra.mxu0 0.0
      %1845 = vmatpush.msra.mxu0 0.0
      %1846 = vmatpush.msra.mxu0 0.0
      %1847 = vmatpush.msra.mxu0 0.0
      %1848 = vmatpush.msra.mxu0 0.0
      %1849 = vmatpush.msra.mxu0 0.0
      %1850 = vmatpush.msra.mxu0 0.0
      %1851 = vmatpush.msra.mxu0 0.0
      %1852 = vmatpush.msra.mxu0 %v760
      %1853 = vmatpush.msra.mxu0 %v758
      %1854 = vmatpush.msra.mxu0 %v756
      %1855 = vmatpush.msra.mxu0 %v754
      %1856 = vmatmul.f32.gmra.mxu0 %v1838
      %v1857 = vpop.f32.mrf.mxu0
      %v1858 = vadd.f32 %v1229, %v1857
      %1859 = vdwg.mxu0
      %1860 = vmatpush.msra.mxu0 0.0
      %1861 = vmatpush.msra.mxu0 0.0
      %1862 = vmatpush.msra.mxu0 0.0
      %1863 = vmatpush.msra.mxu0 0.0
      %1864 = vmatpush.msra.mxu0 0.0
      %1865 = vmatpush.msra.mxu0 0.0
      %1866 = vmatpush.msra.mxu0 0.0
      %1867 = vmatpush.msra.mxu0 0.0
      %1868 = vmatpush.msra.mxu0 0.0
      %1869 = vmatpush.msra.mxu0 0.0
      %1870 = vmatpush.msra.mxu0 0.0
      %1871 = vmatpush.msra.mxu0 0.0
      %1872 = vmatpush.msra.mxu0 %v761
      %1873 = vmatpush.msra.mxu0 %v759
      %1874 = vmatpush.msra.mxu0 %v757
      %1875 = vmatpush.msra.mxu0 %v755
      %1876 = vmatmul.f32.gmra.mxu0 %v1838
      %v1877 = vpop.f32.mrf.mxu0
      %v1878 = vadd.f32 %v1230, %v1877
      %1879 = vdwg.mxu0
      %v1880 = vmul.f32 %v738, %v730
      %v1881 = vsub.f32 1.0, %v738
      %v1882 = vmul.f32 %v1881, %v1858
      %v1883 = vadd.f32 %v1880, %v1882
      %v1885 = vsel %vm771, %v1883, 0
      %1887 = vmatpush.msra.mxu0 0.0
      %1888 = vmatpush.msra.mxu0 0.0
      %1889 = vmatpush.msra.mxu0 0.0
      %1890 = vmatpush.msra.mxu0 0.0
      %1891 = vmatpush.msra.mxu0 0.0
      %1892 = vmatpush.msra.mxu0 0.0
      %1893 = vmatpush.msra.mxu0 0.0
      %1894 = vmatpush.msra.mxu0 0.0
      %1895 = vmatpush.msra.mxu0 0.0
      %1896 = vmatpush.msra.mxu0 0.0
      %1897 = vmatpush.msra.mxu0 0.0
      %1898 = vmatpush.msra.mxu0 0.0
      %1899 = vmatpush.msra.mxu0 0.0
      %1900 = vmatpush.msra.mxu0 0.0
      %1901 = vmatpush.msra.mxu0 0.0
      %1902 = vmatpush.msra.mxu0 %v1289
      %1903 = vmatmul.f32.gmra.mxu0 %v1885
      %v1904 = vpop.f32.mrf.mxu0
      %v1905 = vadd.f32 %v1234, %v1904
      %1906 = vdwg.mxu0
      %v1907 = vmul.f32 %v1120, %v1905
      %v1908 = vsub.f32 1.0, %v1120
      %v1909 = vmul.f32 %v1908, %v1858
      %v1910 = vadd.f32 %v1907, %v1909
      %v1911 = vmul.f32 %v1881, %v1910
      %v1912 = vadd.f32 %v1880, %v1911
      %1915 = vrot.lane.b32.xlu0 %v1858, 124
      %v1916 = vpop.permute.xlu0 %1915
      %1917 = vrot.lane.b32.xlu0 %v1878, 124
      %v1918 = vpop.permute.xlu0 %1917
      %v1919 = vsel %vm1323, %v1916, %v1918
      %v1922 = vsel %vm771, %v1912, 0
      %1924 = vmatpush.msra.mxu0 0.0
      %1925 = vmatpush.msra.mxu0 0.0
      %1926 = vmatpush.msra.mxu0 0.0
      %1927 = vmatpush.msra.mxu0 0.0
      %1928 = vmatpush.msra.mxu0 0.0
      %1929 = vmatpush.msra.mxu0 0.0
      %1930 = vmatpush.msra.mxu0 0.0
      %1931 = vmatpush.msra.mxu0 0.0
      %1932 = vmatpush.msra.mxu0 0.0
      %1933 = vmatpush.msra.mxu0 0.0
      %1934 = vmatpush.msra.mxu0 0.0
      %1935 = vmatpush.msra.mxu0 0.0
      %1936 = vmatpush.msra.mxu0 0.0
      %1937 = vmatpush.msra.mxu0 0.0
      %1938 = vmatpush.msra.mxu0 0.0
      %1939 = vmatpush.msra.mxu0 %v1330
      %1940 = vmatmul.f32.gmra.mxu0 %v1922
      %v1941 = vpop.f32.mrf.mxu0
      %v1942 = vadd.f32 %v1919, %v1941
      %1943 = vdwg.mxu0
      %v1944 = vadd.f32 %v1942, %v1218
      %v1945 = vxor.u32 %v1944, 2147483648
      %v1946 = vmul.f32 %v1945, 1.442695
      %v1947 = vpow.pop %v1946
      %v1948 = vadd.f32 %v1947, 1.0
      %v1949 = vrcp.pop %v1948
      %v1950 = vmul.f32 %v1948, %v1949
      %v1951 = vsub.f32 1.0, %v1950
      %v1952 = vmul.f32 %v1949, %v1951
      %v1953 = vadd.f32 %v1949, %v1952
      %vm1954 = vweird.f32 %v1948
      %vm1955 = vweird.f32 %v1949
      %vm1956 = vmor %vm1954, %vm1955
      %v1957 = vsel %vm1956, %v1949, %v1953
      %v1958 = vand.u32 2147483647, %v1948
      %vm1959 = vcmp.eq.f32.partialorder %v1958, 8.507059e+37
      %v1960 = vand.u32 %v1948, 2147483648
      %v1961 = vor.u32 1.1754944e-38, %v1960
      %v1962 = vsel %vm1959, %v1961, %v1957
      %v1963 = vmul.f32 1.0, %v1962
      %v1964 = vtanh.pop %v1944
      %v1965 = vmul.f32 %v1963, %v1827
      %1967 = vrot.lane.b32.xlu0 %v1964, 64
      %v1968 = vpop.permute.xlu0 %1967
      %v1970 = vmul.f32 %v1963, %v1968
      %1972 = vrot.lane.b32.xlu0 %v1970, 32
      %v1973 = vpop.permute.xlu0 %1972
      %v1975 = vadd.f32 %v1965, %v1973
      %v1976 = vtanh.pop %v1975
      %1978 = vrot.lane.b32.xlu0 %v1976, 64
      %v1979 = vpop.permute.xlu0 %1978
      %v1981 = vmul.f32 %v1963, %v1979
      %v1982 = vmul.f32 %v1981, %v892
      %1984 = vrot.lane.b32.xlu0 %v1982, 32
      %v1985 = vpop.permute.xlu0 %1984
      %v1986 = vsel %vm1237, %v1985, 0
      %1988 = vmatpush.msra.mxu0 0.0
      %1989 = vmatpush.msra.mxu0 0.0
      %1990 = vmatpush.msra.mxu0 0.0
      %1991 = vmatpush.msra.mxu0 0.0
      %1992 = vmatpush.msra.mxu0 0.0
      %1993 = vmatpush.msra.mxu0 0.0
      %1994 = vmatpush.msra.mxu0 0.0
      %1995 = vmatpush.msra.mxu0 0.0
      %1996 = vmatpush.msra.mxu0 0.0
      %1997 = vmatpush.msra.mxu0 0.0
      %1998 = vmatpush.msra.mxu0 0.0
      %1999 = vmatpush.msra.mxu0 0.0
      %2000 = vmatpush.msra.mxu0 %v760
      %2001 = vmatpush.msra.mxu0 %v758
      %2002 = vmatpush.msra.mxu0 %v756
      %2003 = vmatpush.msra.mxu0 %v754
      %2004 = vmatmul.f32.gmra.mxu0 %v1986
      %v2005 = vpop.f32.mrf.mxu0
      %v2006 = vadd.f32 %v1229, %v2005
      %2007 = vdwg.mxu0
      %2008 = vmatpush.msra.mxu0 0.0
      %2009 = vmatpush.msra.mxu0 0.0
      %2010 = vmatpush.msra.mxu0 0.0
      %2011 = vmatpush.msra.mxu0 0.0
      %2012 = vmatpush.msra.mxu0 0.0
      %2013 = vmatpush.msra.mxu0 0.0
      %2014 = vmatpush.msra.mxu0 0.0
      %2015 = vmatpush.msra.mxu0 0.0
      %2016 = vmatpush.msra.mxu0 0.0
      %2017 = vmatpush.msra.mxu0 0.0
      %2018 = vmatpush.msra.mxu0 0.0
      %2019 = vmatpush.msra.mxu0 0.0
      %2020 = vmatpush.msra.mxu0 %v761
      %2021 = vmatpush.msra.mxu0 %v759
      %2022 = vmatpush.msra.mxu0 %v757
      %2023 = vmatpush.msra.mxu0 %v755
      %2024 = vmatmul.f32.gmra.mxu0 %v1986
      %v2025 = vpop.f32.mrf.mxu0
      %v2026 = vadd.f32 %v1230, %v2025
      %2027 = vdwg.mxu0
      %v2028 = vmul.f32 %v739, %v731
      %v2029 = vsub.f32 1.0, %v739
      %v2030 = vmul.f32 %v2029, %v2006
      %v2031 = vadd.f32 %v2028, %v2030
      %v2033 = vsel %vm771, %v2031, 0
      %2035 = vmatpush.msra.mxu0 0.0
      %2036 = vmatpush.msra.mxu0 0.0
      %2037 = vmatpush.msra.mxu0 0.0
      %2038 = vmatpush.msra.mxu0 0.0
      %2039 = vmatpush.msra.mxu0 0.0
      %2040 = vmatpush.msra.mxu0 0.0
      %2041 = vmatpush.msra.mxu0 0.0
      %2042 = vmatpush.msra.mxu0 0.0
      %2043 = vmatpush.msra.mxu0 0.0
      %2044 = vmatpush.msra.mxu0 0.0
      %2045 = vmatpush.msra.mxu0 0.0
      %2046 = vmatpush.msra.mxu0 0.0
      %2047 = vmatpush.msra.mxu0 0.0
      %2048 = vmatpush.msra.mxu0 0.0
      %2049 = vmatpush.msra.mxu0 0.0
      %2050 = vmatpush.msra.mxu0 %v1289
      %2051 = vmatmul.f32.gmra.mxu0 %v2033
      %v2052 = vpop.f32.mrf.mxu0
      %v2053 = vadd.f32 %v1234, %v2052
      %2054 = vdwg.mxu0
      %v2055 = vmul.f32 %v1135, %v2053
      %v2056 = vsub.f32 1.0, %v1135
      %v2057 = vmul.f32 %v2056, %v2006
      %v2058 = vadd.f32 %v2055, %v2057
      %v2059 = vmul.f32 %v2029, %v2058
      %v2060 = vadd.f32 %v2028, %v2059
      %2063 = vrot.lane.b32.xlu0 %v2006, 124
      %v2064 = vpop.permute.xlu0 %2063
      %2065 = vrot.lane.b32.xlu0 %v2026, 124
      %v2066 = vpop.permute.xlu0 %2065
      %v2067 = vsel %vm1323, %v2064, %v2066
      %v2070 = vsel %vm771, %v2060, 0
      %2072 = vmatpush.msra.mxu0 0.0
      %2073 = vmatpush.msra.mxu0 0.0
      %2074 = vmatpush.msra.mxu0 0.0
      %2075 = vmatpush.msra.mxu0 0.0
      %2076 = vmatpush.msra.mxu0 0.0
      %2077 = vmatpush.msra.mxu0 0.0
      %2078 = vmatpush.msra.mxu0 0.0
      %2079 = vmatpush.msra.mxu0 0.0
      %2080 = vmatpush.msra.mxu0 0.0
      %2081 = vmatpush.msra.mxu0 0.0
      %2082 = vmatpush.msra.mxu0 0.0
      %2083 = vmatpush.msra.mxu0 0.0
      %2084 = vmatpush.msra.mxu0 0.0
      %2085 = vmatpush.msra.mxu0 0.0
      %2086 = vmatpush.msra.mxu0 0.0
      %2087 = vmatpush.msra.mxu0 %v1330
      %2088 = vmatmul.f32.gmra.mxu0 %v2070
      %v2089 = vpop.f32.mrf.mxu0
      %v2090 = vadd.f32 %v2067, %v2089
      %2091 = vdwg.mxu0
      %v2092 = vadd.f32 %v2090, %v1221
      %v2093 = vxor.u32 %v2092, 2147483648
      %v2094 = vmul.f32 %v2093, 1.442695
      %v2095 = vpow.pop %v2094
      %v2096 = vadd.f32 %v2095, 1.0
      %v2097 = vrcp.pop %v2096
      %v2098 = vmul.f32 %v2096, %v2097
      %v2099 = vsub.f32 1.0, %v2098
      %v2100 = vmul.f32 %v2097, %v2099
      %v2101 = vadd.f32 %v2097, %v2100
      %vm2102 = vweird.f32 %v2096
      %vm2103 = vweird.f32 %v2097
      %vm2104 = vmor %vm2102, %vm2103
      %v2105 = vsel %vm2104, %v2097, %v2101
      %v2106 = vand.u32 2147483647, %v2096
      %vm2107 = vcmp.eq.f32.partialorder %v2106, 8.507059e+37
      %v2108 = vand.u32 %v2096, 2147483648
      %v2109 = vor.u32 1.1754944e-38, %v2108
      %v2110 = vsel %vm2107, %v2109, %v2105
      %v2111 = vmul.f32 1.0, %v2110
      %v2112 = vtanh.pop %v2092
      %v2113 = vmul.f32 %v2111, %v1975
      %2115 = vrot.lane.b32.xlu0 %v2112, 64
      %v2116 = vpop.permute.xlu0 %2115
      %v2118 = vmul.f32 %v2111, %v2116
      %2120 = vrot.lane.b32.xlu0 %v2118, 32
      %v2121 = vpop.permute.xlu0 %2120
      %v2123 = vadd.f32 %v2113, %v2121
      %v2124 = vtanh.pop %v2123
      %2126 = vrot.lane.b32.xlu0 %v2124, 64
      %v2127 = vpop.permute.xlu0 %2126
      %v2129 = vmul.f32 %v2111, %v2127
      %v2130 = vmul.f32 %v2129, %v894
      %2132 = vrot.lane.b32.xlu0 %v2130, 32
      %v2133 = vpop.permute.xlu0 %2132
      %v2134 = vsel %vm1237, %v2133, 0
      %2136 = vmatpush.msra.mxu0 0.0
      %2137 = vmatpush.msra.mxu0 0.0
      %2138 = vmatpush.msra.mxu0 0.0
      %2139 = vmatpush.msra.mxu0 0.0
      %2140 = vmatpush.msra.mxu0 0.0
      %2141 = vmatpush.msra.mxu0 0.0
      %2142 = vmatpush.msra.mxu0 0.0
      %2143 = vmatpush.msra.mxu0 0.0
      %2144 = vmatpush.msra.mxu0 0.0
      %2145 = vmatpush.msra.mxu0 0.0
      %2146 = vmatpush.msra.mxu0 0.0
      %2147 = vmatpush.msra.mxu0 0.0
      %2148 = vmatpush.msra.mxu0 %v760
      %2149 = vmatpush.msra.mxu0 %v758
      %2150 = vmatpush.msra.mxu0 %v756
      %2151 = vmatpush.msra.mxu0 %v754
      %2152 = vmatmul.f32.gmra.mxu0 %v2134
      %v2153 = vpop.f32.mrf.mxu0
      %v2154 = vadd.f32 %v1229, %v2153
      %2155 = vdwg.mxu0
      %2156 = vmatpush.msra.mxu0 0.0
      %2157 = vmatpush.msra.mxu0 0.0
      %2158 = vmatpush.msra.mxu0 0.0
      %2159 = vmatpush.msra.mxu0 0.0
      %2160 = vmatpush.msra.mxu0 0.0
      %2161 = vmatpush.msra.mxu0 0.0
      %2162 = vmatpush.msra.mxu0 0.0
      %2163 = vmatpush.msra.mxu0 0.0
      %2164 = vmatpush.msra.mxu0 0.0
      %2165 = vmatpush.msra.mxu0 0.0
      %2166 = vmatpush.msra.mxu0 0.0
      %2167 = vmatpush.msra.mxu0 0.0
      %2168 = vmatpush.msra.mxu0 %v761
      %2169 = vmatpush.msra.mxu0 %v759
      %2170 = vmatpush.msra.mxu0 %v757
      %2171 = vmatpush.msra.mxu0 %v755
      %2172 = vmatmul.f32.gmra.mxu0 %v2134
      %v2173 = vpop.f32.mrf.mxu0
      %v2174 = vadd.f32 %v1230, %v2173
      %2175 = vdwg.mxu0
      %v2176 = vmul.f32 %v740, %v732
      %v2177 = vsub.f32 1.0, %v740
      %v2178 = vmul.f32 %v2177, %v2154
      %v2179 = vadd.f32 %v2176, %v2178
      %v2181 = vsel %vm771, %v2179, 0
      %2183 = vmatpush.msra.mxu0 0.0
      %2184 = vmatpush.msra.mxu0 0.0
      %2185 = vmatpush.msra.mxu0 0.0
      %2186 = vmatpush.msra.mxu0 0.0
      %2187 = vmatpush.msra.mxu0 0.0
      %2188 = vmatpush.msra.mxu0 0.0
      %2189 = vmatpush.msra.mxu0 0.0
      %2190 = vmatpush.msra.mxu0 0.0
      %2191 = vmatpush.msra.mxu0 0.0
      %2192 = vmatpush.msra.mxu0 0.0
      %2193 = vmatpush.msra.mxu0 0.0
      %2194 = vmatpush.msra.mxu0 0.0
      %2195 = vmatpush.msra.mxu0 0.0
      %2196 = vmatpush.msra.mxu0 0.0
      %2197 = vmatpush.msra.mxu0 0.0
      %2198 = vmatpush.msra.mxu0 %v1289
      %2199 = vmatmul.f32.gmra.mxu0 %v2181
      %v2200 = vpop.f32.mrf.mxu0
      %v2201 = vadd.f32 %v1234, %v2200
      %2202 = vdwg.mxu0
      %v2203 = vmul.f32 %v1150, %v2201
      %v2204 = vsub.f32 1.0, %v1150
      %v2205 = vmul.f32 %v2204, %v2154
      %v2206 = vadd.f32 %v2203, %v2205
      %v2207 = vmul.f32 %v2177, %v2206
      %v2208 = vadd.f32 %v2176, %v2207
      %2211 = vrot.lane.b32.xlu0 %v2154, 124
      %v2212 = vpop.permute.xlu0 %2211
      %2213 = vrot.lane.b32.xlu0 %v2174, 124
      %v2214 = vpop.permute.xlu0 %2213
      %v2215 = vsel %vm1323, %v2212, %v2214
      %v2218 = vsel %vm771, %v2208, 0
      %2220 = vmatpush.msra.mxu0 0.0
      %2221 = vmatpush.msra.mxu0 0.0
      %2222 = vmatpush.msra.mxu0 0.0
      %2223 = vmatpush.msra.mxu0 0.0
      %2224 = vmatpush.msra.mxu0 0.0
      %2225 = vmatpush.msra.mxu0 0.0
      %2226 = vmatpush.msra.mxu0 0.0
      %2227 = vmatpush.msra.mxu0 0.0
      %2228 = vmatpush.msra.mxu0 0.0
      %2229 = vmatpush.msra.mxu0 0.0
      %2230 = vmatpush.msra.mxu0 0.0
      %2231 = vmatpush.msra.mxu0 0.0
      %2232 = vmatpush.msra.mxu0 0.0
      %2233 = vmatpush.msra.mxu0 0.0
      %2234 = vmatpush.msra.mxu0 0.0
      %2235 = vmatpush.msra.mxu0 %v1330
      %2236 = vmatmul.f32.gmra.mxu0 %v2218
      %v2237 = vpop.f32.mrf.mxu0
      %v2238 = vadd.f32 %v2215, %v2237
      %2239 = vdwg.mxu0
      %v2240 = vadd.f32 %v2238, %v1224
      %v2241 = vxor.u32 %v2240, 2147483648
      %v2242 = vmul.f32 %v2241, 1.442695
      %v2243 = vpow.pop %v2242
      %v2244 = vadd.f32 %v2243, 1.0
      %v2245 = vrcp.pop %v2244
      %v2246 = vmul.f32 %v2244, %v2245
      %v2247 = vsub.f32 1.0, %v2246
      %v2248 = vmul.f32 %v2245, %v2247
      %v2249 = vadd.f32 %v2245, %v2248
      %vm2250 = vweird.f32 %v2244
      %vm2251 = vweird.f32 %v2245
      %vm2252 = vmor %vm2250, %vm2251
      %v2253 = vsel %vm2252, %v2245, %v2249
      %v2254 = vand.u32 2147483647, %v2244
      %vm2255 = vcmp.eq.f32.partialorder %v2254, 8.507059e+37
      %v2256 = vand.u32 %v2244, 2147483648
      %v2257 = vor.u32 1.1754944e-38, %v2256
      %v2258 = vsel %vm2255, %v2257, %v2253
      %v2259 = vmul.f32 1.0, %v2258
      %v2260 = vtanh.pop %v2240
      %v2261 = vmul.f32 %v2259, %v2123
      %2263 = vrot.lane.b32.xlu0 %v2260, 64
      %v2264 = vpop.permute.xlu0 %2263
      %v2266 = vmul.f32 %v2259, %v2264
      %2268 = vrot.lane.b32.xlu0 %v2266, 32
      %v2269 = vpop.permute.xlu0 %2268
      %v2271 = vadd.f32 %v2261, %v2269
      %v2272 = vtanh.pop %v2271
      %2274 = vrot.lane.b32.xlu0 %v2272, 64
      %v2275 = vpop.permute.xlu0 %2274
      %v2277 = vmul.f32 %v2259, %v2275
      %v2278 = vmul.f32 %v2277, %v896
      %2280 = vrot.lane.b32.xlu0 %v2278, 32
      %v2281 = vpop.permute.xlu0 %2280
      %v2282 = vsel %vm1237, %v2281, 0
      %2284 = vmatpush.msra.mxu0 0.0
      %2285 = vmatpush.msra.mxu0 0.0
      %2286 = vmatpush.msra.mxu0 0.0
      %2287 = vmatpush.msra.mxu0 0.0
      %2288 = vmatpush.msra.mxu0 0.0
      %2289 = vmatpush.msra.mxu0 0.0
      %2290 = vmatpush.msra.mxu0 0.0
      %2291 = vmatpush.msra.mxu0 0.0
      %2292 = vmatpush.msra.mxu0 0.0
      %2293 = vmatpush.msra.mxu0 0.0
      %2294 = vmatpush.msra.mxu0 0.0
      %2295 = vmatpush.msra.mxu0 0.0
      %2296 = vmatpush.msra.mxu0 %v760
      %2297 = vmatpush.msra.mxu0 %v758
      %2298 = vmatpush.msra.mxu0 %v756
      %2299 = vmatpush.msra.mxu0 %v754
      %2300 = vmatmul.f32.gmra.mxu0 %v2282
      %v2301 = vpop.f32.mrf.mxu0
      %v2302 = vadd.f32 %v1229, %v2301
      %2303 = vdwg.mxu0
      %v2304 = vmul.f32 %v741, %v733
      %v2305 = vsub.f32 1.0, %v741
      %v2306 = vmul.f32 %v2305, %v2302
      %v2307 = vadd.f32 %v2304, %v2306
      %v2309 = vsel %vm771, %v2307, 0
      %2311 = vmatpush.msra.mxu0 0.0
      %2312 = vmatpush.msra.mxu0 0.0
      %2313 = vmatpush.msra.mxu0 0.0
      %2314 = vmatpush.msra.mxu0 0.0
      %2315 = vmatpush.msra.mxu0 0.0
      %2316 = vmatpush.msra.mxu0 0.0
      %2317 = vmatpush.msra.mxu0 0.0
      %2318 = vmatpush.msra.mxu0 0.0
      %2319 = vmatpush.msra.mxu0 0.0
      %2320 = vmatpush.msra.mxu0 0.0
      %2321 = vmatpush.msra.mxu0 0.0
      %2322 = vmatpush.msra.mxu0 0.0
      %2323 = vmatpush.msra.mxu0 0.0
      %2324 = vmatpush.msra.mxu0 0.0
      %2325 = vmatpush.msra.mxu0 0.0
      %2326 = vmatpush.msra.mxu0 %v1289
      %2327 = vmatmul.f32.gmra.mxu0 %v2309
      %v2328 = vpop.f32.mrf.mxu0
      %v2329 = vadd.f32 %v1234, %v2328
      %2330 = vdwg.mxu0
      %v2331 = vmul.f32 %v1165, %v2329
      %v2332 = vsub.f32 1.0, %v1165
      %v2333 = vmul.f32 %v2332, %v2302
      %v2334 = vadd.f32 %v2331, %v2333
      %v2335 = vmul.f32 %v2305, %v2334
      %v2336 = vadd.f32 %v2304, %v2335
      %p2337 = scmp.eq.s32.totalorder %s27, 1
      %s2338 = scalar_select %p2337, 1, 0
      %v2339 = vstv %s2338
      %vm2340 = vcmp.eq.s32.totalorder %v2339, 1
      %v2341 = vsel %vm2340, %v2334, %v1314
      %v2342 = vsel %vm2340, %v2206, %v1466
      %v2343 = vsel %vm2340, %v2058, %v1614
      %v2344 = vsel %vm2340, %v1910, %v1762
      %v2345 = vsel %vm2340, %v1762, %v1910
      %v2346 = vsel %vm2340, %v1614, %v2058
      %v2347 = vsel %vm2340, %v1466, %v2206
      %v2348 = vsel %vm2340, %v1314, %v2334
      %2349 = vst.msk [vmem:[%s720] sm:$0xff] %vm771, %v2341
      %2350 = vst.msk [vmem:[%s720 + $0x8] sm:$0xff] %vm771, %v2342
      %2351 = vst.msk [vmem:[%s720 + $0x10] sm:$0xff] %vm771, %v2343
      %2352 = vst.msk [vmem:[%s720 + $0x18] sm:$0xff] %vm771, %v2344
      %2353 = vst.msk [vmem:[%s720 + $0x20] sm:$0xff] %vm771, %v2345
      %2354 = vst.msk [vmem:[%s720 + $0x28] sm:$0xff] %vm771, %v2346
      %2355 = vst.msk [vmem:[%s720 + $0x30] sm:$0xff] %vm771, %v2347
      %2356 = vst.msk [vmem:[%s720 + $0x38] sm:$0xff] %vm771, %v2348
      %v2357 = vsel %vm2340, %v2336, %v1316
      %v2358 = vsel %vm2340, %v2208, %v1468
      %v2359 = vsel %vm2340, %v2060, %v1616
      %v2360 = vsel %vm2340, %v1912, %v1764
      %v2361 = vsel %vm2340, %v1764, %v1912
      %v2362 = vsel %vm2340, %v1616, %v2060
      %v2363 = vsel %vm2340, %v1468, %v2208
      %v2364 = vsel %vm2340, %v1316, %v2336
      %2365 = vst.msk [vmem:[%s725] sm:$0xff] %vm771, %v2357
      %2366 = vst.msk [vmem:[%s725 + $0x8] sm:$0xff] %vm771, %v2358
      %2367 = vst.msk [vmem:[%s725 + $0x10] sm:$0xff] %vm771, %v2359
      %2368 = vst.msk [vmem:[%s725 + $0x18] sm:$0xff] %vm771, %v2360
      %2369 = vst.msk [vmem:[%s725 + $0x20] sm:$0xff] %vm771, %v2361
      %2370 = vst.msk [vmem:[%s725 + $0x28] sm:$0xff] %vm771, %v2362
      %2371 = vst.msk [vmem:[%s725 + $0x30] sm:$0xff] %vm771, %v2363
      %2372 = vst.msk [vmem:[%s725 + $0x38] sm:$0xff] %vm771, %v2364
      %p2373 = scmp.lt.s32.totalorder %s27, 1
      %s2374 = scalar_select %p2373, %s27, 1
      %s2375 = smul.addr %s2374, 8
      %s2376 = smul.addr %s2375, 8
      %s2377 = scalar_lea.vmem %s14, %s2376
      %p2378 = scmp.lt.s32.totalorder %s27, 1
      %s2379 = scalar_select %p2378, %s27, 1
      %s2380 = smul.addr %s2379, 8
      %s2381 = smul.addr %s2380, 8
      %s2382 = scalar_lea.vmem %s15, %s2381
      // Predicated region
      $region77: #{usgan_forward.2} parent=75 // pred_check
        %p2383 = pneg %p409
      $region78: #{usgan_forward.2} parent=75 // pred_check_branch
        %2385 = sbr.rel (%p2383) target = $region80
      $region79: #{usgan_forward.2} parent=75 // pred_region
        _
      $region80: #{usgan_forward.2} parent=75 // pred_fallthru
        _
      // Predicated region
      $region81: #{usgan_forward.2} parent=75 // pred_check
        %p2386 = pneg %p435
      $region82: #{usgan_forward.2} parent=75 // pred_check_branch
        %2388 = sbr.rel (%p2386) target = $region84
      $region83: #{usgan_forward.2} parent=75 // pred_region
        _
      $region84: #{usgan_forward.2} parent=75 // pred_fallthru
        _
    $region76: #{usgan_forward.2} parent=5 // pred_fallthru
      _
    %p2389 = scmp.le.s32.totalorder 2, %s22
    // Predicated region
    $region85: #{usgan_forward.2} parent=5 // pred_check
      %p2390 = pneg %p2389
    $region86: #{usgan_forward.2} parent=5 // pred_check_branch
      %2392 = sbr.rel (%p2390) target = $region88
    $region87: #{usgan_forward.2} parent=5 // pred_region
      %s2393 = ssub.s32 %s22, 2
      // Predicated region
      $region89: #{usgan_forward.2} parent=87 // pred_check
        %p2394 = pneg %p415
      $region90: #{usgan_forward.2} parent=87 // pred_check_branch
        %2396 = sbr.rel (%p2394) target = $region92
      $region91: #{usgan_forward.2} parent=87 // pred_region
        %p2397 = scmp.lt.s32.totalorder %s28, 1
        %s2398 = scalar_select %p2397, %s28, 1
        %s2399 = smul.addr %s2398, 8
        %s2400 = smul.addr %s2399, 8
        %s2401 = scalar_lea.vmem %s14, %s2400
      $region92: #{usgan_forward.2} parent=87 // pred_fallthru
        _
      // Predicated region
      $region93: #{usgan_forward.2} parent=87 // pred_check
        %p2402 = pneg %p441
      $region94: #{usgan_forward.2} parent=87 // pred_check_branch
        %2404 = sbr.rel (%p2402) target = $region96
      $region95: #{usgan_forward.2} parent=87 // pred_region
        %p2405 = scmp.lt.s32.totalorder %s28, 1
        %s2406 = scalar_select %p2405, %s28, 1
        %s2407 = smul.addr %s2406, 8
        %s2408 = smul.addr %s2407, 8
        %s2409 = scalar_lea.vmem %s15, %s2408
      $region96: #{usgan_forward.2} parent=87 // pred_fallthru
        _
    $region88: #{usgan_forward.2} parent=5 // pred_fallthru
      _
  $region6: #{usgan_forward.2} parent=0 // loop_footer
    %s26 = sadd.s32 1, %s22
  $region7: #{usgan_forward.2} parent=0 // loop_footer_branch
    %21 = sbr.rel target = $region3
  $region8: #{usgan_forward.2} parent=0 // loop_exit
    _

// kernel: usgan_forward.3
$region0: #{usgan_forward.3}
  #allocation0 [shape = 'u32[]', space=smem, size = 0x4, offset = 0x4, fixed_abs, tag = 'smem constant byte address 0x4 - core index']
  #allocation1 [shape = 'u32[72,128]{1,0:T(1,128)}', space=vmem, size = 0x9000, scoped, tag = 'internal scratch']
  %s0 = inlined_call_operand.vmem [shape: f32[8,8,8], index: 0, kind: input, shape index: {}]
  %s1 = inlined_call_operand.vmem [shape: f32[8,8,4], index: 1, kind: input, shape index: {}]
  %s2 = inlined_call_operand.vmem [shape: f32[8,8,4], index: 2, kind: input, shape index: {}]
  %s3 = inlined_call_operand.vmem [shape: f32[8,8,4], index: 3, kind: input, shape index: {}]
  %s4 = inlined_call_operand.vmem [shape: f32[8,8,4], index: 4, kind: input, shape index: {}]
  %s5 = inlined_call_operand.vmem [shape: f32[8,192], index: 5, kind: input, shape index: {}]
  %s6 = inlined_call_operand.vmem [shape: f32[1,192], index: 6, kind: input, shape index: {}]
  %s7 = inlined_call_operand.vmem [shape: f32[32,96], index: 7, kind: input, shape index: {}]
  %s8 = inlined_call_operand.vmem [shape: f32[1,96], index: 8, kind: input, shape index: {}]
  %s9 = inlined_call_operand.vmem [shape: f32[32,96], index: 9, kind: input, shape index: {}]
  %s10 = inlined_call_operand.vmem [shape: f32[1,96], index: 10, kind: input, shape index: {}]
  %s11 = inlined_call_operand.vmem [shape: f32[64,4], index: 11, kind: input, shape index: {}]
  %s12 = inlined_call_operand.vmem [shape: f32[1,4], index: 12, kind: input, shape index: {}]
  %s13 = inlined_call_operand.hbm [shape: f32[1], index: 13, kind: output, shape index: {}]
  %s14 = sld [smem:[#allocation0]]
  $region62: #{usgan_forward.3} parent=0
    _
  %s16 = ssub.s32 1, %s14
  %s17 = scalar_select 0, %s16, %s14
  $region1: #{usgan_forward.3} parent=0
    #allocation2 [shape = 'u8[512]{0}', space=smem, size = 0x200, scoped, tag = 'output window, operand 0, single buffered']
    #allocation3 [shape = 's32[1]{0}', space=sflag, size = 0x4, scoped, tag = 'scoped memory for usgan_forward.3']
    %18 = vsyncpa [#allocation3], 0
    // Predicated region
    $region2: #{usgan_forward.3} parent=1 // pred_check
      _
    $region3: #{usgan_forward.3} parent=1 // pred_check_branch
      %20 = sbr.rel (0) target = $region5
    $region4: #{usgan_forward.3} parent=1 // pred_region
      _
    $region5: #{usgan_forward.3} parent=1 // pred_fallthru
      _
    // Predicated region
    $region6: #{usgan_forward.3} parent=1 // pred_check
      _
    $region7: #{usgan_forward.3} parent=1 // pred_check_branch
      %22 = sbr.rel (0) target = $region9
    $region8: #{usgan_forward.3} parent=1 // pred_region
      _
    $region9: #{usgan_forward.3} parent=1 // pred_fallthru
      _
    // Predicated region
    $region10: #{usgan_forward.3} parent=1 // pred_check
      _
    $region11: #{usgan_forward.3} parent=1 // pred_check_branch
      %24 = sbr.rel (0) target = $region13
    $region12: #{usgan_forward.3} parent=1 // pred_region
      _
    $region13: #{usgan_forward.3} parent=1 // pred_fallthru
      _
    // Predicated region
    $region14: #{usgan_forward.3} parent=1 // pred_check
      _
    $region15: #{usgan_forward.3} parent=1 // pred_check_branch
      %26 = sbr.rel (0) target = $region17
    $region16: #{usgan_forward.3} parent=1 // pred_region
      _
    $region17: #{usgan_forward.3} parent=1 // pred_fallthru
      _
    // Predicated region
    $region18: #{usgan_forward.3} parent=1 // pred_check
      _
    $region19: #{usgan_forward.3} parent=1 // pred_check_branch
      %28 = sbr.rel (0) target = $region21
    $region20: #{usgan_forward.3} parent=1 // pred_region
      _
    $region21: #{usgan_forward.3} parent=1 // pred_fallthru
      _
    // Predicated region
    $region22: #{usgan_forward.3} parent=1 // pred_check
      _
    $region23: #{usgan_forward.3} parent=1 // pred_check_branch
      %30 = sbr.rel (0) target = $region25
    $region24: #{usgan_forward.3} parent=1 // pred_region
      _
    $region25: #{usgan_forward.3} parent=1 // pred_fallthru
      _
    // Predicated region
    $region26: #{usgan_forward.3} parent=1 // pred_check
      _
    $region27: #{usgan_forward.3} parent=1 // pred_check_branch
      %32 = sbr.rel (0) target = $region29
    $region28: #{usgan_forward.3} parent=1 // pred_region
      _
    $region29: #{usgan_forward.3} parent=1 // pred_fallthru
      _
    // Predicated region
    $region30: #{usgan_forward.3} parent=1 // pred_check
      _
    $region31: #{usgan_forward.3} parent=1 // pred_check_branch
      %34 = sbr.rel (0) target = $region33
    $region32: #{usgan_forward.3} parent=1 // pred_region
      _
    $region33: #{usgan_forward.3} parent=1 // pred_fallthru
      _
    // Predicated region
    $region34: #{usgan_forward.3} parent=1 // pred_check
      _
    $region35: #{usgan_forward.3} parent=1 // pred_check_branch
      %36 = sbr.rel (0) target = $region37
    $region36: #{usgan_forward.3} parent=1 // pred_region
      _
    $region37: #{usgan_forward.3} parent=1 // pred_fallthru
      _
    // Predicated region
    $region38: #{usgan_forward.3} parent=1 // pred_check
      _
    $region39: #{usgan_forward.3} parent=1 // pred_check_branch
      %38 = sbr.rel (0) target = $region41
    $region40: #{usgan_forward.3} parent=1 // pred_region
      _
    $region41: #{usgan_forward.3} parent=1 // pred_fallthru
      _
    // Predicated region
    $region42: #{usgan_forward.3} parent=1 // pred_check
      _
    $region43: #{usgan_forward.3} parent=1 // pred_check_branch
      %40 = sbr.rel (0) target = $region45
    $region44: #{usgan_forward.3} parent=1 // pred_region
      _
    $region45: #{usgan_forward.3} parent=1 // pred_fallthru
      _
    // Predicated region
    $region46: #{usgan_forward.3} parent=1 // pred_check
      _
    $region47: #{usgan_forward.3} parent=1 // pred_check_branch
      %42 = sbr.rel (0) target = $region49
    $region48: #{usgan_forward.3} parent=1 // pred_region
      _
    $region49: #{usgan_forward.3} parent=1 // pred_fallthru
      _
    // Predicated region
    $region50: #{usgan_forward.3} parent=1 // pred_check
      _
    $region51: #{usgan_forward.3} parent=1 // pred_check_branch
      %44 = sbr.rel (0) target = $region53
    $region52: #{usgan_forward.3} parent=1 // pred_region
      _
    $region53: #{usgan_forward.3} parent=1 // pred_fallthru
      _
    %v45 = vld [vmem:[%s5] sm:$0xff]
    %v46 = vld [vmem:[%s5 + $0x8] sm:$0xff]
    %v47 = vld [vmem:[%s6] sm:$0x3]
    %v48 = vld [vmem:[%s7] sm:$0xff]
    %v49 = vld [vmem:[%s7 + $0x8] sm:$0xff]
    %v50 = vld [vmem:[%s7 + $0x10] sm:$0xff]
    %v51 = vld [vmem:[%s7 + $0x18] sm:$0xff]
    %v52 = vld [vmem:[%s9] sm:$0xff]
    %v53 = vld [vmem:[%s9 + $0x8] sm:$0xff]
    %v54 = vld [vmem:[%s9 + $0x10] sm:$0xff]
    %v55 = vld [vmem:[%s9 + $0x18] sm:$0xff]
    %v56 = vld [vmem:[%s8] sm:$0x1]
    %v58 = vperm.slane %v56, 0
    %v60 = vld [vmem:[%s10] sm:$0x1]
    %v62 = vperm.slane %v60, 0
    %v64 = vld [vmem:[%s11] sm:$0xff]
    %v65 = vld [vmem:[%s11 + $0x8] sm:$0xff]
    %v66 = vld [vmem:[%s11 + $0x10] sm:$0xff]
    %v67 = vld [vmem:[%s11 + $0x18] sm:$0xff]
    %v68 = vld [vmem:[%s11 + $0x20] sm:$0xff]
    %v69 = vld [vmem:[%s11 + $0x28] sm:$0xff]
    %v70 = vld [vmem:[%s11 + $0x30] sm:$0xff]
    %v71 = vld [vmem:[%s11 + $0x38] sm:$0xff]
    %v72 = vld [vmem:[%s12] sm:$0x1]
    %v73 = vld [vmem:[%s0] sm:$0xff]
    %v74 = vld [vmem:[%s0 + $0x8] sm:$0xff]
    %v75 = vld [vmem:[%s0 + $0x10] sm:$0xff]
    %v76 = vld [vmem:[%s0 + $0x18] sm:$0xff]
    %v77 = vld [vmem:[%s0 + $0x20] sm:$0xff]
    %v78 = vld [vmem:[%s0 + $0x28] sm:$0xff]
    %v79 = vld [vmem:[%s0 + $0x30] sm:$0xff]
    %v80 = vld [vmem:[%s0 + $0x38] sm:$0xff]
    %v82 = vperm.slane %v47, 0
    %v83 = vperm.slane %v47, 1
    %vm86 = vcmask 64512
    %v88 = vsel %vm86, %v73, 0
    %v91 = vsel %vm86, %v74, 0
    %v94 = vsel %vm86, %v75, 0
    %v97 = vsel %vm86, %v76, 0
    %v100 = vsel %vm86, %v77, 0
    %v103 = vsel %vm86, %v78, 0
    %v106 = vsel %vm86, %v79, 0
    %v109 = vsel %vm86, %v80, 0
    %111 = vmatpush.msra.mxu0 0.0
    %112 = vmatpush.msra.mxu0 0.0
    %113 = vmatpush.msra.mxu0 0.0
    %114 = vmatpush.msra.mxu0 0.0
    %115 = vmatpush.msra.mxu0 0.0
    %116 = vmatpush.msra.mxu0 0.0
    %117 = vmatpush.msra.mxu0 0.0
    %118 = vmatpush.msra.mxu0 0.0
    %119 = vmatpush.msra.mxu0 0.0
    %120 = vmatpush.msra.mxu0 0.0
    %121 = vmatpush.msra.mxu0 0.0
    %122 = vmatpush.msra.mxu0 0.0
    %123 = vmatpush.msra.mxu0 0.0
    %124 = vmatpush.msra.mxu0 0.0
    %125 = vmatpush.msra.mxu0 0.0
    %126 = vmatpush.msra.mxu0 %v45
    %127 = vmatmul.f32.gmra.mxu0 %v88
    %v128 = vpop.f32.mrf.mxu0
    %v129 = vadd.f32 %v82, %v128
    %130 = vmatmul.f32.gmra.mxu0 %v91
    %v131 = vpop.f32.mrf.mxu0
    %v132 = vadd.f32 %v82, %v131
    %133 = vmatmul.f32.gmra.mxu0 %v94
    %v134 = vpop.f32.mrf.mxu0
    %v135 = vadd.f32 %v82, %v134
    %136 = vmatmul.f32.gmra.mxu0 %v97
    %v137 = vpop.f32.mrf.mxu0
    %v138 = vadd.f32 %v82, %v137
    %139 = vmatmul.f32.gmra.mxu0 %v100
    %v140 = vpop.f32.mrf.mxu0
    %v141 = vadd.f32 %v82, %v140
    %142 = vmatmul.f32.gmra.mxu0 %v103
    %v143 = vpop.f32.mrf.mxu0
    %v144 = vadd.f32 %v82, %v143
    %145 = vmatmul.f32.gmra.mxu0 %v106
    %v146 = vpop.f32.mrf.mxu0
    %v147 = vadd.f32 %v82, %v146
    %148 = vmatmul.f32.gmra.mxu0 %v109
    %v149 = vpop.f32.mrf.mxu0
    %v150 = vadd.f32 %v82, %v149
    %151 = vdwg.mxu0
    %152 = vmatpush.msra.mxu0 0.0
    %153 = vmatpush.msra.mxu0 0.0
    %154 = vmatpush.msra.mxu0 0.0
    %155 = vmatpush.msra.mxu0 0.0
    %156 = vmatpush.msra.mxu0 0.0
    %157 = vmatpush.msra.mxu0 0.0
    %158 = vmatpush.msra.mxu0 0.0
    %159 = vmatpush.msra.mxu0 0.0
    %160 = vmatpush.msra.mxu0 0.0
    %161 = vmatpush.msra.mxu0 0.0
    %162 = vmatpush.msra.mxu0 0.0
    %163 = vmatpush.msra.mxu0 0.0
    %164 = vmatpush.msra.mxu0 0.0
    %165 = vmatpush.msra.mxu0 0.0
    %166 = vmatpush.msra.mxu0 0.0
    %167 = vmatpush.msra.mxu0 %v46
    %168 = vmatmul.f32.gmra.mxu0 %v88
    %v169 = vpop.f32.mrf.mxu0
    %v170 = vadd.f32 %v83, %v169
    %171 = vmatmul.f32.gmra.mxu0 %v91
    %v172 = vpop.f32.mrf.mxu0
    %v173 = vadd.f32 %v83, %v172
    %174 = vmatmul.f32.gmra.mxu0 %v94
    %v175 = vpop.f32.mrf.mxu0
    %v176 = vadd.f32 %v83, %v175
    %177 = vmatmul.f32.gmra.mxu0 %v97
    %v178 = vpop.f32.mrf.mxu0
    %v179 = vadd.f32 %v83, %v178
    %180 = vmatmul.f32.gmra.mxu0 %v100
    %v181 = vpop.f32.mrf.mxu0
    %v182 = vadd.f32 %v83, %v181
    %183 = vmatmul.f32.gmra.mxu0 %v103
    %v184 = vpop.f32.mrf.mxu0
    %v185 = vadd.f32 %v83, %v184
    %186 = vmatmul.f32.gmra.mxu0 %v106
    %v187 = vpop.f32.mrf.mxu0
    %v188 = vadd.f32 %v83, %v187
    %189 = vmatmul.f32.gmra.mxu0 %v109
    %v190 = vpop.f32.mrf.mxu0
    %v191 = vadd.f32 %v83, %v190
    %192 = vdwg.mxu0
    %vm193 = vcmask 261120
    %v195 = vsel %vm193, 0.0, 0
    %197 = vmatpush.msra.mxu0 0.0
    %198 = vmatpush.msra.mxu0 0.0
    %199 = vmatpush.msra.mxu0 0.0
    %200 = vmatpush.msra.mxu0 0.0
    %201 = vmatpush.msra.mxu0 0.0
    %202 = vmatpush.msra.mxu0 0.0
    %203 = vmatpush.msra.mxu0 0.0
    %204 = vmatpush.msra.mxu0 0.0
    %205 = vmatpush.msra.mxu0 0.0
    %206 = vmatpush.msra.mxu0 0.0
    %207 = vmatpush.msra.mxu0 0.0
    %208 = vmatpush.msra.mxu0 0.0
    %209 = vmatpush.msra.mxu0 %v51
    %210 = vmatpush.msra.mxu0 %v50
    %211 = vmatpush.msra.mxu0 %v49
    %212 = vmatpush.msra.mxu0 %v48
    %213 = vmatmul.f32.gmra.mxu0 %v195
    %v214 = vpop.f32.mrf.mxu0
    %v215 = vadd.f32 %v58, %v214
    %216 = vdwg.mxu0
    %v217 = vadd.f32 %v129, %v215
    %v218 = vxor.u32 %v217, 2147483648
    %v219 = vmul.f32 %v218, 1.442695
    %v220 = vpow.pop %v219
    %v221 = vadd.f32 %v220, 1.0
    %v222 = vrcp.pop %v221
    %v223 = vmul.f32 %v221, %v222
    %v224 = vsub.f32 1.0, %v223
    %v225 = vmul.f32 %v222, %v224
    %v226 = vadd.f32 %v222, %v225
    %vm227 = vweird.f32 %v221
    %vm228 = vweird.f32 %v222
    %vm229 = vmor %vm227, %vm228
    %v230 = vsel %vm229, %v222, %v226
    %v231 = vand.u32 2147483647, %v221
    %vm232 = vcmp.eq.f32.partialorder %v231, 8.507059e+37
    %v233 = vand.u32 %v221, 2147483648
    %v234 = vor.u32 1.1754944e-38, %v233
    %v235 = vsel %vm232, %v234, %v230
    %v236 = vmul.f32 1.0, %v235
    %238 = vrot.lane.b32.xlu0 %v215, 64
    %v239 = vpop.permute.xlu0 %238
    %v241 = vmul.f32 %v236, %v239
    %243 = vrot.lane.b32.xlu0 %v241, 64
    %v244 = vpop.permute.xlu0 %243
    %v246 = vadd.f32 %v129, %v244
    %v247 = vtanh.pop %v246
    %v248 = vsub.f32 1.0, %v236
    %250 = vrot.lane.b32.xlu0 %v247, 96
    %v251 = vpop.permute.xlu0 %250
    %v253 = vmul.f32 %v248, %v251
    %v254 = vmul.f32 %v236, 0.0
    %v255 = vadd.f32 %v253, %v254
    %257 = vrot.lane.b32.xlu0 %v255, 96
    %v258 = vpop.permute.xlu0 %257
    %v259 = vsel %vm193, %v258, 0
    %261 = vmatpush.msra.mxu0 0.0
    %262 = vmatpush.msra.mxu0 0.0
    %263 = vmatpush.msra.mxu0 0.0
    %264 = vmatpush.msra.mxu0 0.0
    %265 = vmatpush.msra.mxu0 0.0
    %266 = vmatpush.msra.mxu0 0.0
    %267 = vmatpush.msra.mxu0 0.0
    %268 = vmatpush.msra.mxu0 0.0
    %269 = vmatpush.msra.mxu0 0.0
    %270 = vmatpush.msra.mxu0 0.0
    %271 = vmatpush.msra.mxu0 0.0
    %272 = vmatpush.msra.mxu0 0.0
    %273 = vmatpush.msra.mxu0 %v51
    %274 = vmatpush.msra.mxu0 %v50
    %275 = vmatpush.msra.mxu0 %v49
    %276 = vmatpush.msra.mxu0 %v48
    %277 = vmatmul.f32.gmra.mxu0 %v259
    %v278 = vpop.f32.mrf.mxu0
    %v279 = vadd.f32 %v58, %v278
    %280 = vdwg.mxu0
    %v281 = vadd.f32 %v132, %v279
    %v282 = vxor.u32 %v281, 2147483648
    %v283 = vmul.f32 %v282, 1.442695
    %v284 = vpow.pop %v283
    %v285 = vadd.f32 %v284, 1.0
    %v286 = vrcp.pop %v285
    %v287 = vmul.f32 %v285, %v286
    %v288 = vsub.f32 1.0, %v287
    %v289 = vmul.f32 %v286, %v288
    %v290 = vadd.f32 %v286, %v289
    %vm291 = vweird.f32 %v285
    %vm292 = vweird.f32 %v286
    %vm293 = vmor %vm291, %vm292
    %v294 = vsel %vm293, %v286, %v290
    %v295 = vand.u32 2147483647, %v285
    %vm296 = vcmp.eq.f32.partialorder %v295, 8.507059e+37
    %v297 = vand.u32 %v285, 2147483648
    %v298 = vor.u32 1.1754944e-38, %v297
    %v299 = vsel %vm296, %v298, %v294
    %v300 = vmul.f32 1.0, %v299
    %302 = vrot.lane.b32.xlu0 %v279, 64
    %v303 = vpop.permute.xlu0 %302
    %v305 = vmul.f32 %v300, %v303
    %307 = vrot.lane.b32.xlu0 %v305, 64
    %v308 = vpop.permute.xlu0 %307
    %v310 = vadd.f32 %v132, %v308
    %v311 = vtanh.pop %v310
    %v312 = vsub.f32 1.0, %v300
    %314 = vrot.lane.b32.xlu0 %v311, 96
    %v315 = vpop.permute.xlu0 %314
    %v317 = vmul.f32 %v312, %v315
    %v318 = vmul.f32 %v300, %v255
    %v319 = vadd.f32 %v317, %v318
    %321 = vrot.lane.b32.xlu0 %v319, 96
    %v322 = vpop.permute.xlu0 %321
    %v323 = vsel %vm193, %v322, 0
    %325 = vmatpush.msra.mxu0 0.0
    %326 = vmatpush.msra.mxu0 0.0
    %327 = vmatpush.msra.mxu0 0.0
    %328 = vmatpush.msra.mxu0 0.0
    %329 = vmatpush.msra.mxu0 0.0
    %330 = vmatpush.msra.mxu0 0.0
    %331 = vmatpush.msra.mxu0 0.0
    %332 = vmatpush.msra.mxu0 0.0
    %333 = vmatpush.msra.mxu0 0.0
    %334 = vmatpush.msra.mxu0 0.0
    %335 = vmatpush.msra.mxu0 0.0
    %336 = vmatpush.msra.mxu0 0.0
    %337 = vmatpush.msra.mxu0 %v51
    %338 = vmatpush.msra.mxu0 %v50
    %339 = vmatpush.msra.mxu0 %v49
    %340 = vmatpush.msra.mxu0 %v48
    %341 = vmatmul.f32.gmra.mxu0 %v323
    %v342 = vpop.f32.mrf.mxu0
    %v343 = vadd.f32 %v58, %v342
    %344 = vdwg.mxu0
    %v345 = vadd.f32 %v135, %v343
    %v346 = vxor.u32 %v345, 2147483648
    %v347 = vmul.f32 %v346, 1.442695
    %v348 = vpow.pop %v347
    %v349 = vadd.f32 %v348, 1.0
    %v350 = vrcp.pop %v349
    %v351 = vmul.f32 %v349, %v350
    %v352 = vsub.f32 1.0, %v351
    %v353 = vmul.f32 %v350, %v352
    %v354 = vadd.f32 %v350, %v353
    %vm355 = vweird.f32 %v349
    %vm356 = vweird.f32 %v350
    %vm357 = vmor %vm355, %vm356
    %v358 = vsel %vm357, %v350, %v354
    %v359 = vand.u32 2147483647, %v349
    %vm360 = vcmp.eq.f32.partialorder %v359, 8.507059e+37
    %v361 = vand.u32 %v349, 2147483648
    %v362 = vor.u32 1.1754944e-38, %v361
    %v363 = vsel %vm360, %v362, %v358
    %v364 = vmul.f32 1.0, %v363
    %366 = vrot.lane.b32.xlu0 %v343, 64
    %v367 = vpop.permute.xlu0 %366
    %v369 = vmul.f32 %v364, %v367
    %371 = vrot.lane.b32.xlu0 %v369, 64
    %v372 = vpop.permute.xlu0 %371
    %v374 = vadd.f32 %v135, %v372
    %v375 = vtanh.pop %v374
    %v376 = vsub.f32 1.0, %v364
    %378 = vrot.lane.b32.xlu0 %v375, 96
    %v379 = vpop.permute.xlu0 %378
    %v381 = vmul.f32 %v376, %v379
    %v382 = vmul.f32 %v364, %v319
    %v383 = vadd.f32 %v381, %v382
    %385 = vrot.lane.b32.xlu0 %v383, 96
    %v386 = vpop.permute.xlu0 %385
    %v387 = vsel %vm193, %v386, 0
    %389 = vmatpush.msra.mxu0 0.0
    %390 = vmatpush.msra.mxu0 0.0
    %391 = vmatpush.msra.mxu0 0.0
    %392 = vmatpush.msra.mxu0 0.0
    %393 = vmatpush.msra.mxu0 0.0
    %394 = vmatpush.msra.mxu0 0.0
    %395 = vmatpush.msra.mxu0 0.0
    %396 = vmatpush.msra.mxu0 0.0
    %397 = vmatpush.msra.mxu0 0.0
    %398 = vmatpush.msra.mxu0 0.0
    %399 = vmatpush.msra.mxu0 0.0
    %400 = vmatpush.msra.mxu0 0.0
    %401 = vmatpush.msra.mxu0 %v51
    %402 = vmatpush.msra.mxu0 %v50
    %403 = vmatpush.msra.mxu0 %v49
    %404 = vmatpush.msra.mxu0 %v48
    %405 = vmatmul.f32.gmra.mxu0 %v387
    %v406 = vpop.f32.mrf.mxu0
    %v407 = vadd.f32 %v58, %v406
    %408 = vdwg.mxu0
    %v409 = vadd.f32 %v138, %v407
    %v410 = vxor.u32 %v409, 2147483648
    %v411 = vmul.f32 %v410, 1.442695
    %v412 = vpow.pop %v411
    %v413 = vadd.f32 %v412, 1.0
    %v414 = vrcp.pop %v413
    %v415 = vmul.f32 %v413, %v414
    %v416 = vsub.f32 1.0, %v415
    %v417 = vmul.f32 %v414, %v416
    %v418 = vadd.f32 %v414, %v417
    %vm419 = vweird.f32 %v413
    %vm420 = vweird.f32 %v414
    %vm421 = vmor %vm419, %vm420
    %v422 = vsel %vm421, %v414, %v418
    %v423 = vand.u32 2147483647, %v413
    %vm424 = vcmp.eq.f32.partialorder %v423, 8.507059e+37
    %v425 = vand.u32 %v413, 2147483648
    %v426 = vor.u32 1.1754944e-38, %v425
    %v427 = vsel %vm424, %v426, %v422
    %v428 = vmul.f32 1.0, %v427
    %430 = vrot.lane.b32.xlu0 %v407, 64
    %v431 = vpop.permute.xlu0 %430
    %v433 = vmul.f32 %v428, %v431
    %435 = vrot.lane.b32.xlu0 %v433, 64
    %v436 = vpop.permute.xlu0 %435
    %v438 = vadd.f32 %v138, %v436
    %v439 = vtanh.pop %v438
    %v440 = vsub.f32 1.0, %v428
    %442 = vrot.lane.b32.xlu0 %v439, 96
    %v443 = vpop.permute.xlu0 %442
    %v445 = vmul.f32 %v440, %v443
    %v446 = vmul.f32 %v428, %v383
    %v447 = vadd.f32 %v445, %v446
    %449 = vrot.lane.b32.xlu0 %v447, 96
    %v450 = vpop.permute.xlu0 %449
    %v451 = vsel %vm193, %v450, 0
    %453 = vmatpush.msra.mxu0 0.0
    %454 = vmatpush.msra.mxu0 0.0
    %455 = vmatpush.msra.mxu0 0.0
    %456 = vmatpush.msra.mxu0 0.0
    %457 = vmatpush.msra.mxu0 0.0
    %458 = vmatpush.msra.mxu0 0.0
    %459 = vmatpush.msra.mxu0 0.0
    %460 = vmatpush.msra.mxu0 0.0
    %461 = vmatpush.msra.mxu0 0.0
    %462 = vmatpush.msra.mxu0 0.0
    %463 = vmatpush.msra.mxu0 0.0
    %464 = vmatpush.msra.mxu0 0.0
    %465 = vmatpush.msra.mxu0 %v51
    %466 = vmatpush.msra.mxu0 %v50
    %467 = vmatpush.msra.mxu0 %v49
    %468 = vmatpush.msra.mxu0 %v48
    %469 = vmatmul.f32.gmra.mxu0 %v451
    %v470 = vpop.f32.mrf.mxu0
    %v471 = vadd.f32 %v58, %v470
    %472 = vdwg.mxu0
    %v473 = vadd.f32 %v141, %v471
    %v474 = vxor.u32 %v473, 2147483648
    %v475 = vmul.f32 %v474, 1.442695
    %v476 = vpow.pop %v475
    %v477 = vadd.f32 %v476, 1.0
    %v478 = vrcp.pop %v477
    %v479 = vmul.f32 %v477, %v478
    %v480 = vsub.f32 1.0, %v479
    %v481 = vmul.f32 %v478, %v480
    %v482 = vadd.f32 %v478, %v481
    %vm483 = vweird.f32 %v477
    %vm484 = vweird.f32 %v478
    %vm485 = vmor %vm483, %vm484
    %v486 = vsel %vm485, %v478, %v482
    %v487 = vand.u32 2147483647, %v477
    %vm488 = vcmp.eq.f32.partialorder %v487, 8.507059e+37
    %v489 = vand.u32 %v477, 2147483648
    %v490 = vor.u32 1.1754944e-38, %v489
    %v491 = vsel %vm488, %v490, %v486
    %v492 = vmul.f32 1.0, %v491
    %494 = vrot.lane.b32.xlu0 %v471, 64
    %v495 = vpop.permute.xlu0 %494
    %v497 = vmul.f32 %v492, %v495
    %499 = vrot.lane.b32.xlu0 %v497, 64
    %v500 = vpop.permute.xlu0 %499
    %v502 = vadd.f32 %v141, %v500
    %v503 = vtanh.pop %v502
    %v504 = vsub.f32 1.0, %v492
    %506 = vrot.lane.b32.xlu0 %v503, 96
    %v507 = vpop.permute.xlu0 %506
    %v509 = vmul.f32 %v504, %v507
    %v510 = vmul.f32 %v492, %v447
    %v511 = vadd.f32 %v509, %v510
    %513 = vrot.lane.b32.xlu0 %v511, 96
    %v514 = vpop.permute.xlu0 %513
    %v515 = vsel %vm193, %v514, 0
    %517 = vmatpush.msra.mxu0 0.0
    %518 = vmatpush.msra.mxu0 0.0
    %519 = vmatpush.msra.mxu0 0.0
    %520 = vmatpush.msra.mxu0 0.0
    %521 = vmatpush.msra.mxu0 0.0
    %522 = vmatpush.msra.mxu0 0.0
    %523 = vmatpush.msra.mxu0 0.0
    %524 = vmatpush.msra.mxu0 0.0
    %525 = vmatpush.msra.mxu0 0.0
    %526 = vmatpush.msra.mxu0 0.0
    %527 = vmatpush.msra.mxu0 0.0
    %528 = vmatpush.msra.mxu0 0.0
    %529 = vmatpush.msra.mxu0 %v51
    %530 = vmatpush.msra.mxu0 %v50
    %531 = vmatpush.msra.mxu0 %v49
    %532 = vmatpush.msra.mxu0 %v48
    %533 = vmatmul.f32.gmra.mxu0 %v515
    %v534 = vpop.f32.mrf.mxu0
    %v535 = vadd.f32 %v58, %v534
    %536 = vdwg.mxu0
    %v537 = vadd.f32 %v144, %v535
    %v538 = vxor.u32 %v537, 2147483648
    %v539 = vmul.f32 %v538, 1.442695
    %v540 = vpow.pop %v539
    %v541 = vadd.f32 %v540, 1.0
    %v542 = vrcp.pop %v541
    %v543 = vmul.f32 %v541, %v542
    %v544 = vsub.f32 1.0, %v543
    %v545 = vmul.f32 %v542, %v544
    %v546 = vadd.f32 %v542, %v545
    %vm547 = vweird.f32 %v541
    %vm548 = vweird.f32 %v542
    %vm549 = vmor %vm547, %vm548
    %v550 = vsel %vm549, %v542, %v546
    %v551 = vand.u32 2147483647, %v541
    %vm552 = vcmp.eq.f32.partialorder %v551, 8.507059e+37
    %v553 = vand.u32 %v541, 2147483648
    %v554 = vor.u32 1.1754944e-38, %v553
    %v555 = vsel %vm552, %v554, %v550
    %v556 = vmul.f32 1.0, %v555
    %558 = vrot.lane.b32.xlu0 %v535, 64
    %v559 = vpop.permute.xlu0 %558
    %v561 = vmul.f32 %v556, %v559
    %563 = vrot.lane.b32.xlu0 %v561, 64
    %v564 = vpop.permute.xlu0 %563
    %v566 = vadd.f32 %v144, %v564
    %v567 = vtanh.pop %v566
    %v568 = vsub.f32 1.0, %v556
    %570 = vrot.lane.b32.xlu0 %v567, 96
    %v571 = vpop.permute.xlu0 %570
    %v573 = vmul.f32 %v568, %v571
    %v574 = vmul.f32 %v556, %v511
    %v575 = vadd.f32 %v573, %v574
    %577 = vrot.lane.b32.xlu0 %v575, 96
    %v578 = vpop.permute.xlu0 %577
    %v579 = vsel %vm193, %v578, 0
    %581 = vmatpush.msra.mxu0 0.0
    %582 = vmatpush.msra.mxu0 0.0
    %583 = vmatpush.msra.mxu0 0.0
    %584 = vmatpush.msra.mxu0 0.0
    %585 = vmatpush.msra.mxu0 0.0
    %586 = vmatpush.msra.mxu0 0.0
    %587 = vmatpush.msra.mxu0 0.0
    %588 = vmatpush.msra.mxu0 0.0
    %589 = vmatpush.msra.mxu0 0.0
    %590 = vmatpush.msra.mxu0 0.0
    %591 = vmatpush.msra.mxu0 0.0
    %592 = vmatpush.msra.mxu0 0.0
    %593 = vmatpush.msra.mxu0 %v51
    %594 = vmatpush.msra.mxu0 %v50
    %595 = vmatpush.msra.mxu0 %v49
    %596 = vmatpush.msra.mxu0 %v48
    %597 = vmatmul.f32.gmra.mxu0 %v579
    %v598 = vpop.f32.mrf.mxu0
    %v599 = vadd.f32 %v58, %v598
    %600 = vdwg.mxu0
    %v601 = vadd.f32 %v147, %v599
    %v602 = vxor.u32 %v601, 2147483648
    %v603 = vmul.f32 %v602, 1.442695
    %v604 = vpow.pop %v603
    %v605 = vadd.f32 %v604, 1.0
    %v606 = vrcp.pop %v605
    %v607 = vmul.f32 %v605, %v606
    %v608 = vsub.f32 1.0, %v607
    %v609 = vmul.f32 %v606, %v608
    %v610 = vadd.f32 %v606, %v609
    %vm611 = vweird.f32 %v605
    %vm612 = vweird.f32 %v606
    %vm613 = vmor %vm611, %vm612
    %v614 = vsel %vm613, %v606, %v610
    %v615 = vand.u32 2147483647, %v605
    %vm616 = vcmp.eq.f32.partialorder %v615, 8.507059e+37
    %v617 = vand.u32 %v605, 2147483648
    %v618 = vor.u32 1.1754944e-38, %v617
    %v619 = vsel %vm616, %v618, %v614
    %v620 = vmul.f32 1.0, %v619
    %622 = vrot.lane.b32.xlu0 %v599, 64
    %v623 = vpop.permute.xlu0 %622
    %v625 = vmul.f32 %v620, %v623
    %627 = vrot.lane.b32.xlu0 %v625, 64
    %v628 = vpop.permute.xlu0 %627
    %v630 = vadd.f32 %v147, %v628
    %v631 = vtanh.pop %v630
    %v632 = vsub.f32 1.0, %v620
    %634 = vrot.lane.b32.xlu0 %v631, 96
    %v635 = vpop.permute.xlu0 %634
    %v637 = vmul.f32 %v632, %v635
    %v638 = vmul.f32 %v620, %v575
    %v639 = vadd.f32 %v637, %v638
    %641 = vrot.lane.b32.xlu0 %v639, 96
    %v642 = vpop.permute.xlu0 %641
    %v643 = vsel %vm193, %v642, 0
    %645 = vmatpush.msra.mxu0 0.0
    %646 = vmatpush.msra.mxu0 0.0
    %647 = vmatpush.msra.mxu0 0.0
    %648 = vmatpush.msra.mxu0 0.0
    %649 = vmatpush.msra.mxu0 0.0
    %650 = vmatpush.msra.mxu0 0.0
    %651 = vmatpush.msra.mxu0 0.0
    %652 = vmatpush.msra.mxu0 0.0
    %653 = vmatpush.msra.mxu0 0.0
    %654 = vmatpush.msra.mxu0 0.0
    %655 = vmatpush.msra.mxu0 0.0
    %656 = vmatpush.msra.mxu0 0.0
    %657 = vmatpush.msra.mxu0 %v51
    %658 = vmatpush.msra.mxu0 %v50
    %659 = vmatpush.msra.mxu0 %v49
    %660 = vmatpush.msra.mxu0 %v48
    %661 = vmatmul.f32.gmra.mxu0 %v643
    %v662 = vpop.f32.mrf.mxu0
    %v663 = vadd.f32 %v58, %v662
    %664 = vdwg.mxu0
    %v665 = vadd.f32 %v150, %v663
    %v666 = vxor.u32 %v665, 2147483648
    %v667 = vmul.f32 %v666, 1.442695
    %v668 = vpow.pop %v667
    %v669 = vadd.f32 %v668, 1.0
    %v670 = vrcp.pop %v669
    %v671 = vmul.f32 %v669, %v670
    %v672 = vsub.f32 1.0, %v671
    %v673 = vmul.f32 %v670, %v672
    %v674 = vadd.f32 %v670, %v673
    %vm675 = vweird.f32 %v669
    %vm676 = vweird.f32 %v670
    %vm677 = vmor %vm675, %vm676
    %v678 = vsel %vm677, %v670, %v674
    %v679 = vand.u32 2147483647, %v669
    %vm680 = vcmp.eq.f32.partialorder %v679, 8.507059e+37
    %v681 = vand.u32 %v669, 2147483648
    %v682 = vor.u32 1.1754944e-38, %v681
    %v683 = vsel %vm680, %v682, %v678
    %v684 = vmul.f32 1.0, %v683
    %686 = vrot.lane.b32.xlu0 %v663, 64
    %v687 = vpop.permute.xlu0 %686
    %v689 = vmul.f32 %v684, %v687
    %691 = vrot.lane.b32.xlu0 %v689, 64
    %v692 = vpop.permute.xlu0 %691
    %v694 = vadd.f32 %v150, %v692
    %v695 = vtanh.pop %v694
    %v696 = vsub.f32 1.0, %v684
    %698 = vrot.lane.b32.xlu0 %v695, 96
    %v699 = vpop.permute.xlu0 %698
    %v701 = vmul.f32 %v696, %v699
    %v702 = vmul.f32 %v684, %v639
    %v703 = vadd.f32 %v701, %v702
    %704 = vmatpush.msra.mxu0 0.0
    %705 = vmatpush.msra.mxu0 0.0
    %706 = vmatpush.msra.mxu0 0.0
    %707 = vmatpush.msra.mxu0 0.0
    %708 = vmatpush.msra.mxu0 0.0
    %709 = vmatpush.msra.mxu0 0.0
    %710 = vmatpush.msra.mxu0 0.0
    %711 = vmatpush.msra.mxu0 0.0
    %712 = vmatpush.msra.mxu0 0.0
    %713 = vmatpush.msra.mxu0 0.0
    %714 = vmatpush.msra.mxu0 0.0
    %715 = vmatpush.msra.mxu0 0.0
    %716 = vmatpush.msra.mxu0 %v55
    %717 = vmatpush.msra.mxu0 %v54
    %718 = vmatpush.msra.mxu0 %v53
    %719 = vmatpush.msra.mxu0 %v52
    %720 = vmatmul.f32.gmra.mxu0 %v195
    %v721 = vpop.f32.mrf.mxu0
    %v722 = vadd.f32 %v62, %v721
    %723 = vdwg.mxu0
    %725 = vrot.lane.b32.xlu0 %v722, 96
    %v726 = vpop.permute.xlu0 %725
    %v728 = vadd.f32 %v150, %v726
    %v729 = vxor.u32 %v728, 2147483648
    %v730 = vmul.f32 %v729, 1.442695
    %v731 = vpow.pop %v730
    %v732 = vadd.f32 %v731, 1.0
    %v733 = vrcp.pop %v732
    %v734 = vmul.f32 %v732, %v733
    %v735 = vsub.f32 1.0, %v734
    %v736 = vmul.f32 %v733, %v735
    %v737 = vadd.f32 %v733, %v736
    %vm738 = vweird.f32 %v732
    %vm739 = vweird.f32 %v733
    %vm740 = vmor %vm738, %vm739
    %v741 = vsel %vm740, %v733, %v737
    %v742 = vand.u32 2147483647, %v732
    %vm743 = vcmp.eq.f32.partialorder %v742, 8.507059e+37
    %v744 = vand.u32 %v732, 2147483648
    %v745 = vor.u32 1.1754944e-38, %v744
    %v746 = vsel %vm743, %v745, %v741
    %v747 = vmul.f32 1.0, %v746
    %v748 = vadd.f32 %v191, %v726
    %v749 = vxor.u32 %v748, 2147483648
    %v750 = vmul.f32 %v749, 1.442695
    %v751 = vpow.pop %v750
    %v752 = vadd.f32 %v751, 1.0
    %v753 = vrcp.pop %v752
    %v754 = vmul.f32 %v752, %v753
    %v755 = vsub.f32 1.0, %v754
    %v756 = vmul.f32 %v753, %v755
    %v757 = vadd.f32 %v753, %v756
    %vm758 = vweird.f32 %v752
    %vm759 = vweird.f32 %v753
    %vm760 = vmor %vm758, %vm759
    %v761 = vsel %vm760, %v753, %v757
    %v762 = vand.u32 2147483647, %v752
    %vm763 = vcmp.eq.f32.partialorder %v762, 8.507059e+37
    %v764 = vand.u32 %v752, 2147483648
    %v765 = vor.u32 1.1754944e-38, %v764
    %v766 = vsel %vm763, %v765, %v761
    %v767 = vmul.f32 1.0, %v766
    %768 = vrot.lane.b32.xlu0 %v722, 32
    %v769 = vpop.permute.xlu0 %768
    %v771 = vmul.f32 %v747, %v769
    %773 = vrot.lane.b32.xlu0 %v771, 64
    %v774 = vpop.permute.xlu0 %773
    %v776 = vadd.f32 %v191, %v774
    %v777 = vtanh.pop %v776
    %v778 = vsub.f32 1.0, %v767
    %780 = vrot.lane.b32.xlu0 %v777, 96
    %v781 = vpop.permute.xlu0 %780
    %v783 = vmul.f32 %v778, %v781
    %v784 = vmul.f32 %v767, 0.0
    %v785 = vadd.f32 %v783, %v784
    %v787 = vsel %vm193, %v785, 0
    %789 = vmatpush.msra.mxu0 0.0
    %790 = vmatpush.msra.mxu0 0.0
    %791 = vmatpush.msra.mxu0 0.0
    %792 = vmatpush.msra.mxu0 0.0
    %793 = vmatpush.msra.mxu0 0.0
    %794 = vmatpush.msra.mxu0 0.0
    %795 = vmatpush.msra.mxu0 0.0
    %796 = vmatpush.msra.mxu0 0.0
    %797 = vmatpush.msra.mxu0 0.0
    %798 = vmatpush.msra.mxu0 0.0
    %799 = vmatpush.msra.mxu0 0.0
    %800 = vmatpush.msra.mxu0 0.0
    %801 = vmatpush.msra.mxu0 %v55
    %802 = vmatpush.msra.mxu0 %v54
    %803 = vmatpush.msra.mxu0 %v53
    %804 = vmatpush.msra.mxu0 %v52
    %805 = vmatmul.f32.gmra.mxu0 %v787
    %v806 = vpop.f32.mrf.mxu0
    %v807 = vadd.f32 %v62, %v806
    %808 = vdwg.mxu0
    %810 = vrot.lane.b32.xlu0 %v807, 96
    %v811 = vpop.permute.xlu0 %810
    %v813 = vadd.f32 %v147, %v811
    %v814 = vxor.u32 %v813, 2147483648
    %v815 = vmul.f32 %v814, 1.442695
    %v816 = vpow.pop %v815
    %v817 = vadd.f32 %v816, 1.0
    %v818 = vrcp.pop %v817
    %v819 = vmul.f32 %v817, %v818
    %v820 = vsub.f32 1.0, %v819
    %v821 = vmul.f32 %v818, %v820
    %v822 = vadd.f32 %v818, %v821
    %vm823 = vweird.f32 %v817
    %vm824 = vweird.f32 %v818
    %vm825 = vmor %vm823, %vm824
    %v826 = vsel %vm825, %v818, %v822
    %v827 = vand.u32 2147483647, %v817
    %vm828 = vcmp.eq.f32.partialorder %v827, 8.507059e+37
    %v829 = vand.u32 %v817, 2147483648
    %v830 = vor.u32 1.1754944e-38, %v829
    %v831 = vsel %vm828, %v830, %v826
    %v832 = vmul.f32 1.0, %v831
    %v833 = vadd.f32 %v188, %v811
    %v834 = vxor.u32 %v833, 2147483648
    %v835 = vmul.f32 %v834, 1.442695
    %v836 = vpow.pop %v835
    %v837 = vadd.f32 %v836, 1.0
    %v838 = vrcp.pop %v837
    %v839 = vmul.f32 %v837, %v838
    %v840 = vsub.f32 1.0, %v839
    %v841 = vmul.f32 %v838, %v840
    %v842 = vadd.f32 %v838, %v841
    %vm843 = vweird.f32 %v837
    %vm844 = vweird.f32 %v838
    %vm845 = vmor %vm843, %vm844
    %v846 = vsel %vm845, %v838, %v842
    %v847 = vand.u32 2147483647, %v837
    %vm848 = vcmp.eq.f32.partialorder %v847, 8.507059e+37
    %v849 = vand.u32 %v837, 2147483648
    %v850 = vor.u32 1.1754944e-38, %v849
    %v851 = vsel %vm848, %v850, %v846
    %v852 = vmul.f32 1.0, %v851
    %853 = vrot.lane.b32.xlu0 %v807, 32
    %v854 = vpop.permute.xlu0 %853
    %v856 = vmul.f32 %v832, %v854
    %858 = vrot.lane.b32.xlu0 %v856, 64
    %v859 = vpop.permute.xlu0 %858
    %v861 = vadd.f32 %v188, %v859
    %v862 = vtanh.pop %v861
    %v863 = vsub.f32 1.0, %v852
    %865 = vrot.lane.b32.xlu0 %v862, 96
    %v866 = vpop.permute.xlu0 %865
    %v868 = vmul.f32 %v863, %v866
    %v869 = vmul.f32 %v852, %v785
    %v870 = vadd.f32 %v868, %v869
    %v872 = vsel %vm193, %v870, 0
    %874 = vmatpush.msra.mxu0 0.0
    %875 = vmatpush.msra.mxu0 0.0
    %876 = vmatpush.msra.mxu0 0.0
    %877 = vmatpush.msra.mxu0 0.0
    %878 = vmatpush.msra.mxu0 0.0
    %879 = vmatpush.msra.mxu0 0.0
    %880 = vmatpush.msra.mxu0 0.0
    %881 = vmatpush.msra.mxu0 0.0
    %882 = vmatpush.msra.mxu0 0.0
    %883 = vmatpush.msra.mxu0 0.0
    %884 = vmatpush.msra.mxu0 0.0
    %885 = vmatpush.msra.mxu0 0.0
    %886 = vmatpush.msra.mxu0 %v55
    %887 = vmatpush.msra.mxu0 %v54
    %888 = vmatpush.msra.mxu0 %v53
    %889 = vmatpush.msra.mxu0 %v52
    %890 = vmatmul.f32.gmra.mxu0 %v872
    %v891 = vpop.f32.mrf.mxu0
    %v892 = vadd.f32 %v62, %v891
    %893 = vdwg.mxu0
    %895 = vrot.lane.b32.xlu0 %v892, 96
    %v896 = vpop.permute.xlu0 %895
    %v898 = vadd.f32 %v144, %v896
    %v899 = vxor.u32 %v898, 2147483648
    %v900 = vmul.f32 %v899, 1.442695
    %v901 = vpow.pop %v900
    %v902 = vadd.f32 %v901, 1.0
    %v903 = vrcp.pop %v902
    %v904 = vmul.f32 %v902, %v903
    %v905 = vsub.f32 1.0, %v904
    %v906 = vmul.f32 %v903, %v905
    %v907 = vadd.f32 %v903, %v906
    %vm908 = vweird.f32 %v902
    %vm909 = vweird.f32 %v903
    %vm910 = vmor %vm908, %vm909
    %v911 = vsel %vm910, %v903, %v907
    %v912 = vand.u32 2147483647, %v902
    %vm913 = vcmp.eq.f32.partialorder %v912, 8.507059e+37
    %v914 = vand.u32 %v902, 2147483648
    %v915 = vor.u32 1.1754944e-38, %v914
    %v916 = vsel %vm913, %v915, %v911
    %v917 = vmul.f32 1.0, %v916
    %v918 = vadd.f32 %v185, %v896
    %v919 = vxor.u32 %v918, 2147483648
    %v920 = vmul.f32 %v919, 1.442695
    %v921 = vpow.pop %v920
    %v922 = vadd.f32 %v921, 1.0
    %v923 = vrcp.pop %v922
    %v924 = vmul.f32 %v922, %v923
    %v925 = vsub.f32 1.0, %v924
    %v926 = vmul.f32 %v923, %v925
    %v927 = vadd.f32 %v923, %v926
    %vm928 = vweird.f32 %v922
    %vm929 = vweird.f32 %v923
    %vm930 = vmor %vm928, %vm929
    %v931 = vsel %vm930, %v923, %v927
    %v932 = vand.u32 2147483647, %v922
    %vm933 = vcmp.eq.f32.partialorder %v932, 8.507059e+37
    %v934 = vand.u32 %v922, 2147483648
    %v935 = vor.u32 1.1754944e-38, %v934
    %v936 = vsel %vm933, %v935, %v931
    %v937 = vmul.f32 1.0, %v936
    %938 = vrot.lane.b32.xlu0 %v892, 32
    %v939 = vpop.permute.xlu0 %938
    %v941 = vmul.f32 %v917, %v939
    %943 = vrot.lane.b32.xlu0 %v941, 64
    %v944 = vpop.permute.xlu0 %943
    %v946 = vadd.f32 %v185, %v944
    %v947 = vtanh.pop %v946
    %v948 = vsub.f32 1.0, %v937
    %950 = vrot.lane.b32.xlu0 %v947, 96
    %v951 = vpop.permute.xlu0 %950
    %v953 = vmul.f32 %v948, %v951
    %v954 = vmul.f32 %v937, %v870
    %v955 = vadd.f32 %v953, %v954
    %v957 = vsel %vm193, %v955, 0
    %959 = vmatpush.msra.mxu0 0.0
    %960 = vmatpush.msra.mxu0 0.0
    %961 = vmatpush.msra.mxu0 0.0
    %962 = vmatpush.msra.mxu0 0.0
    %963 = vmatpush.msra.mxu0 0.0
    %964 = vmatpush.msra.mxu0 0.0
    %965 = vmatpush.msra.mxu0 0.0
    %966 = vmatpush.msra.mxu0 0.0
    %967 = vmatpush.msra.mxu0 0.0
    %968 = vmatpush.msra.mxu0 0.0
    %969 = vmatpush.msra.mxu0 0.0
    %970 = vmatpush.msra.mxu0 0.0
    %971 = vmatpush.msra.mxu0 %v55
    %972 = vmatpush.msra.mxu0 %v54
    %973 = vmatpush.msra.mxu0 %v53
    %974 = vmatpush.msra.mxu0 %v52
    %975 = vmatmul.f32.gmra.mxu0 %v957
    %v976 = vpop.f32.mrf.mxu0
    %v977 = vadd.f32 %v62, %v976
    %978 = vdwg.mxu0
    %980 = vrot.lane.b32.xlu0 %v977, 96
    %v981 = vpop.permute.xlu0 %980
    %v983 = vadd.f32 %v141, %v981
    %v984 = vxor.u32 %v983, 2147483648
    %v985 = vmul.f32 %v984, 1.442695
    %v986 = vpow.pop %v985
    %v987 = vadd.f32 %v986, 1.0
    %v988 = vrcp.pop %v987
    %v989 = vmul.f32 %v987, %v988
    %v990 = vsub.f32 1.0, %v989
    %v991 = vmul.f32 %v988, %v990
    %v992 = vadd.f32 %v988, %v991
    %vm993 = vweird.f32 %v987
    %vm994 = vweird.f32 %v988
    %vm995 = vmor %vm993, %vm994
    %v996 = vsel %vm995, %v988, %v992
    %v997 = vand.u32 2147483647, %v987
    %vm998 = vcmp.eq.f32.partialorder %v997, 8.507059e+37
    %v999 = vand.u32 %v987, 2147483648
    %v1000 = vor.u32 1.1754944e-38, %v999
    %v1001 = vsel %vm998, %v1000, %v996
    %v1002 = vmul.f32 1.0, %v1001
    %v1003 = vadd.f32 %v182, %v981
    %v1004 = vxor.u32 %v1003, 2147483648
    %v1005 = vmul.f32 %v1004, 1.442695
    %v1006 = vpow.pop %v1005
    %v1007 = vadd.f32 %v1006, 1.0
    %v1008 = vrcp.pop %v1007
    %v1009 = vmul.f32 %v1007, %v1008
    %v1010 = vsub.f32 1.0, %v1009
    %v1011 = vmul.f32 %v1008, %v1010
    %v1012 = vadd.f32 %v1008, %v1011
    %vm1013 = vweird.f32 %v1007
    %vm1014 = vweird.f32 %v1008
    %vm1015 = vmor %vm1013, %vm1014
    %v1016 = vsel %vm1015, %v1008, %v1012
    %v1017 = vand.u32 2147483647, %v1007
    %vm1018 = vcmp.eq.f32.partialorder %v1017, 8.507059e+37
    %v1019 = vand.u32 %v1007, 2147483648
    %v1020 = vor.u32 1.1754944e-38, %v1019
    %v1021 = vsel %vm1018, %v1020, %v1016
    %v1022 = vmul.f32 1.0, %v1021
    %1023 = vrot.lane.b32.xlu0 %v977, 32
    %v1024 = vpop.permute.xlu0 %1023
    %v1026 = vmul.f32 %v1002, %v1024
    %1028 = vrot.lane.b32.xlu0 %v1026, 64
    %v1029 = vpop.permute.xlu0 %1028
    %v1031 = vadd.f32 %v182, %v1029
    %v1032 = vtanh.pop %v1031
    %v1033 = vsub.f32 1.0, %v1022
    %1035 = vrot.lane.b32.xlu0 %v1032, 96
    %v1036 = vpop.permute.xlu0 %1035
    %v1038 = vmul.f32 %v1033, %v1036
    %v1039 = vmul.f32 %v1022, %v955
    %v1040 = vadd.f32 %v1038, %v1039
    %v1042 = vsel %vm193, %v1040, 0
    %1044 = vmatpush.msra.mxu0 0.0
    %1045 = vmatpush.msra.mxu0 0.0
    %1046 = vmatpush.msra.mxu0 0.0
    %1047 = vmatpush.msra.mxu0 0.0
    %1048 = vmatpush.msra.mxu0 0.0
    %1049 = vmatpush.msra.mxu0 0.0
    %1050 = vmatpush.msra.mxu0 0.0
    %1051 = vmatpush.msra.mxu0 0.0
    %1052 = vmatpush.msra.mxu0 0.0
    %1053 = vmatpush.msra.mxu0 0.0
    %1054 = vmatpush.msra.mxu0 0.0
    %1055 = vmatpush.msra.mxu0 0.0
    %1056 = vmatpush.msra.mxu0 %v55
    %1057 = vmatpush.msra.mxu0 %v54
    %1058 = vmatpush.msra.mxu0 %v53
    %1059 = vmatpush.msra.mxu0 %v52
    %1060 = vmatmul.f32.gmra.mxu0 %v1042
    %v1061 = vpop.f32.mrf.mxu0
    %v1062 = vadd.f32 %v62, %v1061
    %1063 = vdwg.mxu0
    %1065 = vrot.lane.b32.xlu0 %v1062, 96
    %v1066 = vpop.permute.xlu0 %1065
    %v1068 = vadd.f32 %v138, %v1066
    %v1069 = vxor.u32 %v1068, 2147483648
    %v1070 = vmul.f32 %v1069, 1.442695
    %v1071 = vpow.pop %v1070
    %v1072 = vadd.f32 %v1071, 1.0
    %v1073 = vrcp.pop %v1072
    %v1074 = vmul.f32 %v1072, %v1073
    %v1075 = vsub.f32 1.0, %v1074
    %v1076 = vmul.f32 %v1073, %v1075
    %v1077 = vadd.f32 %v1073, %v1076
    %vm1078 = vweird.f32 %v1072
    %vm1079 = vweird.f32 %v1073
    %vm1080 = vmor %vm1078, %vm1079
    %v1081 = vsel %vm1080, %v1073, %v1077
    %v1082 = vand.u32 2147483647, %v1072
    %vm1083 = vcmp.eq.f32.partialorder %v1082, 8.507059e+37
    %v1084 = vand.u32 %v1072, 2147483648
    %v1085 = vor.u32 1.1754944e-38, %v1084
    %v1086 = vsel %vm1083, %v1085, %v1081
    %v1087 = vmul.f32 1.0, %v1086
    %v1088 = vadd.f32 %v179, %v1066
    %v1089 = vxor.u32 %v1088, 2147483648
    %v1090 = vmul.f32 %v1089, 1.442695
    %v1091 = vpow.pop %v1090
    %v1092 = vadd.f32 %v1091, 1.0
    %v1093 = vrcp.pop %v1092
    %v1094 = vmul.f32 %v1092, %v1093
    %v1095 = vsub.f32 1.0, %v1094
    %v1096 = vmul.f32 %v1093, %v1095
    %v1097 = vadd.f32 %v1093, %v1096
    %vm1098 = vweird.f32 %v1092
    %vm1099 = vweird.f32 %v1093
    %vm1100 = vmor %vm1098, %vm1099
    %v1101 = vsel %vm1100, %v1093, %v1097
    %v1102 = vand.u32 2147483647, %v1092
    %vm1103 = vcmp.eq.f32.partialorder %v1102, 8.507059e+37
    %v1104 = vand.u32 %v1092, 2147483648
    %v1105 = vor.u32 1.1754944e-38, %v1104
    %v1106 = vsel %vm1103, %v1105, %v1101
    %v1107 = vmul.f32 1.0, %v1106
    %1108 = vrot.lane.b32.xlu0 %v1062, 32
    %v1109 = vpop.permute.xlu0 %1108
    %v1111 = vmul.f32 %v1087, %v1109
    %1113 = vrot.lane.b32.xlu0 %v1111, 64
    %v1114 = vpop.permute.xlu0 %1113
    %v1116 = vadd.f32 %v179, %v1114
    %v1117 = vtanh.pop %v1116
    %v1118 = vsub.f32 1.0, %v1107
    %1120 = vrot.lane.b32.xlu0 %v1117, 96
    %v1121 = vpop.permute.xlu0 %1120
    %v1123 = vmul.f32 %v1118, %v1121
    %v1124 = vmul.f32 %v1107, %v1040
    %v1125 = vadd.f32 %v1123, %v1124
    %v1127 = vsel %vm193, %v1125, 0
    %1129 = vmatpush.msra.mxu0 0.0
    %1130 = vmatpush.msra.mxu0 0.0
    %1131 = vmatpush.msra.mxu0 0.0
    %1132 = vmatpush.msra.mxu0 0.0
    %1133 = vmatpush.msra.mxu0 0.0
    %1134 = vmatpush.msra.mxu0 0.0
    %1135 = vmatpush.msra.mxu0 0.0
    %1136 = vmatpush.msra.mxu0 0.0
    %1137 = vmatpush.msra.mxu0 0.0
    %1138 = vmatpush.msra.mxu0 0.0
    %1139 = vmatpush.msra.mxu0 0.0
    %1140 = vmatpush.msra.mxu0 0.0
    %1141 = vmatpush.msra.mxu0 %v55
    %1142 = vmatpush.msra.mxu0 %v54
    %1143 = vmatpush.msra.mxu0 %v53
    %1144 = vmatpush.msra.mxu0 %v52
    %1145 = vmatmul.f32.gmra.mxu0 %v1127
    %v1146 = vpop.f32.mrf.mxu0
    %v1147 = vadd.f32 %v62, %v1146
    %1148 = vdwg.mxu0
    %1150 = vrot.lane.b32.xlu0 %v1147, 96
    %v1151 = vpop.permute.xlu0 %1150
    %v1153 = vadd.f32 %v135, %v1151
    %v1154 = vxor.u32 %v1153, 2147483648
    %v1155 = vmul.f32 %v1154, 1.442695
    %v1156 = vpow.pop %v1155
    %v1157 = vadd.f32 %v1156, 1.0
    %v1158 = vrcp.pop %v1157
    %v1159 = vmul.f32 %v1157, %v1158
    %v1160 = vsub.f32 1.0, %v1159
    %v1161 = vmul.f32 %v1158, %v1160
    %v1162 = vadd.f32 %v1158, %v1161
    %vm1163 = vweird.f32 %v1157
    %vm1164 = vweird.f32 %v1158
    %vm1165 = vmor %vm1163, %vm1164
    %v1166 = vsel %vm1165, %v1158, %v1162
    %v1167 = vand.u32 2147483647, %v1157
    %vm1168 = vcmp.eq.f32.partialorder %v1167, 8.507059e+37
    %v1169 = vand.u32 %v1157, 2147483648
    %v1170 = vor.u32 1.1754944e-38, %v1169
    %v1171 = vsel %vm1168, %v1170, %v1166
    %v1172 = vmul.f32 1.0, %v1171
    %v1173 = vadd.f32 %v176, %v1151
    %v1174 = vxor.u32 %v1173, 2147483648
    %v1175 = vmul.f32 %v1174, 1.442695
    %v1176 = vpow.pop %v1175
    %v1177 = vadd.f32 %v1176, 1.0
    %v1178 = vrcp.pop %v1177
    %v1179 = vmul.f32 %v1177, %v1178
    %v1180 = vsub.f32 1.0, %v1179
    %v1181 = vmul.f32 %v1178, %v1180
    %v1182 = vadd.f32 %v1178, %v1181
    %vm1183 = vweird.f32 %v1177
    %vm1184 = vweird.f32 %v1178
    %vm1185 = vmor %vm1183, %vm1184
    %v1186 = vsel %vm1185, %v1178, %v1182
    %v1187 = vand.u32 2147483647, %v1177
    %vm1188 = vcmp.eq.f32.partialorder %v1187, 8.507059e+37
    %v1189 = vand.u32 %v1177, 2147483648
    %v1190 = vor.u32 1.1754944e-38, %v1189
    %v1191 = vsel %vm1188, %v1190, %v1186
    %v1192 = vmul.f32 1.0, %v1191
    %1193 = vrot.lane.b32.xlu0 %v1147, 32
    %v1194 = vpop.permute.xlu0 %1193
    %v1196 = vmul.f32 %v1172, %v1194
    %1198 = vrot.lane.b32.xlu0 %v1196, 64
    %v1199 = vpop.permute.xlu0 %1198
    %v1201 = vadd.f32 %v176, %v1199
    %v1202 = vtanh.pop %v1201
    %v1203 = vsub.f32 1.0, %v1192
    %1205 = vrot.lane.b32.xlu0 %v1202, 96
    %v1206 = vpop.permute.xlu0 %1205
    %v1208 = vmul.f32 %v1203, %v1206
    %v1209 = vmul.f32 %v1192, %v1125
    %v1210 = vadd.f32 %v1208, %v1209
    %v1212 = vsel %vm193, %v1210, 0
    %1214 = vmatpush.msra.mxu0 0.0
    %1215 = vmatpush.msra.mxu0 0.0
    %1216 = vmatpush.msra.mxu0 0.0
    %1217 = vmatpush.msra.mxu0 0.0
    %1218 = vmatpush.msra.mxu0 0.0
    %1219 = vmatpush.msra.mxu0 0.0
    %1220 = vmatpush.msra.mxu0 0.0
    %1221 = vmatpush.msra.mxu0 0.0
    %1222 = vmatpush.msra.mxu0 0.0
    %1223 = vmatpush.msra.mxu0 0.0
    %1224 = vmatpush.msra.mxu0 0.0
    %1225 = vmatpush.msra.mxu0 0.0
    %1226 = vmatpush.msra.mxu0 %v55
    %1227 = vmatpush.msra.mxu0 %v54
    %1228 = vmatpush.msra.mxu0 %v53
    %1229 = vmatpush.msra.mxu0 %v52
    %1230 = vmatmul.f32.gmra.mxu0 %v1212
    %v1231 = vpop.f32.mrf.mxu0
    %v1232 = vadd.f32 %v62, %v1231
    %1233 = vdwg.mxu0
    %1235 = vrot.lane.b32.xlu0 %v1232, 96
    %v1236 = vpop.permute.xlu0 %1235
    %v1238 = vadd.f32 %v132, %v1236
    %v1239 = vxor.u32 %v1238, 2147483648
    %v1240 = vmul.f32 %v1239, 1.442695
    %v1241 = vpow.pop %v1240
    %v1242 = vadd.f32 %v1241, 1.0
    %v1243 = vrcp.pop %v1242
    %v1244 = vmul.f32 %v1242, %v1243
    %v1245 = vsub.f32 1.0, %v1244
    %v1246 = vmul.f32 %v1243, %v1245
    %v1247 = vadd.f32 %v1243, %v1246
    %vm1248 = vweird.f32 %v1242
    %vm1249 = vweird.f32 %v1243
    %vm1250 = vmor %vm1248, %vm1249
    %v1251 = vsel %vm1250, %v1243, %v1247
    %v1252 = vand.u32 2147483647, %v1242
    %vm1253 = vcmp.eq.f32.partialorder %v1252, 8.507059e+37
    %v1254 = vand.u32 %v1242, 2147483648
    %v1255 = vor.u32 1.1754944e-38, %v1254
    %v1256 = vsel %vm1253, %v1255, %v1251
    %v1257 = vmul.f32 1.0, %v1256
    %v1258 = vadd.f32 %v173, %v1236
    %v1259 = vxor.u32 %v1258, 2147483648
    %v1260 = vmul.f32 %v1259, 1.442695
    %v1261 = vpow.pop %v1260
    %v1262 = vadd.f32 %v1261, 1.0
    %v1263 = vrcp.pop %v1262
    %v1264 = vmul.f32 %v1262, %v1263
    %v1265 = vsub.f32 1.0, %v1264
    %v1266 = vmul.f32 %v1263, %v1265
    %v1267 = vadd.f32 %v1263, %v1266
    %vm1268 = vweird.f32 %v1262
    %vm1269 = vweird.f32 %v1263
    %vm1270 = vmor %vm1268, %vm1269
    %v1271 = vsel %vm1270, %v1263, %v1267
    %v1272 = vand.u32 2147483647, %v1262
    %vm1273 = vcmp.eq.f32.partialorder %v1272, 8.507059e+37
    %v1274 = vand.u32 %v1262, 2147483648
    %v1275 = vor.u32 1.1754944e-38, %v1274
    %v1276 = vsel %vm1273, %v1275, %v1271
    %v1277 = vmul.f32 1.0, %v1276
    %1278 = vrot.lane.b32.xlu0 %v1232, 32
    %v1279 = vpop.permute.xlu0 %1278
    %v1281 = vmul.f32 %v1257, %v1279
    %1283 = vrot.lane.b32.xlu0 %v1281, 64
    %v1284 = vpop.permute.xlu0 %1283
    %v1286 = vadd.f32 %v173, %v1284
    %v1287 = vtanh.pop %v1286
    %v1288 = vsub.f32 1.0, %v1277
    %1290 = vrot.lane.b32.xlu0 %v1287, 96
    %v1291 = vpop.permute.xlu0 %1290
    %v1293 = vmul.f32 %v1288, %v1291
    %v1294 = vmul.f32 %v1277, %v1210
    %v1295 = vadd.f32 %v1293, %v1294
    %v1297 = vsel %vm193, %v1295, 0
    %1299 = vmatpush.msra.mxu0 0.0
    %1300 = vmatpush.msra.mxu0 0.0
    %1301 = vmatpush.msra.mxu0 0.0
    %1302 = vmatpush.msra.mxu0 0.0
    %1303 = vmatpush.msra.mxu0 0.0
    %1304 = vmatpush.msra.mxu0 0.0
    %1305 = vmatpush.msra.mxu0 0.0
    %1306 = vmatpush.msra.mxu0 0.0
    %1307 = vmatpush.msra.mxu0 0.0
    %1308 = vmatpush.msra.mxu0 0.0
    %1309 = vmatpush.msra.mxu0 0.0
    %1310 = vmatpush.msra.mxu0 0.0
    %1311 = vmatpush.msra.mxu0 %v55
    %1312 = vmatpush.msra.mxu0 %v54
    %1313 = vmatpush.msra.mxu0 %v53
    %1314 = vmatpush.msra.mxu0 %v52
    %1315 = vmatmul.f32.gmra.mxu0 %v1297
    %v1316 = vpop.f32.mrf.mxu0
    %v1317 = vadd.f32 %v62, %v1316
    %1318 = vdwg.mxu0
    %1320 = vrot.lane.b32.xlu0 %v1317, 96
    %v1321 = vpop.permute.xlu0 %1320
    %v1323 = vadd.f32 %v129, %v1321
    %v1324 = vxor.u32 %v1323, 2147483648
    %v1325 = vmul.f32 %v1324, 1.442695
    %v1326 = vpow.pop %v1325
    %v1327 = vadd.f32 %v1326, 1.0
    %v1328 = vrcp.pop %v1327
    %v1329 = vmul.f32 %v1327, %v1328
    %v1330 = vsub.f32 1.0, %v1329
    %v1331 = vmul.f32 %v1328, %v1330
    %v1332 = vadd.f32 %v1328, %v1331
    %vm1333 = vweird.f32 %v1327
    %vm1334 = vweird.f32 %v1328
    %vm1335 = vmor %vm1333, %vm1334
    %v1336 = vsel %vm1335, %v1328, %v1332
    %v1337 = vand.u32 2147483647, %v1327
    %vm1338 = vcmp.eq.f32.partialorder %v1337, 8.507059e+37
    %v1339 = vand.u32 %v1327, 2147483648
    %v1340 = vor.u32 1.1754944e-38, %v1339
    %v1341 = vsel %vm1338, %v1340, %v1336
    %v1342 = vmul.f32 1.0, %v1341
    %v1343 = vadd.f32 %v170, %v1321
    %v1344 = vxor.u32 %v1343, 2147483648
    %v1345 = vmul.f32 %v1344, 1.442695
    %v1346 = vpow.pop %v1345
    %v1347 = vadd.f32 %v1346, 1.0
    %v1348 = vrcp.pop %v1347
    %v1349 = vmul.f32 %v1347, %v1348
    %v1350 = vsub.f32 1.0, %v1349
    %v1351 = vmul.f32 %v1348, %v1350
    %v1352 = vadd.f32 %v1348, %v1351
    %vm1353 = vweird.f32 %v1347
    %vm1354 = vweird.f32 %v1348
    %vm1355 = vmor %vm1353, %vm1354
    %v1356 = vsel %vm1355, %v1348, %v1352
    %v1357 = vand.u32 2147483647, %v1347
    %vm1358 = vcmp.eq.f32.partialorder %v1357, 8.507059e+37
    %v1359 = vand.u32 %v1347, 2147483648
    %v1360 = vor.u32 1.1754944e-38, %v1359
    %v1361 = vsel %vm1358, %v1360, %v1356
    %v1362 = vmul.f32 1.0, %v1361
    %1363 = vrot.lane.b32.xlu0 %v1317, 32
    %v1364 = vpop.permute.xlu0 %1363
    %v1366 = vmul.f32 %v1342, %v1364
    %1368 = vrot.lane.b32.xlu0 %v1366, 64
    %v1369 = vpop.permute.xlu0 %1368
    %v1371 = vadd.f32 %v170, %v1369
    %v1372 = vtanh.pop %v1371
    %v1373 = vsub.f32 1.0, %v1362
    %1375 = vrot.lane.b32.xlu0 %v1372, 96
    %v1376 = vpop.permute.xlu0 %1375
    %v1378 = vmul.f32 %v1373, %v1376
    %v1379 = vmul.f32 %v1362, %v1295
    %v1380 = vadd.f32 %v1378, %v1379
    %1382 = vrot.lane.b32.xlu0 %v703, 96
    %v1383 = vpop.permute.xlu0 %1382
    %1393 = vrot.lane.b32.xlu0 %v1380, 32
    %v1394 = vpop.permute.xlu0 %1393
    %1395 = vrot.lane.b32.xlu0 %v1295, 32
    %v1396 = vpop.permute.xlu0 %1395
    %1397 = vrot.lane.b32.xlu0 %v1210, 32
    %v1398 = vpop.permute.xlu0 %1397
    %1399 = vrot.lane.b32.xlu0 %v1125, 32
    %v1400 = vpop.permute.xlu0 %1399
    %1401 = vrot.lane.b32.xlu0 %v1040, 32
    %v1402 = vpop.permute.xlu0 %1401
    %1403 = vrot.lane.b32.xlu0 %v955, 32
    %v1404 = vpop.permute.xlu0 %1403
    %1405 = vrot.lane.b32.xlu0 %v870, 32
    %v1406 = vpop.permute.xlu0 %1405
    %1407 = vrot.lane.b32.xlu0 %v785, 32
    %v1408 = vpop.permute.xlu0 %1407
    %v1417 = vsel %vm193, %v258, %v1394
    %v1418 = vsel %vm193, %v322, %v1396
    %v1419 = vsel %vm193, %v386, %v1398
    %v1420 = vsel %vm193, %v450, %v1400
    %v1421 = vsel %vm193, %v514, %v1402
    %v1422 = vsel %vm193, %v578, %v1404
    %v1423 = vsel %vm193, %v642, %v1406
    %v1424 = vsel %vm193, %v1383, %v1408
    %v1426 = vperm.slane %v72, 0
    %vm1428 = vcmask 523264
    %v1430 = vsel %vm1428, %v1417, 0
    %v1433 = vsel %vm1428, %v1418, 0
    %v1436 = vsel %vm1428, %v1419, 0
    %v1439 = vsel %vm1428, %v1420, 0
    %v1442 = vsel %vm1428, %v1421, 0
    %v1445 = vsel %vm1428, %v1422, 0
    %v1448 = vsel %vm1428, %v1423, 0
    %v1451 = vsel %vm1428, %v1424, 0
    %1453 = vmatpush.msra.mxu0 0.0
    %1454 = vmatpush.msra.mxu0 0.0
    %1455 = vmatpush.msra.mxu0 0.0
    %1456 = vmatpush.msra.mxu0 0.0
    %1457 = vmatpush.msra.mxu0 0.0
    %1458 = vmatpush.msra.mxu0 0.0
    %1459 = vmatpush.msra.mxu0 0.0
    %1460 = vmatpush.msra.mxu0 0.0
    %1461 = vmatpush.msra.mxu0 %v71
    %1462 = vmatpush.msra.mxu0 %v70
    %1463 = vmatpush.msra.mxu0 %v69
    %1464 = vmatpush.msra.mxu0 %v68
    %1465 = vmatpush.msra.mxu0 %v67
    %1466 = vmatpush.msra.mxu0 %v66
    %1467 = vmatpush.msra.mxu0 %v65
    %1468 = vmatpush.msra.mxu0 %v64
    %1469 = vmatmul.f32.gmra.mxu0 %v1430
    %v1470 = vpop.f32.mrf.mxu0
    %v1471 = vadd.f32 %v1426, %v1470
    %1472 = vmatmul.f32.gmra.mxu0 %v1433
    %v1473 = vpop.f32.mrf.mxu0
    %v1474 = vadd.f32 %v1426, %v1473
    %1475 = vmatmul.f32.gmra.mxu0 %v1436
    %v1476 = vpop.f32.mrf.mxu0
    %v1477 = vadd.f32 %v1426, %v1476
    %1478 = vmatmul.f32.gmra.mxu0 %v1439
    %v1479 = vpop.f32.mrf.mxu0
    %v1480 = vadd.f32 %v1426, %v1479
    %1481 = vmatmul.f32.gmra.mxu0 %v1442
    %v1482 = vpop.f32.mrf.mxu0
    %v1483 = vadd.f32 %v1426, %v1482
    %1484 = vmatmul.f32.gmra.mxu0 %v1445
    %v1485 = vpop.f32.mrf.mxu0
    %v1486 = vadd.f32 %v1426, %v1485
    %1487 = vmatmul.f32.gmra.mxu0 %v1448
    %v1488 = vpop.f32.mrf.mxu0
    %v1489 = vadd.f32 %v1426, %v1488
    %1490 = vmatmul.f32.gmra.mxu0 %v1451
    %v1491 = vpop.f32.mrf.mxu0
    %v1492 = vadd.f32 %v1426, %v1491
    %1493 = vdwg.mxu0
    %v1494 = vld [vmem:[%s1] sm:$0xff]
    %v1495 = vld [vmem:[%s1 + $0x8] sm:$0xff]
    %v1496 = vld [vmem:[%s1 + $0x10] sm:$0xff]
    %v1497 = vld [vmem:[%s1 + $0x18] sm:$0xff]
    %v1498 = vld [vmem:[%s1 + $0x20] sm:$0xff]
    %v1499 = vld [vmem:[%s1 + $0x28] sm:$0xff]
    %v1500 = vld [vmem:[%s1 + $0x30] sm:$0xff]
    %v1501 = vld [vmem:[%s1 + $0x38] sm:$0xff]
    %v1502 = vmax.f32 %v1471, 0.0
    %v1503 = vmax.f32 %v1474, 0.0
    %v1504 = vmax.f32 %v1477, 0.0
    %v1505 = vmax.f32 %v1480, 0.0
    %v1506 = vmax.f32 %v1483, 0.0
    %v1507 = vmax.f32 %v1486, 0.0
    %v1508 = vmax.f32 %v1489, 0.0
    %v1509 = vmax.f32 %v1492, 0.0
    %v1510 = vmul.f32 %v1471, %v1494
    %v1511 = vmul.f32 %v1474, %v1495
    %v1512 = vmul.f32 %v1477, %v1496
    %v1513 = vmul.f32 %v1480, %v1497
    %v1514 = vmul.f32 %v1483, %v1498
    %v1515 = vmul.f32 %v1486, %v1499
    %v1516 = vmul.f32 %v1489, %v1500
    %v1517 = vmul.f32 %v1492, %v1501
    %v1518 = vsub.f32 %v1502, %v1510
    %v1519 = vsub.f32 %v1503, %v1511
    %v1520 = vsub.f32 %v1504, %v1512
    %v1521 = vsub.f32 %v1505, %v1513
    %v1522 = vsub.f32 %v1506, %v1514
    %v1523 = vsub.f32 %v1507, %v1515
    %v1524 = vsub.f32 %v1508, %v1516
    %v1525 = vsub.f32 %v1509, %v1517
    %v1526 = vand.u32 2147483647, %v1471
    %v1527 = vand.u32 2147483647, %v1474
    %v1528 = vand.u32 2147483647, %v1477
    %v1529 = vand.u32 2147483647, %v1480
    %v1530 = vand.u32 2147483647, %v1483
    %v1531 = vand.u32 2147483647, %v1486
    %v1532 = vand.u32 2147483647, %v1489
    %v1533 = vand.u32 2147483647, %v1492
    %v1534 = vsub.f32 0.0, %v1526
    %v1535 = vsub.f32 0.0, %v1527
    %v1536 = vsub.f32 0.0, %v1528
    %v1537 = vsub.f32 0.0, %v1529
    %v1538 = vsub.f32 0.0, %v1530
    %v1539 = vsub.f32 0.0, %v1531
    %v1540 = vsub.f32 0.0, %v1532
    %v1541 = vsub.f32 0.0, %v1533
    %v1542 = vmul.f32 %v1534, 1.442695
    %v1543 = vpow.pop %v1542
    %v1544 = vmul.f32 %v1535, 1.442695
    %v1545 = vpow.pop %v1544
    %v1546 = vmul.f32 %v1536, 1.442695
    %v1547 = vpow.pop %v1546
    %v1548 = vmul.f32 %v1537, 1.442695
    %v1549 = vpow.pop %v1548
    %v1550 = vmul.f32 %v1538, 1.442695
    %v1551 = vpow.pop %v1550
    %v1552 = vmul.f32 %v1539, 1.442695
    %v1553 = vpow.pop %v1552
    %v1554 = vmul.f32 %v1540, 1.442695
    %v1555 = vpow.pop %v1554
    %v1556 = vmul.f32 %v1541, 1.442695
    %v1557 = vpow.pop %v1556
    %v1558 = vadd.f32 %v1543, 1.0
    %v1559 = vadd.f32 %v1545, 1.0
    %v1560 = vadd.f32 %v1547, 1.0
    %v1561 = vadd.f32 %v1549, 1.0
    %v1562 = vadd.f32 %v1551, 1.0
    %v1563 = vadd.f32 %v1553, 1.0
    %v1564 = vadd.f32 %v1555, 1.0
    %v1565 = vadd.f32 %v1557, 1.0
    %v1566 = vlog2.pop %v1558
    %v1567 = vmul.f32 %v1566, 0.6931472
    %v1568 = vlog2.pop %v1559
    %v1569 = vmul.f32 %v1568, 0.6931472
    %v1570 = vlog2.pop %v1560
    %v1571 = vmul.f32 %v1570, 0.6931472
    %v1572 = vlog2.pop %v1561
    %v1573 = vmul.f32 %v1572, 0.6931472
    %v1574 = vlog2.pop %v1562
    %v1575 = vmul.f32 %v1574, 0.6931472
    %v1576 = vlog2.pop %v1563
    %v1577 = vmul.f32 %v1576, 0.6931472
    %v1578 = vlog2.pop %v1564
    %v1579 = vmul.f32 %v1578, 0.6931472
    %v1580 = vlog2.pop %v1565
    %v1581 = vmul.f32 %v1580, 0.6931472
    %v1582 = vadd.f32 %v1518, %v1567
    %v1583 = vadd.f32 %v1519, %v1569
    %v1584 = vadd.f32 %v1520, %v1571
    %v1585 = vadd.f32 %v1521, %v1573
    %v1586 = vadd.f32 %v1522, %v1575
    %v1587 = vadd.f32 %v1523, %v1577
    %v1588 = vadd.f32 %v1524, %v1579
    %v1589 = vadd.f32 %v1525, %v1581
    %v1590 = vsub.f32 1.0, %v1494
    %v1591 = vsub.f32 1.0, %v1495
    %v1592 = vsub.f32 1.0, %v1496
    %v1593 = vsub.f32 1.0, %v1497
    %v1594 = vsub.f32 1.0, %v1498
    %v1595 = vsub.f32 1.0, %v1499
    %v1596 = vsub.f32 1.0, %v1500
    %v1597 = vsub.f32 1.0, %v1501
    %v1598 = vmul.f32 %v1590, %v1582
    %v1599 = vmul.f32 %v1591, %v1583
    %v1600 = vmul.f32 %v1592, %v1584
    %v1601 = vmul.f32 %v1593, %v1585
    %v1602 = vmul.f32 %v1594, %v1586
    %v1603 = vmul.f32 %v1595, %v1587
    %v1604 = vmul.f32 %v1596, %v1588
    %v1605 = vmul.f32 %v1597, %v1589
    %vm1606 = vcmask 31744
    %v1607 = vsel %vm1606, %v1598, 0.0
    %v1608 = vsel %vm1606, %v1599, 0.0
    %v1609 = vadd.f32 %v1607, %v1608
    %v1610 = vsel %vm1606, %v1600, 0.0
    %v1611 = vadd.f32 %v1609, %v1610
    %v1612 = vsel %vm1606, %v1601, 0.0
    %v1613 = vadd.f32 %v1611, %v1612
    %v1614 = vsel %vm1606, %v1602, 0.0
    %v1615 = vadd.f32 %v1613, %v1614
    %v1616 = vsel %vm1606, %v1603, 0.0
    %v1617 = vadd.f32 %v1615, %v1616
    %v1618 = vsel %vm1606, %v1604, 0.0
    %v1619 = vadd.f32 %v1617, %v1618
    %v1620 = vsel %vm1606, %v1605, 0.0
    %v1621 = vadd.f32 %v1619, %v1620
    %1622 = vadd.xlane.f32.xlu0 %v1621
    %v1623 = vpop.xlane.xlu0 %1622
    %v1624 = vrot.slane %v1623, 4
    %v1625 = vadd.f32 %v1623, %v1624
    %v1626 = vrot.slane %v1625, 2
    %v1627 = vadd.f32 %v1625, %v1626
    %v1628 = vrot.slane %v1627, 1
    %v1629 = vadd.f32 %v1627, %v1628
    %s1630 = vtos %v1629
    %v1631 = vrcp.pop 256.0
    %v1632 = vmul.f32 256.0, %v1631
    %v1633 = vsub.f32 1.0, %v1632
    %v1634 = vmul.f32 %v1631, %v1633
    %v1635 = vadd.f32 %v1631, %v1634
    %vm1636 = vweird.f32 %v1631
    %v1637 = vsel %vm1636, %v1631, %v1635
    %s1638 = vtos %v1637
    %s1639 = smul.f32 %s1630, %s1638
    %s1640 = ssub.f32 0.0, %s1639
    %v1641 = vld [vmem:[%s3] sm:$0xff]
    %v1642 = vld [vmem:[%s3 + $0x8] sm:$0xff]
    %v1643 = vld [vmem:[%s3 + $0x10] sm:$0xff]
    %v1644 = vld [vmem:[%s3 + $0x18] sm:$0xff]
    %v1645 = vld [vmem:[%s3 + $0x20] sm:$0xff]
    %v1646 = vld [vmem:[%s3 + $0x28] sm:$0xff]
    %v1647 = vld [vmem:[%s3 + $0x30] sm:$0xff]
    %v1648 = vld [vmem:[%s3 + $0x38] sm:$0xff]
    %v1649 = vld [vmem:[%s4] sm:$0xff]
    %v1650 = vld [vmem:[%s4 + $0x8] sm:$0xff]
    %v1651 = vld [vmem:[%s4 + $0x10] sm:$0xff]
    %v1652 = vld [vmem:[%s4 + $0x18] sm:$0xff]
    %v1653 = vld [vmem:[%s4 + $0x20] sm:$0xff]
    %v1654 = vld [vmem:[%s4 + $0x28] sm:$0xff]
    %v1655 = vld [vmem:[%s4 + $0x30] sm:$0xff]
    %v1656 = vld [vmem:[%s4 + $0x38] sm:$0xff]
    %v1657 = vld [vmem:[%s2] sm:$0xff]
    %v1658 = vld [vmem:[%s2 + $0x8] sm:$0xff]
    %v1659 = vld [vmem:[%s2 + $0x10] sm:$0xff]
    %v1660 = vld [vmem:[%s2 + $0x18] sm:$0xff]
    %v1661 = vld [vmem:[%s2 + $0x20] sm:$0xff]
    %v1662 = vld [vmem:[%s2 + $0x28] sm:$0xff]
    %v1663 = vld [vmem:[%s2 + $0x30] sm:$0xff]
    %v1664 = vld [vmem:[%s2 + $0x38] sm:$0xff]
    %v1665 = vadd.f32 %v1641, %v1649
    %v1666 = vadd.f32 %v1642, %v1650
    %v1667 = vadd.f32 %v1643, %v1651
    %v1668 = vadd.f32 %v1644, %v1652
    %v1669 = vadd.f32 %v1645, %v1653
    %v1670 = vadd.f32 %v1646, %v1654
    %v1671 = vadd.f32 %v1647, %v1655
    %v1672 = vadd.f32 %v1648, %v1656
    %v1673 = vmul.f32 %v1665, 0.5
    %v1674 = vmul.f32 %v1666, 0.5
    %v1675 = vmul.f32 %v1667, 0.5
    %v1676 = vmul.f32 %v1668, 0.5
    %v1677 = vmul.f32 %v1669, 0.5
    %v1678 = vmul.f32 %v1670, 0.5
    %v1679 = vmul.f32 %v1671, 0.5
    %v1680 = vmul.f32 %v1672, 0.5
    %v1681 = vsub.f32 %v1657, %v1673
    %v1682 = vsub.f32 %v1658, %v1674
    %v1683 = vsub.f32 %v1659, %v1675
    %v1684 = vsub.f32 %v1660, %v1676
    %v1685 = vsub.f32 %v1661, %v1677
    %v1686 = vsub.f32 %v1662, %v1678
    %v1687 = vsub.f32 %v1663, %v1679
    %v1688 = vsub.f32 %v1664, %v1680
    %v1689 = vmul.f32 %v1681, %v1681
    %v1690 = vmul.f32 %v1682, %v1682
    %v1691 = vmul.f32 %v1683, %v1683
    %v1692 = vmul.f32 %v1684, %v1684
    %v1693 = vmul.f32 %v1685, %v1685
    %v1694 = vmul.f32 %v1686, %v1686
    %v1695 = vmul.f32 %v1687, %v1687
    %v1696 = vmul.f32 %v1688, %v1688
    %v1697 = vmul.f32 %v1689, %v1494
    %v1698 = vmul.f32 %v1690, %v1495
    %v1699 = vmul.f32 %v1691, %v1496
    %v1700 = vmul.f32 %v1692, %v1497
    %v1701 = vmul.f32 %v1693, %v1498
    %v1702 = vmul.f32 %v1694, %v1499
    %v1703 = vmul.f32 %v1695, %v1500
    %v1704 = vmul.f32 %v1696, %v1501
    %v1705 = vsel %vm1606, %v1697, 0.0
    %v1706 = vsel %vm1606, %v1698, 0.0
    %v1707 = vadd.f32 %v1705, %v1706
    %v1708 = vsel %vm1606, %v1699, 0.0
    %v1709 = vadd.f32 %v1707, %v1708
    %v1710 = vsel %vm1606, %v1700, 0.0
    %v1711 = vadd.f32 %v1709, %v1710
    %v1712 = vsel %vm1606, %v1701, 0.0
    %v1713 = vadd.f32 %v1711, %v1712
    %v1714 = vsel %vm1606, %v1702, 0.0
    %v1715 = vadd.f32 %v1713, %v1714
    %v1716 = vsel %vm1606, %v1703, 0.0
    %v1717 = vadd.f32 %v1715, %v1716
    %v1718 = vsel %vm1606, %v1704, 0.0
    %v1719 = vadd.f32 %v1717, %v1718
    %1720 = vadd.xlane.f32.xlu0 %v1719
    %v1721 = vpop.xlane.xlu0 %1720
    %v1722 = vrot.slane %v1721, 4
    %v1723 = vadd.f32 %v1721, %v1722
    %v1724 = vrot.slane %v1723, 2
    %v1725 = vadd.f32 %v1723, %v1724
    %v1726 = vrot.slane %v1725, 1
    %v1727 = vadd.f32 %v1725, %v1726
    %s1728 = vtos %v1727
    %v1729 = vsel %vm1606, %v1494, 0.0
    %v1730 = vsel %vm1606, %v1495, 0.0
    %v1731 = vadd.f32 %v1729, %v1730
    %v1732 = vsel %vm1606, %v1496, 0.0
    %v1733 = vadd.f32 %v1731, %v1732
    %v1734 = vsel %vm1606, %v1497, 0.0
    %v1735 = vadd.f32 %v1733, %v1734
    %v1736 = vsel %vm1606, %v1498, 0.0
    %v1737 = vadd.f32 %v1735, %v1736
    %v1738 = vsel %vm1606, %v1499, 0.0
    %v1739 = vadd.f32 %v1737, %v1738
    %v1740 = vsel %vm1606, %v1500, 0.0
    %v1741 = vadd.f32 %v1739, %v1740
    %v1742 = vsel %vm1606, %v1501, 0.0
    %v1743 = vadd.f32 %v1741, %v1742
    %1744 = vadd.xlane.f32.xlu0 %v1743
    %v1745 = vpop.xlane.xlu0 %1744
    %v1746 = vrot.slane %v1745, 4
    %v1747 = vadd.f32 %v1745, %v1746
    %v1748 = vrot.slane %v1747, 2
    %v1749 = vadd.f32 %v1747, %v1748
    %v1750 = vrot.slane %v1749, 1
    %v1751 = vadd.f32 %v1749, %v1750
    %s1752 = vtos %v1751
    %s1753 = sadd.f32 %s1752, 1e-12
    %v1754 = vstv %s1753
    %v1755 = vrcp.pop %v1754
    %v1756 = vmul.f32 %v1754, %v1755
    %v1757 = vsub.f32 1.0, %v1756
    %v1758 = vmul.f32 %v1755, %v1757
    %v1759 = vadd.f32 %v1755, %v1758
    %vm1760 = vweird.f32 %v1754
    %vm1761 = vweird.f32 %v1755
    %vm1762 = vmor %vm1760, %vm1761
    %v1763 = vsel %vm1762, %v1755, %v1759
    %v1764 = vand.u32 2147483647, %v1754
    %vm1765 = vcmp.eq.f32.partialorder %v1764, 8.507059e+37
    %v1766 = vand.u32 %v1754, 2147483648
    %v1767 = vor.u32 1.1754944e-38, %v1766
    %v1768 = vsel %vm1765, %v1767, %v1763
    %s1769 = vtos %v1768
    %s1770 = smul.f32 %s1728, %s1769
    %v1771 = vsub.f32 %v1641, %v1649
    %v1772 = vsub.f32 %v1642, %v1650
    %v1773 = vsub.f32 %v1643, %v1651
    %v1774 = vsub.f32 %v1644, %v1652
    %v1775 = vsub.f32 %v1645, %v1653
    %v1776 = vsub.f32 %v1646, %v1654
    %v1777 = vsub.f32 %v1647, %v1655
    %v1778 = vsub.f32 %v1648, %v1656
    %v1779 = vmul.f32 %v1771, %v1771
    %v1780 = vmul.f32 %v1772, %v1772
    %v1781 = vmul.f32 %v1773, %v1773
    %v1782 = vmul.f32 %v1774, %v1774
    %v1783 = vmul.f32 %v1775, %v1775
    %v1784 = vmul.f32 %v1776, %v1776
    %v1785 = vmul.f32 %v1777, %v1777
    %v1786 = vmul.f32 %v1778, %v1778
    %v1787 = vsel %vm1606, %v1779, 0.0
    %v1788 = vsel %vm1606, %v1780, 0.0
    %v1789 = vadd.f32 %v1787, %v1788
    %v1790 = vsel %vm1606, %v1781, 0.0
    %v1791 = vadd.f32 %v1789, %v1790
    %v1792 = vsel %vm1606, %v1782, 0.0
    %v1793 = vadd.f32 %v1791, %v1792
    %v1794 = vsel %vm1606, %v1783, 0.0
    %v1795 = vadd.f32 %v1793, %v1794
    %v1796 = vsel %vm1606, %v1784, 0.0
    %v1797 = vadd.f32 %v1795, %v1796
    %v1798 = vsel %vm1606, %v1785, 0.0
    %v1799 = vadd.f32 %v1797, %v1798
    %v1800 = vsel %vm1606, %v1786, 0.0
    %v1801 = vadd.f32 %v1799, %v1800
    %1802 = vadd.xlane.f32.xlu0 %v1801
    %v1803 = vpop.xlane.xlu0 %1802
    %v1804 = vrot.slane %v1803, 4
    %v1805 = vadd.f32 %v1803, %v1804
    %v1806 = vrot.slane %v1805, 2
    %v1807 = vadd.f32 %v1805, %v1806
    %v1808 = vrot.slane %v1807, 1
    %v1809 = vadd.f32 %v1807, %v1808
    %s1810 = vtos %v1809
    %v1811 = vrcp.pop 256.0
    %v1812 = vmul.f32 256.0, %v1811
    %v1813 = vsub.f32 1.0, %v1812
    %v1814 = vmul.f32 %v1811, %v1813
    %v1815 = vadd.f32 %v1811, %v1814
    %vm1816 = vweird.f32 %v1811
    %v1817 = vsel %vm1816, %v1811, %v1815
    %s1818 = vtos %v1817
    %s1819 = smul.f32 %s1810, %s1818
    %s1820 = smul.f32 %s1819, 0.1
    %s1821 = sadd.f32 %s1770, %s1820
    %s1822 = sadd.f32 %s1640, %s1821
    %s1823 = scalar_lea.smem [#allocation2], 0
    %1824 = sst [smem:[%s1823]] %s1822
    // Predicated region
    $region54: #{usgan_forward.3} parent=1 // pred_check
      _
    $region55: #{usgan_forward.3} parent=1 // pred_check_branch
      %1826 = sbr.rel (0) target = $region57
    $region56: #{usgan_forward.3} parent=1 // pred_region
      %1828 = vsyncadd [#allocation3], 0
      %s1830 = sshll.u32 %s13, 4
      %s1831 = int_to_ptr.hbm [resolvable:$true] %s1830
      %1833 = dma.smem_to_hbm [#allocation2], 16, %s1831, [#allocation3]
    $region57: #{usgan_forward.3} parent=1 // pred_fallthru
      _
    // Predicated region
    $region58: #{usgan_forward.3} parent=1 // pred_check
      _
    $region59: #{usgan_forward.3} parent=1 // pred_check_branch
      %1835 = sbr.rel (0) target = $region61
    $region60: #{usgan_forward.3} parent=1 // pred_region
      %1837 = dma.done [#allocation3], 16
    $region61: #{usgan_forward.3} parent=1 // pred_fallthru
      _
    %1838 = sfence
    %1839 = vsyncpa [#allocation3], 1

</llo_original>
